<compile_context>
chip_gen: v7x
topology: tpu7x:2x2x1
jax: 0.10.0
libtpu: 0.0.40
codegen_flags: <defaults>
</compile_context>

<pallas_src>
import functools

import jax
import jax.numpy as jnp
from jax.experimental import pallas as pl
from jax.experimental.pallas import tpu as pltpu


# ----------------------------------------------------------------------------
# Relative position index (identical semantics to the torch helper)
# ----------------------------------------------------------------------------
def get_relative_position_index(win_h: int, win_w: int) -> jnp.ndarray:
    coords = jnp.stack(
        jnp.meshgrid(jnp.arange(win_h), jnp.arange(win_w), indexing="ij")
    )                                                       # (2, wh, ww)
    coords_flatten = coords.reshape(2, -1)                  # (2, N)
    rel = coords_flatten[:, :, None] - coords_flatten[:, None, :]   # (2, N, N)
    rel = jnp.transpose(rel, (1, 2, 0))                     # (N, N, 2)
    rel = rel.at[:, :, 0].add(win_h - 1)
    rel = rel.at[:, :, 1].add(win_w - 1)
    rel = rel.at[:, :, 0].multiply(2 * win_w - 1)
    return rel.sum(-1)                                      # (N, N), int32


# ----------------------------------------------------------------------------
# Pallas kernel: fused qkv projection + per-head attention (with relative
# positional bias) + per-head-fused output projection, Wb windows / grid step.
# ----------------------------------------------------------------------------
def _rel_self_attn_kernel(
    x_ref,       # (Wb, N, C)   input dtype (cast to compute dtype in-kernel)
    wqkv_ref,    # (C, 3C)      compute dtype (bf16/f32), q-columns pre-scaled
    bqkv_ref,    # (1, 3C)      f32, q-part pre-scaled
    bias_ref,    # (H, N, N)    f32, pre-gathered relative positional bias
    wproj_ref,   # (C, C)       compute dtype
    bproj_ref,   # (1, C)       f32
    o_ref,       # (Wb, N, C)   out dtype
    *,
    wb: int,
    n_tok: int,
    channels: int,
    num_heads: int,
    head_dim: int,
):
    Wb, N, C, H, Dh = wb, n_tok, channels, num_heads, head_dim
    cdt = wqkv_ref.dtype           # MXU compute dtype (bf16 default, f32 opt.)

    # (Wb, N, C) -> (Wb*N, C): leading-dim merge (layout-trivial). The dtype
    # cast happens here (VPU op hidden under the qkv matmul) instead of as a
    # standalone HBM-roundtrip convert in the wrapper.
    x2 = x_ref[...].reshape(Wb * N, C).astype(cdt)

    # Fused qkv projection for all Wb windows on the MXU, f32 accumulation.
    # The attention scale is already folded into wqkv / bqkv.
    qkv = (
        jnp.dot(x2, wqkv_ref[...], preferred_element_type=jnp.float32)
        + bqkv_ref[...]
    )                                                       # (Wb*N, 3C) f32

    # Full-lane-tile splits (column offsets 0, C, 2C are multiples of 128).
    q = qkv[:, :C]
    k = qkv[:, C:2 * C]
    v = qkv[:, 2 * C:]

    wproj = wproj_ref[...]                                  # (C, C), loaded once

    # Per-head attention with the output projection fused per head:
    #   out += (softmax(q_h k_h^T + bias_h) @ v_h) @ wproj[h*Dh:(h+1)*Dh, :]
    # No head_outs list / lane concatenate; the wproj row slices are
    # sublane-aligned (multiples of Dh). H is small and static -> unrolled.
    out = jnp.zeros((Wb * N, C), jnp.float32)
    for h in range(H):
        qh = q[:, h * Dh:(h + 1) * Dh].reshape(Wb, N, Dh).astype(cdt)
        kh = k[:, h * Dh:(h + 1) * Dh].reshape(Wb, N, Dh).astype(cdt)
        vh = v[:, h * Dh:(h + 1) * Dh].reshape(Wb, N, Dh).astype(cdt)

        logits = (
            jnp.einsum("bnd,bmd->bnm", qh, kh,
                       preferred_element_type=jnp.float32)
            + bias_ref[h]
        )                                                   # (Wb, N, N) f32
        m = jnp.max(logits, axis=-1, keepdims=True)
        p = jnp.exp(logits - m)
        inv = pl.reciprocal(jnp.sum(p, axis=-1, keepdims=True), approx=True)
        attn = (p * inv).astype(cdt)                        # bf16 into PV matmul

        oh = jnp.einsum("bnm,bmd->bnd", attn, vh,
                        preferred_element_type=jnp.float32)  # (Wb, N, Dh) f32
        out = out + jnp.dot(
            oh.reshape(Wb * N, Dh).astype(cdt),
            wproj[h * Dh:(h + 1) * Dh, :],
            preferred_element_type=jnp.float32,
        )                                                   # (Wb*N, C) f32

    out = out + bproj_ref[...]
    o_ref[...] = out.reshape(Wb, N, C).astype(o_ref.dtype)


# ----------------------------------------------------------------------------
# One-time parameter preparation (hoisted out of the per-call path)
# ----------------------------------------------------------------------------
def prepare_params(params, *, window_size, num_heads_arg,
                   compute_dtype=jnp.bfloat16):
    """One-time transform:
       * gather the relative-position-bias table -> dense (H, N, N),
       * fold the attention scale into the q columns of wqkv / bqkv,
       * cast the matmul weights to the MXU compute dtype (bf16 default:
         native MXU rate on v5e/v6e/v7x; f32 is multi-pass emulated)."""
    C = params["wproj"].shape[0]
    H = C // num_heads_arg        # matches the torch module: num_heads = C // arg
    Dh = C // H
    N = window_size[0] * window_size[1]
    scale = float(num_heads_arg) ** (-0.5)

    col_scale = jnp.concatenate(
        [jnp.full((C,), scale, jnp.float32), jnp.ones((2 * C,), jnp.float32)]
    )
    wqkv = params["wqkv"].astype(jnp.float32) * col_scale[None, :]
    bqkv = params["bqkv"].astype(jnp.float32) * col_scale

    idx = get_relative_position_index(*window_size).reshape(-1)      # (N*N,)
    bias = params["rpb_table"][idx].reshape(N, N, H)
    bias = jnp.transpose(bias, (2, 0, 1)).astype(jnp.float32)        # (H, N, N)

    return {
        "wqkv": wqkv.astype(compute_dtype),                  # (C, 3C)
        "bqkv": bqkv[None, :],                               # (1, 3C) f32
        "wproj": params["wproj"].astype(compute_dtype),      # (C, C)
        "bproj": params["bproj"].astype(jnp.float32)[None, :],   # (1, C) f32
        "bias": bias,                                        # (H, N, N) f32
        "num_heads": H,
        "head_dim": Dh,
        "window_size": tuple(window_size),
    }


def _pick_windows_per_block(num_windows: int, n_tokens: int, *,
                            target_rows: int = 512,
                            min_grid_steps: int = 2) -> int:
    """Largest divisor Wb of num_windows with Wb*n_tokens <= target_rows while
    keeping >= min_grid_steps grid steps (DMA/compute overlap; both v7x
    TensorCores busy on the 'parallel' axis).  target_rows=512 amortizes the
    ~0.35us/step overhead + MXU fill/drain (use 256-512 on v5e, 512-1024 on
    v6e; re-derive against 64 MiB/TC VMEM on v7x)."""
    candidates = [d for d in range(1, num_windows + 1)
                  if num_windows % d == 0 and d * n_tokens <= target_rows]
    if not candidates:
        return 1
    preferred = [d for d in candidates if num_windows // d >= min_grid_steps]
    return max(preferred) if preferred else max(candidates)


def _invariant_spec(shape):
    """BlockSpec for a grid-invariant operand: constant index_map +
    single-buffered (double-buffering would only waste VMEM, which at real
    Swin/MaxViT scale (C >= 512) is what caps Wb)."""
    ndim = len(shape)
    return pl.BlockSpec(shape, lambda g: (0,) * ndim,
                        pipeline_mode=pl.Buffered(1))


# ----------------------------------------------------------------------------
# Forward wrapper
# ----------------------------------------------------------------------------
def relative_self_attention(x, prep, *, windows_per_block=None,
                            out_dtype=None, target_rows=512):
    """x: (B_, N, C) with N == window_size[0] * window_size[1].
    out_dtype: emit bf16 here when the surrounding model is bf16 (halves the
    output HBM write bytes)."""
    B, N, C = x.shape
    H, Dh = prep["num_heads"], prep["head_dim"]
    assert N == prep["window_size"][0] * prep["window_size"][1]
    assert H * Dh == C

    Wb = windows_per_block or _pick_windows_per_block(B, N,
                                                      target_rows=target_rows)
    assert B % Wb == 0, f"windows_per_block={Wb} must divide B={B}"
    grid = (B // Wb,)
    out_dtype = out_dtype or x.dtype

    kernel = functools.partial(
        _rel_self_attn_kernel,
        wb=Wb, n_tok=N, channels=C, num_heads=H, head_dim=Dh,
    )

    # Explicit VMEM budget: double-buffered x/out blocks + single-buffered
    # grid-invariant operands + headroom for in-kernel intermediates, clamped
    # to a value that is safe on v5e/v6e (128 MiB) and v7x (64 MiB per TC).
    est = (2 * Wb * N * C * x.dtype.itemsize                       # x blocks
           + 2 * Wb * N * C * jnp.dtype(out_dtype).itemsize        # out blocks
           + prep["wqkv"].size * prep["wqkv"].dtype.itemsize
           + prep["bqkv"].size * 4
           + prep["bias"].size * 4
           + prep["wproj"].size * prep["wproj"].dtype.itemsize
           + prep["bproj"].size * 4
           + 6 * Wb * N * C * 4)                 # qkv / acc / attn intermediates
    vmem_limit = int(min(max(2 * est, 16 * 1024 * 1024), 48 * 1024 * 1024))

    return pl.pallas_call(
        kernel,
        out_shape=jax.ShapeDtypeStruct((B, N, C), out_dtype),
        grid_spec=pltpu.PrefetchScalarGridSpec(
            num_scalar_prefetch=0,
            grid=grid,
            in_specs=[
                pl.BlockSpec((Wb, N, C), lambda g: (g, 0, 0)),   # x (pipelined)
                _invariant_spec((C, 3 * C)),                     # wqkv
                _invariant_spec((1, 3 * C)),                     # bqkv
                _invariant_spec((H, N, N)),                      # rel-pos bias
                _invariant_spec((C, C)),                         # wproj
                _invariant_spec((1, C)),                         # bproj
            ],
            out_specs=pl.BlockSpec((Wb, N, C), lambda g: (g, 0, 0)),
        ),
        compiler_params=pltpu.CompilerParams(
            dimension_semantics=("parallel",),
            vmem_limit_bytes=vmem_limit,
        ),
    )(x, prep["wqkv"], prep["bqkv"], prep["bias"],
      prep["wproj"], prep["bproj"])


# ----------------------------------------------------------------------------
# Pure-JAX reference (mirrors the torch forward) for correctness checking
# ----------------------------------------------------------------------------
def reference(x, params, *, window_size, num_heads_arg):
    B, N, C = x.shape
    H = C // num_heads_arg
    Dh = C // H
    scale = float(num_heads_arg) ** (-0.5)

    idx = get_relative_position_index(*window_size).reshape(-1)
    bias = params["rpb_table"][idx].reshape(N, N, H)
    bias = jnp.transpose(bias, (2, 0, 1))[None]             # (1, H, N, N)

    qkv = x @ params["wqkv"] + params["bqkv"]               # (B, N, 3C)
    qkv = qkv.reshape(B, N, 3, H, Dh).transpose(2, 0, 3, 1, 4)
    q, k, v = qkv[0], qkv[1], qkv[2]
    q = q * scale
    attn = jax.nn.softmax(
        jnp.einsum("bhnd,bhmd->bhnm", q, k) + bias, axis=-1
    )
    out = jnp.einsum("bhnm,bhmd->bhnd", attn, v)            # (B, H, N, Dh)
    out = out.transpose(0, 2, 1, 3).reshape(B, N, C)
    return out @ params["wproj"] + params["bproj"]
    # attn_drop / proj_drop are p=0.0 -> identity (inference).


# ----------------------------------------------------------------------------
# Main
# ----------------------------------------------------------------------------
if __name__ == "__main__":
    # Shapes consistent with the module (module-default num_heads = 32):
    #   in_channels C = 128 -> self.num_heads = 128 // 32 = 4 heads of dim 32,
    #   window_size (4, 4) -> N = 16 tokens, B_ = 16 windows.
    # Wb = 8 windows/step -> grid = (2,) parallel steps (both v7x TCs usable),
    # every I/O block lane-dense (last dim 128).
    C = 128
    NUM_HEADS_ARG = 32
    WINDOW = (4, 4)
    N = WINDOW[0] * WINDOW[1]
    B = 16

    key = jax.random.PRNGKey(0)
    kx, kw1, kb1, kw2, kb2, kt = jax.random.split(key, 6)

    x = jax.random.normal(kx, (B, N, C), dtype=jnp.float32)

    H = C // NUM_HEADS_ARG
    num_bias_entries = (2 * WINDOW[0] - 1) * (2 * WINDOW[1] - 1)
    params = {
        # torch Linear(C, 3C) weight is (3C, C); we store its transpose (C, 3C).
        "wqkv": jax.random.normal(kw1, (C, 3 * C), dtype=jnp.float32) * 0.05,
        "bqkv": jax.random.normal(kb1, (3 * C,), dtype=jnp.float32) * 0.05,
        "wproj": jax.random.normal(kw2, (C, C), dtype=jnp.float32) * 0.05,
        "bproj": jax.random.normal(kb2, (C,), dtype=jnp.float32) * 0.05,
        # TODO(synk): trunc_normal_(std=0.02) approximated with plain normal*0.02
        #             (init-time distribution difference only).
        "rpb_table": jax.random.normal(
            kt, (num_bias_entries, H), dtype=jnp.float32) * 0.02,
    }

    ref = reference(x, params, window_size=WINDOW, num_heads_arg=NUM_HEADS_ARG)

    # bf16 matmul path (default on all chips): all four matmuls feed the MXU
    # in bf16 with f32 accumulation; softmax math stays f32.
    prep_bf16 = prepare_params(params, window_size=WINDOW,
                               num_heads_arg=NUM_HEADS_ARG)
    out_bf16 = jax.block_until_ready(relative_self_attention(x, prep_bf16))
    assert out_bf16.shape == (B, N, C) and out_bf16.dtype == jnp.float32
    assert jnp.allclose(out_bf16, ref, atol=5e-2, rtol=5e-2), (
        f"bf16 max abs diff = {jnp.max(jnp.abs(out_bf16 - ref))}"
    )

    # bf16 output path (for bf16 surrounding models: halves output HBM bytes).
    out_bf16_io = jax.block_until_ready(
        relative_self_attention(x, prep_bf16, out_dtype=jnp.bfloat16))
    assert out_bf16_io.dtype == jnp.bfloat16
    assert jnp.allclose(out_bf16_io.astype(jnp.float32), ref,
                        atol=1e-1, rtol=1e-1), (
        f"bf16-out max abs diff = "
        f"{jnp.max(jnp.abs(out_bf16_io.astype(jnp.float32) - ref))}"
    )

    # f32 matmul path (stricter numerical check of the kernel structure).
    prep_f32 = prepare_params(params, window_size=WINDOW,
                              num_heads_arg=NUM_HEADS_ARG,
                              compute_dtype=jnp.float32)
    out_f32 = jax.block_until_ready(relative_self_attention(x, prep_f32))
    assert jnp.allclose(out_f32, ref, atol=5e-3, rtol=5e-3), (
        f"f32 max abs diff = {jnp.max(jnp.abs(out_f32 - ref))}"
    )

    print("KERNEL_OK")
</pallas_src>

<mosaic_0001>
module attributes {stable_mosaic.version = 11 : i64} {
  func.func @_rel_self_attn_kernel(%arg0: i32, %arg1: memref<8x16x128xf32, #tpu.memory_space<vmem>>, %arg2: memref<128x384xbf16, #tpu.memory_space<vmem>>, %arg3: memref<1x384xf32, #tpu.memory_space<vmem>>, %arg4: memref<4x16x16xf32, #tpu.memory_space<vmem>>, %arg5: memref<128x128xbf16, #tpu.memory_space<vmem>>, %arg6: memref<1x128xf32, #tpu.memory_space<vmem>>, %arg7: memref<8x16x128xf32, #tpu.memory_space<vmem>>) attributes {dimension_semantics = [#tpu.dimension_semantics<parallel>], iteration_bounds = array<i64: 2>, scalar_prefetch = 0 : i64, scratch_operands = 0 : i64, tpu.core_type = #tpu.core_type<tc>, window_params = [{transform_indices = @transform_0, window_bounds = array<i64: 8, 16, 128>}, {pipeline_mode = #tpu.pipeline_mode<synchronous>, transform_indices = @transform_1, window_bounds = array<i64: 128, 384>}, {pipeline_mode = #tpu.pipeline_mode<synchronous>, transform_indices = @transform_2, window_bounds = array<i64: 1, 384>}, {pipeline_mode = #tpu.pipeline_mode<synchronous>, transform_indices = @transform_3, window_bounds = array<i64: 4, 16, 16>}, {pipeline_mode = #tpu.pipeline_mode<synchronous>, transform_indices = @transform_4, window_bounds = array<i64: 128, 128>}, {pipeline_mode = #tpu.pipeline_mode<synchronous>, transform_indices = @transform_5, window_bounds = array<i64: 1, 128>}, {transform_indices = @transform_6, window_bounds = array<i64: 8, 16, 128>}]} {
    %c0 = arith.constant 0 : index
    %c0_0 = arith.constant 0 : index
    %c0_1 = arith.constant 0 : index
    %0 = vector.load %arg1[%c0, %c0_0, %c0_1] : memref<8x16x128xf32, #tpu.memory_space<vmem>>, vector<8x16x128xf32>
    %1 = vector.shape_cast %0 : vector<8x16x128xf32> to vector<128x128xf32>
    %2 = arith.truncf %1 : vector<128x128xf32> to vector<128x128xbf16>
    %c0_2 = arith.constant 0 : index
    %c0_3 = arith.constant 0 : index
    %3 = vector.load %arg2[%c0_2, %c0_3] : memref<128x384xbf16, #tpu.memory_space<vmem>>, vector<128x384xbf16>
    %cst = arith.constant dense<0.000000e+00> : vector<128x384xf32>
    %4 = tpu.matmul %2, %3, %cst {dimension_numbers = #tpu.dot_dimension_numbers<[1], [0], [0], [1], [0, 0, 1, 1], [], []>} : vector<128x128xbf16>, vector<128x384xbf16>, vector<128x384xf32> -> vector<128x384xf32>
    %c0_4 = arith.constant 0 : index
    %c0_5 = arith.constant 0 : index
    %5 = vector.load %arg3[%c0_4, %c0_5] : memref<1x384xf32, #tpu.memory_space<vmem>>, vector<1x384xf32>
    %6 = vector.broadcast %5 : vector<1x384xf32> to vector<128x384xf32>
    %7 = arith.addf %4, %6 : vector<128x384xf32>
    %8 = vector.extract_strided_slice %7 {offsets = [0, 0], sizes = [128, 128], strides = [1, 1]} : vector<128x384xf32> to vector<128x128xf32>
    %9 = vector.extract_strided_slice %7 {offsets = [0, 128], sizes = [128, 128], strides = [1, 1]} : vector<128x384xf32> to vector<128x128xf32>
    %10 = vector.extract_strided_slice %7 {offsets = [0, 256], sizes = [128, 128], strides = [1, 1]} : vector<128x384xf32> to vector<128x128xf32>
    %c0_6 = arith.constant 0 : index
    %c0_7 = arith.constant 0 : index
    %11 = vector.load %arg5[%c0_6, %c0_7] : memref<128x128xbf16, #tpu.memory_space<vmem>>, vector<128x128xbf16>
    %cst_8 = arith.constant 0.000000e+00 : f32
    %12 = vector.broadcast %cst_8 : f32 to vector<128x128xf32>
    %13 = vector.extract_strided_slice %8 {offsets = [0, 0], sizes = [128, 32], strides = [1, 1]} : vector<128x128xf32> to vector<128x32xf32>
    %14 = vector.shape_cast %13 : vector<128x32xf32> to vector<8x16x32xf32>
    %15 = arith.truncf %14 : vector<8x16x32xf32> to vector<8x16x32xbf16>
    %16 = vector.extract_strided_slice %9 {offsets = [0, 0], sizes = [128, 32], strides = [1, 1]} : vector<128x128xf32> to vector<128x32xf32>
    %17 = vector.shape_cast %16 : vector<128x32xf32> to vector<8x16x32xf32>
    %18 = arith.truncf %17 : vector<8x16x32xf32> to vector<8x16x32xbf16>
    %19 = vector.extract_strided_slice %10 {offsets = [0, 0], sizes = [128, 32], strides = [1, 1]} : vector<128x128xf32> to vector<128x32xf32>
    %20 = vector.shape_cast %19 : vector<128x32xf32> to vector<8x16x32xf32>
    %21 = arith.truncf %20 : vector<8x16x32xf32> to vector<8x16x32xbf16>
    "tpu.trace_start"() <{level = 10 : i32, message = "bnd,bmd->bnm"}> : () -> ()
    %cst_9 = arith.constant dense<0.000000e+00> : vector<8x16x16xf32>
    %22 = tpu.matmul %15, %18, %cst_9 {dimension_numbers = #tpu.dot_dimension_numbers<[2], [2], [1], [1], [0, 0, 0, 1, 1, 1], [0], [0]>} : vector<8x16x32xbf16>, vector<8x16x32xbf16>, vector<8x16x16xf32> -> vector<8x16x16xf32>
    "tpu.trace_stop"() : () -> ()
    %c0_10 = arith.constant 0 : index
    %c0_11 = arith.constant 0 : index
    %c0_12 = arith.constant 0 : index
    %23 = vector.load %arg4[%c0_10, %c0_11, %c0_12] : memref<4x16x16xf32, #tpu.memory_space<vmem>>, vector<1x16x16xf32>
    %24 = vector.shape_cast %23 : vector<1x16x16xf32> to vector<16x16xf32>
    %25 = vector.shape_cast %24 : vector<16x16xf32> to vector<1x16x16xf32>
    %26 = vector.broadcast %25 : vector<1x16x16xf32> to vector<8x16x16xf32>
    %27 = arith.addf %22, %26 : vector<8x16x16xf32>
    %cst_13 = arith.constant dense<0xFF800000> : vector<8x16xf32>
    %28 = vector.multi_reduction <maximumf>, %27, %cst_13 [2] : vector<8x16x16xf32> to vector<8x16xf32>
    %29 = vector.shape_cast %28 : vector<8x16xf32> to vector<8x16x1xf32>
    %30 = vector.broadcast %29 : vector<8x16x1xf32> to vector<8x16x16xf32>
    %31 = arith.subf %27, %30 : vector<8x16x16xf32>
    %32 = math.exp %31 : vector<8x16x16xf32>
    %cst_14 = arith.constant dense<0.000000e+00> : vector<8x16xf32>
    %33 = vector.multi_reduction <add>, %32, %cst_14 [2] : vector<8x16x16xf32> to vector<8x16xf32>
    %34 = vector.shape_cast %33 : vector<8x16xf32> to vector<8x16x1xf32>
    %35 = tpu.reciprocal %34 {approx = true} : vector<8x16x1xf32> -> vector<8x16x1xf32>
    %36 = vector.broadcast %35 : vector<8x16x1xf32> to vector<8x16x16xf32>
    %37 = arith.mulf %32, %36 : vector<8x16x16xf32>
    %38 = arith.truncf %37 : vector<8x16x16xf32> to vector<8x16x16xbf16>
    "tpu.trace_start"() <{level = 10 : i32, message = "bnm,bmd->bnd"}> : () -> ()
    %cst_15 = arith.constant dense<0.000000e+00> : vector<8x16x32xf32>
    %39 = tpu.matmul %38, %21, %cst_15 {dimension_numbers = #tpu.dot_dimension_numbers<[2], [1], [1], [2], [0, 0, 0, 1, 1, 2], [0], [0]>} : vector<8x16x16xbf16>, vector<8x16x32xbf16>, vector<8x16x32xf32> -> vector<8x16x32xf32>
    "tpu.trace_stop"() : () -> ()
    %40 = vector.shape_cast %39 : vector<8x16x32xf32> to vector<128x32xf32>
    %41 = arith.truncf %40 : vector<128x32xf32> to vector<128x32xbf16>
    %42 = vector.extract_strided_slice %11 {offsets = [0, 0], sizes = [32, 128], strides = [1, 1]} : vector<128x128xbf16> to vector<32x128xbf16>
    %cst_16 = arith.constant dense<0.000000e+00> : vector<128x128xf32>
    %43 = tpu.matmul %41, %42, %cst_16 {dimension_numbers = #tpu.dot_dimension_numbers<[1], [0], [0], [1], [0, 0, 1, 1], [], []>} : vector<128x32xbf16>, vector<32x128xbf16>, vector<128x128xf32> -> vector<128x128xf32>
    %44 = arith.addf %12, %43 : vector<128x128xf32>
    %45 = vector.extract_strided_slice %8 {offsets = [0, 32], sizes = [128, 32], strides = [1, 1]} : vector<128x128xf32> to vector<128x32xf32>
    %46 = vector.shape_cast %45 : vector<128x32xf32> to vector<8x16x32xf32>
    %47 = arith.truncf %46 : vector<8x16x32xf32> to vector<8x16x32xbf16>
    %48 = vector.extract_strided_slice %9 {offsets = [0, 32], sizes = [128, 32], strides = [1, 1]} : vector<128x128xf32> to vector<128x32xf32>
    %49 = vector.shape_cast %48 : vector<128x32xf32> to vector<8x16x32xf32>
    %50 = arith.truncf %49 : vector<8x16x32xf32> to vector<8x16x32xbf16>
    %51 = vector.extract_strided_slice %10 {offsets = [0, 32], sizes = [128, 32], strides = [1, 1]} : vector<128x128xf32> to vector<128x32xf32>
    %52 = vector.shape_cast %51 : vector<128x32xf32> to vector<8x16x32xf32>
    %53 = arith.truncf %52 : vector<8x16x32xf32> to vector<8x16x32xbf16>
    "tpu.trace_start"() <{level = 10 : i32, message = "bnd,bmd->bnm"}> : () -> ()
    %cst_17 = arith.constant dense<0.000000e+00> : vector<8x16x16xf32>
    %54 = tpu.matmul %47, %50, %cst_17 {dimension_numbers = #tpu.dot_dimension_numbers<[2], [2], [1], [1], [0, 0, 0, 1, 1, 1], [0], [0]>} : vector<8x16x32xbf16>, vector<8x16x32xbf16>, vector<8x16x16xf32> -> vector<8x16x16xf32>
    "tpu.trace_stop"() : () -> ()
    %c1 = arith.constant 1 : index
    %c0_18 = arith.constant 0 : index
    %c0_19 = arith.constant 0 : index
    %55 = vector.load %arg4[%c1, %c0_18, %c0_19] : memref<4x16x16xf32, #tpu.memory_space<vmem>>, vector<1x16x16xf32>
    %56 = vector.shape_cast %55 : vector<1x16x16xf32> to vector<16x16xf32>
    %57 = vector.shape_cast %56 : vector<16x16xf32> to vector<1x16x16xf32>
    %58 = vector.broadcast %57 : vector<1x16x16xf32> to vector<8x16x16xf32>
    %59 = arith.addf %54, %58 : vector<8x16x16xf32>
    %cst_20 = arith.constant dense<0xFF800000> : vector<8x16xf32>
    %60 = vector.multi_reduction <maximumf>, %59, %cst_20 [2] : vector<8x16x16xf32> to vector<8x16xf32>
    %61 = vector.shape_cast %60 : vector<8x16xf32> to vector<8x16x1xf32>
    %62 = vector.broadcast %61 : vector<8x16x1xf32> to vector<8x16x16xf32>
    %63 = arith.subf %59, %62 : vector<8x16x16xf32>
    %64 = math.exp %63 : vector<8x16x16xf32>
    %cst_21 = arith.constant dense<0.000000e+00> : vector<8x16xf32>
    %65 = vector.multi_reduction <add>, %64, %cst_21 [2] : vector<8x16x16xf32> to vector<8x16xf32>
    %66 = vector.shape_cast %65 : vector<8x16xf32> to vector<8x16x1xf32>
    %67 = tpu.reciprocal %66 {approx = true} : vector<8x16x1xf32> -> vector<8x16x1xf32>
    %68 = vector.broadcast %67 : vector<8x16x1xf32> to vector<8x16x16xf32>
    %69 = arith.mulf %64, %68 : vector<8x16x16xf32>
    %70 = arith.truncf %69 : vector<8x16x16xf32> to vector<8x16x16xbf16>
    "tpu.trace_start"() <{level = 10 : i32, message = "bnm,bmd->bnd"}> : () -> ()
    %cst_22 = arith.constant dense<0.000000e+00> : vector<8x16x32xf32>
    %71 = tpu.matmul %70, %53, %cst_22 {dimension_numbers = #tpu.dot_dimension_numbers<[2], [1], [1], [2], [0, 0, 0, 1, 1, 2], [0], [0]>} : vector<8x16x16xbf16>, vector<8x16x32xbf16>, vector<8x16x32xf32> -> vector<8x16x32xf32>
    "tpu.trace_stop"() : () -> ()
    %72 = vector.shape_cast %71 : vector<8x16x32xf32> to vector<128x32xf32>
    %73 = arith.truncf %72 : vector<128x32xf32> to vector<128x32xbf16>
    %74 = vector.extract_strided_slice %11 {offsets = [32, 0], sizes = [32, 128], strides = [1, 1]} : vector<128x128xbf16> to vector<32x128xbf16>
    %cst_23 = arith.constant dense<0.000000e+00> : vector<128x128xf32>
    %75 = tpu.matmul %73, %74, %cst_23 {dimension_numbers = #tpu.dot_dimension_numbers<[1], [0], [0], [1], [0, 0, 1, 1], [], []>} : vector<128x32xbf16>, vector<32x128xbf16>, vector<128x128xf32> -> vector<128x128xf32>
    %76 = arith.addf %44, %75 : vector<128x128xf32>
    %77 = vector.extract_strided_slice %8 {offsets = [0, 64], sizes = [128, 32], strides = [1, 1]} : vector<128x128xf32> to vector<128x32xf32>
    %78 = vector.shape_cast %77 : vector<128x32xf32> to vector<8x16x32xf32>
    %79 = arith.truncf %78 : vector<8x16x32xf32> to vector<8x16x32xbf16>
    %80 = vector.extract_strided_slice %9 {offsets = [0, 64], sizes = [128, 32], strides = [1, 1]} : vector<128x128xf32> to vector<128x32xf32>
    %81 = vector.shape_cast %80 : vector<128x32xf32> to vector<8x16x32xf32>
    %82 = arith.truncf %81 : vector<8x16x32xf32> to vector<8x16x32xbf16>
    %83 = vector.extract_strided_slice %10 {offsets = [0, 64], sizes = [128, 32], strides = [1, 1]} : vector<128x128xf32> to vector<128x32xf32>
    %84 = vector.shape_cast %83 : vector<128x32xf32> to vector<8x16x32xf32>
    %85 = arith.truncf %84 : vector<8x16x32xf32> to vector<8x16x32xbf16>
    "tpu.trace_start"() <{level = 10 : i32, message = "bnd,bmd->bnm"}> : () -> ()
    %cst_24 = arith.constant dense<0.000000e+00> : vector<8x16x16xf32>
    %86 = tpu.matmul %79, %82, %cst_24 {dimension_numbers = #tpu.dot_dimension_numbers<[2], [2], [1], [1], [0, 0, 0, 1, 1, 1], [0], [0]>} : vector<8x16x32xbf16>, vector<8x16x32xbf16>, vector<8x16x16xf32> -> vector<8x16x16xf32>
    "tpu.trace_stop"() : () -> ()
    %c2 = arith.constant 2 : index
    %c0_25 = arith.constant 0 : index
    %c0_26 = arith.constant 0 : index
    %87 = vector.load %arg4[%c2, %c0_25, %c0_26] : memref<4x16x16xf32, #tpu.memory_space<vmem>>, vector<1x16x16xf32>
    %88 = vector.shape_cast %87 : vector<1x16x16xf32> to vector<16x16xf32>
    %89 = vector.shape_cast %88 : vector<16x16xf32> to vector<1x16x16xf32>
    %90 = vector.broadcast %89 : vector<1x16x16xf32> to vector<8x16x16xf32>
    %91 = arith.addf %86, %90 : vector<8x16x16xf32>
    %cst_27 = arith.constant dense<0xFF800000> : vector<8x16xf32>
    %92 = vector.multi_reduction <maximumf>, %91, %cst_27 [2] : vector<8x16x16xf32> to vector<8x16xf32>
    %93 = vector.shape_cast %92 : vector<8x16xf32> to vector<8x16x1xf32>
    %94 = vector.broadcast %93 : vector<8x16x1xf32> to vector<8x16x16xf32>
    %95 = arith.subf %91, %94 : vector<8x16x16xf32>
    %96 = math.exp %95 : vector<8x16x16xf32>
    %cst_28 = arith.constant dense<0.000000e+00> : vector<8x16xf32>
    %97 = vector.multi_reduction <add>, %96, %cst_28 [2] : vector<8x16x16xf32> to vector<8x16xf32>
    %98 = vector.shape_cast %97 : vector<8x16xf32> to vector<8x16x1xf32>
    %99 = tpu.reciprocal %98 {approx = true} : vector<8x16x1xf32> -> vector<8x16x1xf32>
    %100 = vector.broadcast %99 : vector<8x16x1xf32> to vector<8x16x16xf32>
    %101 = arith.mulf %96, %100 : vector<8x16x16xf32>
    %102 = arith.truncf %101 : vector<8x16x16xf32> to vector<8x16x16xbf16>
    "tpu.trace_start"() <{level = 10 : i32, message = "bnm,bmd->bnd"}> : () -> ()
    %cst_29 = arith.constant dense<0.000000e+00> : vector<8x16x32xf32>
    %103 = tpu.matmul %102, %85, %cst_29 {dimension_numbers = #tpu.dot_dimension_numbers<[2], [1], [1], [2], [0, 0, 0, 1, 1, 2], [0], [0]>} : vector<8x16x16xbf16>, vector<8x16x32xbf16>, vector<8x16x32xf32> -> vector<8x16x32xf32>
    "tpu.trace_stop"() : () -> ()
    %104 = vector.shape_cast %103 : vector<8x16x32xf32> to vector<128x32xf32>
    %105 = arith.truncf %104 : vector<128x32xf32> to vector<128x32xbf16>
    %106 = vector.extract_strided_slice %11 {offsets = [64, 0], sizes = [32, 128], strides = [1, 1]} : vector<128x128xbf16> to vector<32x128xbf16>
    %cst_30 = arith.constant dense<0.000000e+00> : vector<128x128xf32>
    %107 = tpu.matmul %105, %106, %cst_30 {dimension_numbers = #tpu.dot_dimension_numbers<[1], [0], [0], [1], [0, 0, 1, 1], [], []>} : vector<128x32xbf16>, vector<32x128xbf16>, vector<128x128xf32> -> vector<128x128xf32>
    %108 = arith.addf %76, %107 : vector<128x128xf32>
    %109 = vector.extract_strided_slice %8 {offsets = [0, 96], sizes = [128, 32], strides = [1, 1]} : vector<128x128xf32> to vector<128x32xf32>
    %110 = vector.shape_cast %109 : vector<128x32xf32> to vector<8x16x32xf32>
    %111 = arith.truncf %110 : vector<8x16x32xf32> to vector<8x16x32xbf16>
    %112 = vector.extract_strided_slice %9 {offsets = [0, 96], sizes = [128, 32], strides = [1, 1]} : vector<128x128xf32> to vector<128x32xf32>
    %113 = vector.shape_cast %112 : vector<128x32xf32> to vector<8x16x32xf32>
    %114 = arith.truncf %113 : vector<8x16x32xf32> to vector<8x16x32xbf16>
    %115 = vector.extract_strided_slice %10 {offsets = [0, 96], sizes = [128, 32], strides = [1, 1]} : vector<128x128xf32> to vector<128x32xf32>
    %116 = vector.shape_cast %115 : vector<128x32xf32> to vector<8x16x32xf32>
    %117 = arith.truncf %116 : vector<8x16x32xf32> to vector<8x16x32xbf16>
    "tpu.trace_start"() <{level = 10 : i32, message = "bnd,bmd->bnm"}> : () -> ()
    %cst_31 = arith.constant dense<0.000000e+00> : vector<8x16x16xf32>
    %118 = tpu.matmul %111, %114, %cst_31 {dimension_numbers = #tpu.dot_dimension_numbers<[2], [2], [1], [1], [0, 0, 0, 1, 1, 1], [0], [0]>} : vector<8x16x32xbf16>, vector<8x16x32xbf16>, vector<8x16x16xf32> -> vector<8x16x16xf32>
    "tpu.trace_stop"() : () -> ()
    %c3 = arith.constant 3 : index
    %c0_32 = arith.constant 0 : index
    %c0_33 = arith.constant 0 : index
    %119 = vector.load %arg4[%c3, %c0_32, %c0_33] : memref<4x16x16xf32, #tpu.memory_space<vmem>>, vector<1x16x16xf32>
    %120 = vector.shape_cast %119 : vector<1x16x16xf32> to vector<16x16xf32>
    %121 = vector.shape_cast %120 : vector<16x16xf32> to vector<1x16x16xf32>
    %122 = vector.broadcast %121 : vector<1x16x16xf32> to vector<8x16x16xf32>
    %123 = arith.addf %118, %122 : vector<8x16x16xf32>
    %cst_34 = arith.constant dense<0xFF800000> : vector<8x16xf32>
    %124 = vector.multi_reduction <maximumf>, %123, %cst_34 [2] : vector<8x16x16xf32> to vector<8x16xf32>
    %125 = vector.shape_cast %124 : vector<8x16xf32> to vector<8x16x1xf32>
    %126 = vector.broadcast %125 : vector<8x16x1xf32> to vector<8x16x16xf32>
    %127 = arith.subf %123, %126 : vector<8x16x16xf32>
    %128 = math.exp %127 : vector<8x16x16xf32>
    %cst_35 = arith.constant dense<0.000000e+00> : vector<8x16xf32>
    %129 = vector.multi_reduction <add>, %128, %cst_35 [2] : vector<8x16x16xf32> to vector<8x16xf32>
    %130 = vector.shape_cast %129 : vector<8x16xf32> to vector<8x16x1xf32>
    %131 = tpu.reciprocal %130 {approx = true} : vector<8x16x1xf32> -> vector<8x16x1xf32>
    %132 = vector.broadcast %131 : vector<8x16x1xf32> to vector<8x16x16xf32>
    %133 = arith.mulf %128, %132 : vector<8x16x16xf32>
    %134 = arith.truncf %133 : vector<8x16x16xf32> to vector<8x16x16xbf16>
    "tpu.trace_start"() <{level = 10 : i32, message = "bnm,bmd->bnd"}> : () -> ()
    %cst_36 = arith.constant dense<0.000000e+00> : vector<8x16x32xf32>
    %135 = tpu.matmul %134, %117, %cst_36 {dimension_numbers = #tpu.dot_dimension_numbers<[2], [1], [1], [2], [0, 0, 0, 1, 1, 2], [0], [0]>} : vector<8x16x16xbf16>, vector<8x16x32xbf16>, vector<8x16x32xf32> -> vector<8x16x32xf32>
    "tpu.trace_stop"() : () -> ()
    %136 = vector.shape_cast %135 : vector<8x16x32xf32> to vector<128x32xf32>
    %137 = arith.truncf %136 : vector<128x32xf32> to vector<128x32xbf16>
    %138 = vector.extract_strided_slice %11 {offsets = [96, 0], sizes = [32, 128], strides = [1, 1]} : vector<128x128xbf16> to vector<32x128xbf16>
    %cst_37 = arith.constant dense<0.000000e+00> : vector<128x128xf32>
    %139 = tpu.matmul %137, %138, %cst_37 {dimension_numbers = #tpu.dot_dimension_numbers<[1], [0], [0], [1], [0, 0, 1, 1], [], []>} : vector<128x32xbf16>, vector<32x128xbf16>, vector<128x128xf32> -> vector<128x128xf32>
    %140 = arith.addf %108, %139 : vector<128x128xf32>
    %c0_38 = arith.constant 0 : index
    %c0_39 = arith.constant 0 : index
    %141 = vector.load %arg6[%c0_38, %c0_39] : memref<1x128xf32, #tpu.memory_space<vmem>>, vector<1x128xf32>
    %142 = vector.broadcast %141 : vector<1x128xf32> to vector<128x128xf32>
    %143 = arith.addf %140, %142 : vector<128x128xf32>
    %144 = vector.shape_cast %143 : vector<128x128xf32> to vector<8x16x128xf32>
    %c0_40 = arith.constant 0 : index
    %c0_41 = arith.constant 0 : index
    %c0_42 = arith.constant 0 : index
    %145 = vector.load %arg7[%c0_40, %c0_41, %c0_42] : memref<8x16x128xf32, #tpu.memory_space<vmem>>, vector<8x16x128xf32>
    tpu.vector_store %arg7[%c0_40, %c0_41, %c0_42], %144 {strides = array<i32>} : memref<8x16x128xf32, #tpu.memory_space<vmem>>, vector<8x16x128xf32>,
    return
  }
  func.func @transform_0(%arg0: i32) -> (i32, i32, i32) {
    %c0_i32 = arith.constant 0 : i32
    %c0_i32_0 = arith.constant 0 : i32
    %c0_i32_1 = arith.constant 0 : i32
    return %arg0, %c0_i32, %c0_i32_0 : i32, i32, i32
  }
  func.func @transform_1(%arg0: i32) -> (i32, i32) {
    %c0_i32 = arith.constant 0 : i32
    %c0_i32_0 = arith.constant 0 : i32
    %c0_i32_1 = arith.constant 0 : i32
    return %c0_i32, %c0_i32_0 : i32, i32
  }
  func.func @transform_2(%arg0: i32) -> (i32, i32) {
    %c0_i32 = arith.constant 0 : i32
    %c0_i32_0 = arith.constant 0 : i32
    %c0_i32_1 = arith.constant 0 : i32
    return %c0_i32, %c0_i32_0 : i32, i32
  }
  func.func @transform_3(%arg0: i32) -> (i32, i32, i32) {
    %c0_i32 = arith.constant 0 : i32
    %c0_i32_0 = arith.constant 0 : i32
    %c0_i32_1 = arith.constant 0 : i32
    %c0_i32_2 = arith.constant 0 : i32
    return %c0_i32, %c0_i32_0, %c0_i32_1 : i32, i32, i32
  }
  func.func @transform_4(%arg0: i32) -> (i32, i32) {
    %c0_i32 = arith.constant 0 : i32
    %c0_i32_0 = arith.constant 0 : i32
    %c0_i32_1 = arith.constant 0 : i32
    return %c0_i32, %c0_i32_0 : i32, i32
  }
  func.func @transform_5(%arg0: i32) -> (i32, i32) {
    %c0_i32 = arith.constant 0 : i32
    %c0_i32_0 = arith.constant 0 : i32
    %c0_i32_1 = arith.constant 0 : i32
    return %c0_i32, %c0_i32_0 : i32, i32
  }
  func.func @transform_6(%arg0: i32) -> (i32, i32, i32) {
    %c0_i32 = arith.constant 0 : i32
    %c0_i32_0 = arith.constant 0 : i32
    %c0_i32_1 = arith.constant 0 : i32
    return %arg0, %c0_i32, %c0_i32_0 : i32, i32, i32
  }
}

</mosaic_0001>

<llo_original>
// kernel: tpu_custom_call.1
$region0: #{tpu_custom_call.1}
  #allocation0 [shape = 'u32[]', space=smem, size = 0x4, offset = 0x4, fixed_abs, tag = 'smem constant byte address 0x4 - core index']
  #allocation1 [shape = 'u32[144,128]{1,0:T(1,128)}', space=vmem, size = 0x12000, scoped, tag = 'internal scratch']
  %s0 = inlined_call_operand.hbm [shape: f32[16,16,128], index: 0, kind: input, shape index: {}]
  %s1 = inlined_call_operand.hbm [shape: bf16[128,384], index: 1, kind: input, shape index: {}]
  %s2 = inlined_call_operand.vmem [shape: f32[1,384], index: 2, kind: input, shape index: {}]
  %s3 = inlined_call_operand.hbm [shape: f32[4,16,16], index: 3, kind: input, shape index: {}]
  %s4 = inlined_call_operand.hbm [shape: bf16[128,128], index: 4, kind: input, shape index: {}]
  %s5 = inlined_call_operand.vmem [shape: f32[1,128], index: 5, kind: input, shape index: {}]
  %s6 = inlined_call_operand.hbm [shape: f32[16,16,128], index: 6, kind: output, shape index: {}]
  %s7 = sld [smem:[#allocation0]]
  $region73: #{tpu_custom_call.1} parent=0
    _
  %s9 = ssub.s32 1, %s7
  %s10 = scalar_select 0, %s9, %s7
  $region1: #{tpu_custom_call.1} parent=0
    #allocation2 [shape = 'u8[131072]{0}', space=vmem, size = 0x20000, scoped, tag = 'input window, operand 0']
    #allocation3 [shape = 's32[2]{0}', space=sflag, size = 0x8, scoped, tag = 'scoped memory for tpu_custom_call.1']
    #allocation4 [shape = 's32[2]{0}', space=sflag, size = 0x8, scoped, tag = 'scoped memory for tpu_custom_call.1']
    #allocation5 [shape = 'u8[98304]{0}', space=vmem, size = 0x18000, scoped, tag = 'input window, operand 1, single buffered']
    #allocation6 [shape = 's32[1]{0}', space=sflag, size = 0x4, scoped, tag = 'scoped memory for tpu_custom_call.1']
    #allocation7 [shape = 'u8[32768]{0}', space=vmem, size = 0x8000, scoped, tag = 'input window, operand 3, single buffered']
    #allocation8 [shape = 'u8[32768]{0}', space=vmem, size = 0x8000, scoped, tag = 'input window, operand 4, single buffered']
    #allocation9 [shape = 's32[1]{0}', space=sflag, size = 0x4, scoped, tag = 'scoped memory for tpu_custom_call.1']
    #allocation10 [shape = 'u8[131072]{0}', space=vmem, size = 0x20000, scoped, tag = 'output window, operand 0']
    %11 = vsyncpa [#allocation3], 0
    %s12 = scalar_lea.sflag [#allocation3], 1
    %13 = vsyncpa %s12, 0
    %14 = vsyncpa [#allocation6], 0
    %15 = vsyncpa [#allocation9], 0
    %16 = vsyncpa [#allocation4], 0
    %s17 = scalar_lea.sflag [#allocation4], 1
    %18 = vsyncpa %s17, 0
    loop: start=0, step=1, limit=4
    $region2: #{tpu_custom_call.1} parent=1 // loop_pre_header
      _
    $region3: #{tpu_custom_call.1} parent=1 // loop_header
      %s20 = sphi 0, %s24
      %p21 = scmp.ge.s32.totalorder %s20, 4
      %s30 = sphi 0, %s32
      %s33 = sphi 0, %s30
      %s34 = sphi 0, %s33
      %s50 = sphi 0, %s34
      %s54 = sphi 0, %s54
      %s56 = sphi 0, %s54
      %s57 = sphi 0, %s56
      %s71 = sphi 0, %s57
      %s75 = sphi 0, %s75
      %s77 = sphi 0, %s75
      %s78 = sphi 0, %s77
      %s92 = sphi 0, %s78
      %s96 = sphi 0, %s96
      %s98 = sphi 0, %s96
      %s99 = sphi 0, %s98
      %s113 = sphi 0, %s99
      %s117 = sphi 0, %s117
      %s119 = sphi 0, %s117
      %s120 = sphi 0, %s119
      %s134 = sphi 0, %s120
      %s138 = sphi 0, %s138
      %s140 = sphi 0, %s138
      %s141 = sphi 0, %s140
      %s155 = sphi 0, %s141
      %s161 = sphi 0, %s163
      %s164 = sphi 0, %s161
      %s165 = sphi 0, %s164
      %s181 = sphi 0, %s165
    $region4: #{tpu_custom_call.1} parent=1 // loop_header_branch
      %23 = sbr.rel (%p21) target = $region8
    $region5: #{tpu_custom_call.1} parent=1 // loop_body
      %s25 = ssub.s32 %s20, 1
      %s26 = ssub.s32 %s20, 2
      %s27 = sadd.s32 %s20, 1
      %s28 = ssub.s32 %s20, %s27
      %p29 = scmp.eq.s32.totalorder %s28, 0
      %s31 = sadd.s32 %s30, 1
      %s32 = scalar_select %p29, %s30, %s31
      %p35 = pneg %p29
      %p36 = scmp.eq.s32.totalorder %s20, 1
      %p37 = por %p35, %p36
      %p38 = scmp.ne.s32.totalorder %s30, %s33
      %p39 = scmp.eq.s32.totalorder %s20, 0
      %p40 = por %p38, %p39
      %p41 = scmp.ne.s32.totalorder %s30, %s33
      %p42 = scmp.eq.s32.totalorder %s25, 1
      %p43 = por %p41, %p42
      %p44 = scmp.ne.s32.totalorder %s33, %s34
      %p45 = scmp.eq.s32.totalorder %s25, 0
      %p46 = por %p44, %p45
      %p47 = scmp.ne.s32.totalorder %s33, %s34
      %p48 = scmp.eq.s32.totalorder %s26, 1
      %p49 = por %p47, %p48
      %p51 = scmp.ne.s32.totalorder %s34, %s50
      %p52 = scmp.eq.s32.totalorder %s26, 0
      %p53 = por %p51, %p52
      %s55 = sadd.s32 %s54, 1
      %p58 = scmp.eq.s32.totalorder %s20, 1
      %p59 = scmp.ne.s32.totalorder %s54, %s56
      %p60 = scmp.eq.s32.totalorder %s20, 0
      %p61 = por %p59, %p60
      %p62 = scmp.ne.s32.totalorder %s54, %s56
      %p63 = scmp.eq.s32.totalorder %s25, 1
      %p64 = por %p62, %p63
      %p65 = scmp.ne.s32.totalorder %s56, %s57
      %p66 = scmp.eq.s32.totalorder %s25, 0
      %p67 = por %p65, %p66
      %p68 = scmp.ne.s32.totalorder %s56, %s57
      %p69 = scmp.eq.s32.totalorder %s26, 1
      %p70 = por %p68, %p69
      %p72 = scmp.ne.s32.totalorder %s57, %s71
      %p73 = scmp.eq.s32.totalorder %s26, 0
      %p74 = por %p72, %p73
      %s76 = sadd.s32 %s75, 1
      %p79 = scmp.eq.s32.totalorder %s20, 1
      %p80 = scmp.ne.s32.totalorder %s75, %s77
      %p81 = scmp.eq.s32.totalorder %s20, 0
      %p82 = por %p80, %p81
      %p83 = scmp.ne.s32.totalorder %s75, %s77
      %p84 = scmp.eq.s32.totalorder %s25, 1
      %p85 = por %p83, %p84
      %p86 = scmp.ne.s32.totalorder %s77, %s78
      %p87 = scmp.eq.s32.totalorder %s25, 0
      %p88 = por %p86, %p87
      %p89 = scmp.ne.s32.totalorder %s77, %s78
      %p90 = scmp.eq.s32.totalorder %s26, 1
      %p91 = por %p89, %p90
      %p93 = scmp.ne.s32.totalorder %s78, %s92
      %p94 = scmp.eq.s32.totalorder %s26, 0
      %p95 = por %p93, %p94
      %s97 = sadd.s32 %s96, 1
      %p100 = scmp.eq.s32.totalorder %s20, 1
      %p101 = scmp.ne.s32.totalorder %s96, %s98
      %p102 = scmp.eq.s32.totalorder %s20, 0
      %p103 = por %p101, %p102
      %p104 = scmp.ne.s32.totalorder %s96, %s98
      %p105 = scmp.eq.s32.totalorder %s25, 1
      %p106 = por %p104, %p105
      %p107 = scmp.ne.s32.totalorder %s98, %s99
      %p108 = scmp.eq.s32.totalorder %s25, 0
      %p109 = por %p107, %p108
      %p110 = scmp.ne.s32.totalorder %s98, %s99
      %p111 = scmp.eq.s32.totalorder %s26, 1
      %p112 = por %p110, %p111
      %p114 = scmp.ne.s32.totalorder %s99, %s113
      %p115 = scmp.eq.s32.totalorder %s26, 0
      %p116 = por %p114, %p115
      %s118 = sadd.s32 %s117, 1
      %p121 = scmp.eq.s32.totalorder %s20, 1
      %p122 = scmp.ne.s32.totalorder %s117, %s119
      %p123 = scmp.eq.s32.totalorder %s20, 0
      %p124 = por %p122, %p123
      %p125 = scmp.ne.s32.totalorder %s117, %s119
      %p126 = scmp.eq.s32.totalorder %s25, 1
      %p127 = por %p125, %p126
      %p128 = scmp.ne.s32.totalorder %s119, %s120
      %p129 = scmp.eq.s32.totalorder %s25, 0
      %p130 = por %p128, %p129
      %p131 = scmp.ne.s32.totalorder %s119, %s120
      %p132 = scmp.eq.s32.totalorder %s26, 1
      %p133 = por %p131, %p132
      %p135 = scmp.ne.s32.totalorder %s120, %s134
      %p136 = scmp.eq.s32.totalorder %s26, 0
      %p137 = por %p135, %p136
      %s139 = sadd.s32 %s138, 1
      %p142 = scmp.eq.s32.totalorder %s20, 1
      %p143 = scmp.ne.s32.totalorder %s138, %s140
      %p144 = scmp.eq.s32.totalorder %s20, 0
      %p145 = por %p143, %p144
      %p146 = scmp.ne.s32.totalorder %s138, %s140
      %p147 = scmp.eq.s32.totalorder %s25, 1
      %p148 = por %p146, %p147
      %p149 = scmp.ne.s32.totalorder %s140, %s141
      %p150 = scmp.eq.s32.totalorder %s25, 0
      %p151 = por %p149, %p150
      %p152 = scmp.ne.s32.totalorder %s140, %s141
      %p153 = scmp.eq.s32.totalorder %s26, 1
      %p154 = por %p152, %p153
      %p156 = scmp.ne.s32.totalorder %s141, %s155
      %p157 = scmp.eq.s32.totalorder %s26, 0
      %p158 = por %p156, %p157
      %s159 = ssub.s32 %s20, %s27
      %p160 = scmp.eq.s32.totalorder %s159, 0
      %s162 = sadd.s32 %s161, 1
      %s163 = scalar_select %p160, %s161, %s162
      %p166 = pneg %p160
      %p167 = scmp.eq.s32.totalorder %s20, 1
      %p168 = por %p166, %p167
      %p169 = scmp.ne.s32.totalorder %s161, %s164
      %p170 = scmp.eq.s32.totalorder %s20, 0
      %p171 = por %p169, %p170
      %p172 = scmp.ne.s32.totalorder %s161, %s164
      %p173 = scmp.eq.s32.totalorder %s25, 1
      %p174 = por %p172, %p173
      %p175 = scmp.ne.s32.totalorder %s164, %s165
      %p176 = scmp.eq.s32.totalorder %s25, 0
      %p177 = por %p175, %p176
      %p178 = scmp.ne.s32.totalorder %s164, %s165
      %p179 = scmp.eq.s32.totalorder %s26, 1
      %p180 = por %p178, %p179
      %p182 = scmp.ne.s32.totalorder %s165, %s181
      %p183 = scmp.eq.s32.totalorder %s26, 0
      %p184 = por %p182, %p183
      %p185 = scmp.le.s32.totalorder 1, %s20
      %p186 = scmp.lt.s32.totalorder %s20, 3
      %p187 = pnand %p185, %p186
      %p188 = pneg %p187
      // Predicated region
      $region9: #{tpu_custom_call.1} parent=5 // pred_check
        _
      $region10: #{tpu_custom_call.1} parent=5 // pred_check_branch
        %190 = sbr.rel (%p187) target = $region12
      $region11: #{tpu_custom_call.1} parent=5 // pred_region
        %s191 = ssub.s32 %s20, 1
        // Predicated region
        $region13: #{tpu_custom_call.1} parent=11 // pred_check
          %p192 = pneg %p67
        $region14: #{tpu_custom_call.1} parent=11 // pred_check_branch
          %194 = sbr.rel (%p192) target = $region16
        $region15: #{tpu_custom_call.1} parent=11 // pred_region
          %s196 = ssub.s32 3072, 3072
          %197 = vsyncadd [#allocation6], %s196
          %s198 = sshll.u32 [#allocation5], 4
          %s199 = int_to_ptr.vmem [resolvable:$true] %s198
          %204 = dma.hbm_to_vmem [thread:$0]  %s1, 3072, %s199, [#allocation6], 192, 192, 12
        $region16: #{tpu_custom_call.1} parent=11 // pred_fallthru
          _
        // Predicated region
        $region17: #{tpu_custom_call.1} parent=11 // pred_check
          %p205 = pneg %p88
        $region18: #{tpu_custom_call.1} parent=11 // pred_check_branch
          %207 = sbr.rel (%p205) target = $region20
        $region19: #{tpu_custom_call.1} parent=11 // pred_region
          _
        $region20: #{tpu_custom_call.1} parent=11 // pred_fallthru
          _
        // Predicated region
        $region21: #{tpu_custom_call.1} parent=11 // pred_check
          %p208 = pneg %p109
        $region22: #{tpu_custom_call.1} parent=11 // pred_check_branch
          %210 = sbr.rel (%p208) target = $region24
        $region23: #{tpu_custom_call.1} parent=11 // pred_region
          %s212 = ssub.s32 1024, 1024
          %213 = vsyncadd [#allocation6], %s212
          %s214 = sshll.u32 [#allocation7], 4
          %s215 = int_to_ptr.vmem [resolvable:$true] %s214
          %220 = dma.hbm_to_vmem [thread:$0]  %s3, 1024, %s215, [#allocation6], 128, 128, 8
        $region24: #{tpu_custom_call.1} parent=11 // pred_fallthru
          _
        // Predicated region
        $region25: #{tpu_custom_call.1} parent=11 // pred_check
          %p221 = pneg %p130
        $region26: #{tpu_custom_call.1} parent=11 // pred_check_branch
          %223 = sbr.rel (%p221) target = $region28
        $region27: #{tpu_custom_call.1} parent=11 // pred_region
          %s225 = ssub.s32 1024, 1024
          %226 = vsyncadd [#allocation9], %s225
          %s227 = sshll.u32 [#allocation8], 4
          %s228 = int_to_ptr.vmem [resolvable:$true] %s227
          %233 = dma.hbm_to_vmem [thread:$0]  %s4, 1024, %s228, [#allocation9], 64, 64, 4
        $region28: #{tpu_custom_call.1} parent=11 // pred_fallthru
          _
        // Predicated region
        $region29: #{tpu_custom_call.1} parent=11 // pred_check
          %p234 = pneg %p151
        $region30: #{tpu_custom_call.1} parent=11 // pred_check_branch
          %236 = sbr.rel (%p234) target = $region32
        $region31: #{tpu_custom_call.1} parent=11 // pred_region
          _
        $region32: #{tpu_custom_call.1} parent=11 // pred_fallthru
          _
      $region12: #{tpu_custom_call.1} parent=5 // pred_fallthru
        _
      %p237 = scmp.lt.s32.totalorder %s20, 2
      // Predicated region
      $region33: #{tpu_custom_call.1} parent=5 // pred_check
        %p238 = pneg %p237
      $region34: #{tpu_custom_call.1} parent=5 // pred_check_branch
        %240 = sbr.rel (%p238) target = $region36
      $region35: #{tpu_custom_call.1} parent=5 // pred_region
        // Predicated region
        $region37: #{tpu_custom_call.1} parent=35 // pred_check
          %p241 = pneg %p40
        $region38: #{tpu_custom_call.1} parent=35 // pred_check_branch
          %243 = sbr.rel (%p241) target = $region40
        $region39: #{tpu_custom_call.1} parent=35 // pred_region
          %s244 = sand.u32 %s30, 1
          %s245 = scalar_lea.sflag [#allocation3], %s244
          %s246 = sand.u32 %s30, 1
          %s247 = smul.addr %s246, 128
          %s248 = scalar_lea.vmem [#allocation2], %s247
          %s249 = smul.u32 8, %s20
          %s251 = ssub.s32 2048, 2048
          %252 = vsyncadd %s245, %s251
          %s253 = smul.addr %s249, 2
          %s254 = smul.addr %s253, 128
          %s255 = scalar_lea.hbm %s0, %s254
          %s256 = sshll.u32 %s248, 4
          %s257 = int_to_ptr.vmem [resolvable:$true] %s256
          %262 = dma.hbm_to_vmem [thread:$0]  %s255, 2048, %s257, %s245, 128, 128, 8
        $region40: #{tpu_custom_call.1} parent=35 // pred_fallthru
          _
      $region36: #{tpu_custom_call.1} parent=5 // pred_fallthru
        _
      %p263 = scmp.le.s32.totalorder 1, %s20
      %p264 = scmp.lt.s32.totalorder %s20, 3
      %p265 = pnand %p263, %p264
      %p266 = pneg %p265
      // Predicated region
      $region41: #{tpu_custom_call.1} parent=5 // pred_check
        _
      $region42: #{tpu_custom_call.1} parent=5 // pred_check_branch
        %268 = sbr.rel (%p265) target = $region44
      $region43: #{tpu_custom_call.1} parent=5 // pred_region
        %s269 = ssub.s32 %s20, 1
        %s270 = sand.u32 %s33, 1
        %s271 = scalar_lea.sflag [#allocation3], %s270
        %s272 = sand.u32 %s33, 1
        %s273 = smul.addr %s272, 128
        %s274 = scalar_lea.vmem [#allocation2], %s273
        // Predicated region
        $region45: #{tpu_custom_call.1} parent=43 // pred_check
          %p275 = pneg %p46
        $region46: #{tpu_custom_call.1} parent=43 // pred_check_branch
          %277 = sbr.rel (%p275) target = $region48
        $region47: #{tpu_custom_call.1} parent=43 // pred_region
          %278 = dma.done %s271, 2048
        $region48: #{tpu_custom_call.1} parent=43 // pred_fallthru
          _
        // Predicated region
        $region49: #{tpu_custom_call.1} parent=43 // pred_check
          %p279 = pneg %p67
        $region50: #{tpu_custom_call.1} parent=43 // pred_check_branch
          %281 = sbr.rel (%p279) target = $region52
        $region51: #{tpu_custom_call.1} parent=43 // pred_region
          %282 = dma.done [#allocation6], 3072
        $region52: #{tpu_custom_call.1} parent=43 // pred_fallthru
          _
        // Predicated region
        $region53: #{tpu_custom_call.1} parent=43 // pred_check
          %p283 = pneg %p109
        $region54: #{tpu_custom_call.1} parent=43 // pred_check_branch
          %285 = sbr.rel (%p283) target = $region56
        $region55: #{tpu_custom_call.1} parent=43 // pred_region
          %286 = dma.done [#allocation6], 1024
        $region56: #{tpu_custom_call.1} parent=43 // pred_fallthru
          _
        // Predicated region
        $region57: #{tpu_custom_call.1} parent=43 // pred_check
          %p287 = pneg %p130
        $region58: #{tpu_custom_call.1} parent=43 // pred_check_branch
          %289 = sbr.rel (%p287) target = $region60
        $region59: #{tpu_custom_call.1} parent=43 // pred_region
          %290 = dma.done [#allocation9], 1024
        $region60: #{tpu_custom_call.1} parent=43 // pred_fallthru
          _
        %s291 = sand.u32 %s33, 1
        %s292 = scalar_lea.sflag [#allocation3], %s291
        %s293 = sand.u32 %s33, 1
        %s294 = smul.addr %s293, 128
        %s295 = scalar_lea.vmem [#allocation2], %s294
        %p296 = pneg %p46
        %p297 = pneg %p43
        %p298 = pneg %p67
        %p299 = pneg %p64
        %p300 = pneg %p88
        %p301 = pneg %p85
        %p302 = pneg %p109
        %p303 = pneg %p106
        %p304 = pneg %p130
        %p305 = pneg %p127
        %p306 = pneg %p151
        %p307 = pneg %p148
        %p308 = pneg %p177
        %p309 = pneg %p174
        %s310 = sand.u32 %s164, 1
        %s311 = scalar_lea.sflag [#allocation4], %s310
        %s312 = sand.u32 %s164, 1
        %s313 = smul.addr %s312, 128
        %s314 = scalar_lea.vmem [#allocation10], %s313
        %s315 = smul.u32 8, %s25
        %s316 = smul.u32 8, %s25
        %v318 = vld [vmem:[%s274] sm:$0xff]
        %v319 = vld [vmem:[%s274 + $0x8] sm:$0xff]
        %v320 = vld [vmem:[%s274 + $0x10] sm:$0xff]
        %v321 = vld [vmem:[%s274 + $0x18] sm:$0xff]
        %v322 = vld [vmem:[%s274 + $0x20] sm:$0xff]
        %v323 = vld [vmem:[%s274 + $0x28] sm:$0xff]
        %v324 = vld [vmem:[%s274 + $0x30] sm:$0xff]
        %v325 = vld [vmem:[%s274 + $0x38] sm:$0xff]
        %v326 = vld [vmem:[%s274 + $0x40] sm:$0xff]
        %v327 = vld [vmem:[%s274 + $0x48] sm:$0xff]
        %v328 = vld [vmem:[%s274 + $0x50] sm:$0xff]
        %v329 = vld [vmem:[%s274 + $0x58] sm:$0xff]
        %v330 = vld [vmem:[%s274 + $0x60] sm:$0xff]
        %v331 = vld [vmem:[%s274 + $0x68] sm:$0xff]
        %v332 = vld [vmem:[%s274 + $0x70] sm:$0xff]
        %v333 = vld [vmem:[%s274 + $0x78] sm:$0xff]
        %v334 = vpack.c.bf16 %v319, %v318
        %v335 = vpack.c.bf16 %v321, %v320
        %v336 = vpack.c.bf16 %v323, %v322
        %v337 = vpack.c.bf16 %v325, %v324
        %v338 = vpack.c.bf16 %v327, %v326
        %v339 = vpack.c.bf16 %v329, %v328
        %v340 = vpack.c.bf16 %v331, %v330
        %v341 = vpack.c.bf16 %v333, %v332
        %v342 = vld [vmem:[#allocation5] sm:$0xff]
        %v343 = vld [vmem:[#allocation5 + $0x8] sm:$0xf]
        %v344 = vld [vmem:[#allocation5 + $0xc] sm:$0xff]
        %v345 = vld [vmem:[#allocation5 + $0x14] sm:$0xf]
        %v346 = vld [vmem:[#allocation5 + $0x18] sm:$0xff]
        %v347 = vld [vmem:[#allocation5 + $0x20] sm:$0xf]
        %v348 = vld [vmem:[#allocation5 + $0x24] sm:$0xff]
        %v349 = vld [vmem:[#allocation5 + $0x2c] sm:$0xf]
        %v350 = vld [vmem:[#allocation5 + $0x30] sm:$0xff]
        %v351 = vld [vmem:[#allocation5 + $0x38] sm:$0xf]
        %v352 = vld [vmem:[#allocation5 + $0x3c] sm:$0xff]
        %v353 = vld [vmem:[#allocation5 + $0x44] sm:$0xf]
        %v354 = vld [vmem:[#allocation5 + $0x48] sm:$0xff]
        %v355 = vld [vmem:[#allocation5 + $0x50] sm:$0xf]
        %v356 = vld [vmem:[#allocation5 + $0x54] sm:$0xff]
        %v357 = vld [vmem:[#allocation5 + $0x5c] sm:$0xf]
        %v358 = vld [vmem:[#allocation5 + $0x60] sm:$0xff]
        %v359 = vld [vmem:[#allocation5 + $0x68] sm:$0xf]
        %v360 = vld [vmem:[#allocation5 + $0x6c] sm:$0xff]
        %v361 = vld [vmem:[#allocation5 + $0x74] sm:$0xf]
        %v362 = vld [vmem:[#allocation5 + $0x78] sm:$0xff]
        %v363 = vld [vmem:[#allocation5 + $0x80] sm:$0xf]
        %v364 = vld [vmem:[#allocation5 + $0x84] sm:$0xff]
        %v365 = vld [vmem:[#allocation5 + $0x8c] sm:$0xf]
        %v366 = vld [vmem:[#allocation5 + $0x90] sm:$0xff]
        %v367 = vld [vmem:[#allocation5 + $0x98] sm:$0xf]
        %v368 = vld [vmem:[#allocation5 + $0x9c] sm:$0xff]
        %v369 = vld [vmem:[#allocation5 + $0xa4] sm:$0xf]
        %v370 = vld [vmem:[#allocation5 + $0xa8] sm:$0xff]
        %v371 = vld [vmem:[#allocation5 + $0xb0] sm:$0xf]
        %v372 = vld [vmem:[#allocation5 + $0xb4] sm:$0xff]
        %v373 = vld [vmem:[#allocation5 + $0xbc] sm:$0xf]
        %v374 = vld [vmem:[%s2] sm:$0x7]
        %v376 = vlaneseq
        %v377 = vshrl.u32 %v376, 7
        %v378 = vsub.s32 0, %v377
        %v379 = vrot.slane %v374, %v378
        %v380 = vlaneseq
        %v381 = vshrl.u32 %v380, 7
        %v382 = vsub.s32 1, %v381
        %v383 = vrot.slane %v374, %v382
        %v384 = vlaneseq
        %v385 = vshrl.u32 %v384, 7
        %v386 = vsub.s32 2, %v385
        %v387 = vrot.slane %v374, %v386
        %v423 = vunpack.c.l.b16 %v342
        %v424 = vunpack.c.h.b16 %v342
        %v425 = vunpack.c.l.b16 %v343
        %v426 = vunpack.c.l.b16 %v344
        %v427 = vunpack.c.h.b16 %v344
        %v428 = vunpack.c.l.b16 %v345
        %v429 = vunpack.c.l.b16 %v346
        %v430 = vunpack.c.h.b16 %v346
        %v431 = vunpack.c.l.b16 %v347
        %v432 = vunpack.c.l.b16 %v348
        %v433 = vunpack.c.h.b16 %v348
        %v434 = vunpack.c.l.b16 %v349
        %v435 = vunpack.c.l.b16 %v350
        %v436 = vunpack.c.h.b16 %v350
        %v437 = vunpack.c.l.b16 %v351
        %v438 = vunpack.c.l.b16 %v352
        %v439 = vunpack.c.h.b16 %v352
        %v440 = vunpack.c.l.b16 %v353
        %v441 = vunpack.c.l.b16 %v354
        %v442 = vunpack.c.h.b16 %v354
        %v443 = vunpack.c.l.b16 %v355
        %v444 = vunpack.c.l.b16 %v356
        %v445 = vunpack.c.h.b16 %v356
        %v446 = vunpack.c.l.b16 %v357
        %v447 = vunpack.c.l.b16 %v358
        %v448 = vunpack.c.h.b16 %v358
        %v449 = vunpack.c.l.b16 %v359
        %v450 = vunpack.c.l.b16 %v360
        %v451 = vunpack.c.h.b16 %v360
        %v452 = vunpack.c.l.b16 %v361
        %v453 = vunpack.c.l.b16 %v362
        %v454 = vunpack.c.h.b16 %v362
        %v455 = vunpack.c.l.b16 %v363
        %v456 = vunpack.c.l.b16 %v364
        %v457 = vunpack.c.h.b16 %v364
        %v458 = vunpack.c.l.b16 %v365
        %v459 = vunpack.c.l.b16 %v366
        %v460 = vunpack.c.h.b16 %v366
        %v461 = vunpack.c.l.b16 %v367
        %v462 = vunpack.c.l.b16 %v368
        %v463 = vunpack.c.h.b16 %v368
        %v464 = vunpack.c.l.b16 %v369
        %v465 = vunpack.c.l.b16 %v370
        %v466 = vunpack.c.h.b16 %v370
        %v467 = vunpack.c.l.b16 %v371
        %v468 = vunpack.c.l.b16 %v372
        %v469 = vunpack.c.h.b16 %v372
        %v470 = vunpack.c.l.b16 %v373
        %v471 = vpack.c.b16 %v426, %v423
        %v472 = vpack.c.b16 %v427, %v424
        %v473 = vpack.c.b16 %v428, %v425
        %v474 = vpack.c.b16 %v432, %v429
        %v475 = vpack.c.b16 %v433, %v430
        %v476 = vpack.c.b16 %v434, %v431
        %v477 = vpack.c.b16 %v438, %v435
        %v478 = vpack.c.b16 %v439, %v436
        %v479 = vpack.c.b16 %v440, %v437
        %v480 = vpack.c.b16 %v444, %v441
        %v481 = vpack.c.b16 %v445, %v442
        %v482 = vpack.c.b16 %v446, %v443
        %v483 = vpack.c.b16 %v450, %v447
        %v484 = vpack.c.b16 %v451, %v448
        %v485 = vpack.c.b16 %v452, %v449
        %v486 = vpack.c.b16 %v456, %v453
        %v487 = vpack.c.b16 %v457, %v454
        %v488 = vpack.c.b16 %v458, %v455
        %v489 = vpack.c.b16 %v462, %v459
        %v490 = vpack.c.b16 %v463, %v460
        %v491 = vpack.c.b16 %v464, %v461
        %v492 = vpack.c.b16 %v468, %v465
        %v493 = vpack.c.b16 %v469, %v466
        %v494 = vpack.c.b16 %v470, %v467
        %519 = vmatprep.subr.bf16.mxu0 %v472
        %520 = vmatpush1.bf16.msra.mxu0 %v471
        %521 = vmatprep.subr.bf16.mxu0 %v475
        %522 = vmatpush1.bf16.msra.mxu0 %v474
        %523 = vmatprep.subr.bf16.mxu0 %v478
        %524 = vmatpush1.bf16.msra.mxu0 %v477
        %525 = vmatprep.subr.bf16.mxu0 %v481
        %526 = vmatpush1.bf16.msra.mxu0 %v480
        %527 = vmatprep.subr.bf16.mxu0 %v484
        %528 = vmatpush1.bf16.msra.mxu0 %v483
        %529 = vmatprep.subr.bf16.mxu0 %v487
        %530 = vmatpush1.bf16.msra.mxu0 %v486
        %531 = vmatprep.subr.bf16.mxu0 %v490
        %532 = vmatpush1.bf16.msra.mxu0 %v489
        %533 = vmatprep.subr.bf16.mxu0 %v493
        %534 = vmatpush1.bf16.msra.mxu0 %v492
        %535 = vmatprep.subr.bf16.mxu0 0
        %536 = vmatpush1.bf16.msra.mxu0 0
        %537 = vmatprep.subr.bf16.mxu0 0
        %538 = vmatpush1.bf16.msra.mxu0 0
        %539 = vmatprep.subr.bf16.mxu0 0
        %540 = vmatpush1.bf16.msra.mxu0 0
        %541 = vmatprep.subr.bf16.mxu0 0
        %542 = vmatpush1.bf16.msra.mxu0 0
        %543 = vmatprep.subr.bf16.mxu0 0
        %544 = vmatpush1.bf16.msra.mxu0 0
        %545 = vmatprep.subr.bf16.mxu0 0
        %546 = vmatpush1.bf16.msra.mxu0 0
        %547 = vmatprep.subr.bf16.mxu0 0
        %548 = vmatpush1.bf16.msra.mxu0 0
        %549 = vmatprep.subr.bf16.mxu0 0
        %550 = vmatpush1.bf16.msra.mxu0 0
        %551 = vmatprep.mubr.bf16.mxu0 0
        %552 = vmatmul.mubr.bf16.gmra.mrb[0].mxu0 %v334
        %v553 = vpop.f32.mrb[0].mxu0
        %v554 = vadd.f32 %v379, %v553
        %v555 = vpop.f32.mrb[0].mxu0
        %v556 = vadd.f32 %v383, %v555
        %v557 = vpop.f32.mrb[0].mxu0
        %v558 = vadd.f32 %v379, %v557
        %v559 = vpop.f32.mrb[0].mxu0
        %v560 = vadd.f32 %v383, %v559
        %561 = vmatprep.mubr.bf16.mxu0 0
        %562 = vmatmul.mubr.bf16.gmra.mrb[0].mxu0 %v335
        %v563 = vpop.f32.mrb[0].mxu0
        %v564 = vadd.f32 %v379, %v563
        %v565 = vpop.f32.mrb[0].mxu0
        %v566 = vadd.f32 %v383, %v565
        %v567 = vpop.f32.mrb[0].mxu0
        %v568 = vadd.f32 %v379, %v567
        %v569 = vpop.f32.mrb[0].mxu0
        %v570 = vadd.f32 %v383, %v569
        %571 = vmatprep.mubr.bf16.mxu0 0
        %572 = vmatmul.mubr.bf16.gmra.mrb[0].mxu0 %v336
        %v573 = vpop.f32.mrb[0].mxu0
        %v574 = vadd.f32 %v379, %v573
        %v575 = vpop.f32.mrb[0].mxu0
        %v576 = vadd.f32 %v383, %v575
        %v577 = vpop.f32.mrb[0].mxu0
        %v578 = vadd.f32 %v379, %v577
        %v579 = vpop.f32.mrb[0].mxu0
        %v580 = vadd.f32 %v383, %v579
        %581 = vmatprep.mubr.bf16.mxu0 0
        %582 = vmatmul.mubr.bf16.gmra.mrb[0].mxu0 %v337
        %v583 = vpop.f32.mrb[0].mxu0
        %v584 = vadd.f32 %v379, %v583
        %v585 = vpop.f32.mrb[0].mxu0
        %v586 = vadd.f32 %v383, %v585
        %v587 = vpop.f32.mrb[0].mxu0
        %v588 = vadd.f32 %v379, %v587
        %v589 = vpop.f32.mrb[0].mxu0
        %v590 = vadd.f32 %v383, %v589
        %591 = vmatprep.mubr.bf16.mxu0 0
        %592 = vmatmul.mubr.bf16.gmra.mrb[0].mxu0 %v338
        %v593 = vpop.f32.mrb[0].mxu0
        %v594 = vadd.f32 %v379, %v593
        %v595 = vpop.f32.mrb[0].mxu0
        %v596 = vadd.f32 %v383, %v595
        %v597 = vpop.f32.mrb[0].mxu0
        %v598 = vadd.f32 %v379, %v597
        %v599 = vpop.f32.mrb[0].mxu0
        %v600 = vadd.f32 %v383, %v599
        %601 = vmatprep.mubr.bf16.mxu0 0
        %602 = vmatmul.mubr.bf16.gmra.mrb[0].mxu0 %v339
        %v603 = vpop.f32.mrb[0].mxu0
        %v604 = vadd.f32 %v379, %v603
        %v605 = vpop.f32.mrb[0].mxu0
        %v606 = vadd.f32 %v383, %v605
        %v607 = vpop.f32.mrb[0].mxu0
        %v608 = vadd.f32 %v379, %v607
        %v609 = vpop.f32.mrb[0].mxu0
        %v610 = vadd.f32 %v383, %v609
        %611 = vmatprep.mubr.bf16.mxu0 0
        %612 = vmatmul.mubr.bf16.gmra.mrb[0].mxu0 %v340
        %v613 = vpop.f32.mrb[0].mxu0
        %v614 = vadd.f32 %v379, %v613
        %v615 = vpop.f32.mrb[0].mxu0
        %v616 = vadd.f32 %v383, %v615
        %v617 = vpop.f32.mrb[0].mxu0
        %v618 = vadd.f32 %v379, %v617
        %v619 = vpop.f32.mrb[0].mxu0
        %v620 = vadd.f32 %v383, %v619
        %621 = vmatprep.mubr.bf16.mxu0 0
        %622 = vmatmul.mubr.bf16.gmra.mrb[0].mxu0 %v341
        %v623 = vpop.f32.mrb[0].mxu0
        %v624 = vadd.f32 %v379, %v623
        %v625 = vpop.f32.mrb[0].mxu0
        %v626 = vadd.f32 %v383, %v625
        %v627 = vpop.f32.mrb[0].mxu0
        %v628 = vadd.f32 %v379, %v627
        %v629 = vpop.f32.mrb[0].mxu0
        %v630 = vadd.f32 %v383, %v629
        %631 = vdwg.mxu0
        %632 = vmatprep.subr.bf16.mxu0 0
        %633 = vmatpush1.bf16.msra.mxu0 %v473
        %634 = vmatprep.subr.bf16.mxu0 0
        %635 = vmatpush1.bf16.msra.mxu0 %v476
        %636 = vmatprep.subr.bf16.mxu0 0
        %637 = vmatpush1.bf16.msra.mxu0 %v479
        %638 = vmatprep.subr.bf16.mxu0 0
        %639 = vmatpush1.bf16.msra.mxu0 %v482
        %640 = vmatprep.subr.bf16.mxu0 0
        %641 = vmatpush1.bf16.msra.mxu0 %v485
        %642 = vmatprep.subr.bf16.mxu0 0
        %643 = vmatpush1.bf16.msra.mxu0 %v488
        %644 = vmatprep.subr.bf16.mxu0 0
        %645 = vmatpush1.bf16.msra.mxu0 %v491
        %646 = vmatprep.subr.bf16.mxu0 0
        %647 = vmatpush1.bf16.msra.mxu0 %v494
        %648 = vmatprep.subr.bf16.mxu0 0
        %649 = vmatpush1.bf16.msra.mxu0 0
        %650 = vmatprep.subr.bf16.mxu0 0
        %651 = vmatpush1.bf16.msra.mxu0 0
        %652 = vmatprep.subr.bf16.mxu0 0
        %653 = vmatpush1.bf16.msra.mxu0 0
        %654 = vmatprep.subr.bf16.mxu0 0
        %655 = vmatpush1.bf16.msra.mxu0 0
        %656 = vmatprep.subr.bf16.mxu0 0
        %657 = vmatpush1.bf16.msra.mxu0 0
        %658 = vmatprep.subr.bf16.mxu0 0
        %659 = vmatpush1.bf16.msra.mxu0 0
        %660 = vmatprep.subr.bf16.mxu0 0
        %661 = vmatpush1.bf16.msra.mxu0 0
        %662 = vmatprep.subr.bf16.mxu0 0
        %663 = vmatpush1.bf16.msra.mxu0 0
        %664 = vmatprep.mubr.bf16.mxu0 0
        %665 = vmatmul.mubr.bf16.gmra.mrb[0].mxu0 %v334
        %v666 = vpop.f32.mrb[0].mxu0
        %v667 = vadd.f32 %v387, %v666
        %v668 = vpop.f32.mrb[0].mxu0
        %v669 = vpop.f32.mrb[0].mxu0
        %v670 = vadd.f32 %v387, %v669
        %v671 = vpop.f32.mrb[0].mxu0
        %672 = vmatprep.mubr.bf16.mxu0 0
        %673 = vmatmul.mubr.bf16.gmra.mrb[0].mxu0 %v335
        %v674 = vpop.f32.mrb[0].mxu0
        %v675 = vadd.f32 %v387, %v674
        %v676 = vpop.f32.mrb[0].mxu0
        %v677 = vpop.f32.mrb[0].mxu0
        %v678 = vadd.f32 %v387, %v677
        %v679 = vpop.f32.mrb[0].mxu0
        %680 = vmatprep.mubr.bf16.mxu0 0
        %681 = vmatmul.mubr.bf16.gmra.mrb[0].mxu0 %v336
        %v682 = vpop.f32.mrb[0].mxu0
        %v683 = vadd.f32 %v387, %v682
        %v684 = vpop.f32.mrb[0].mxu0
        %v685 = vpop.f32.mrb[0].mxu0
        %v686 = vadd.f32 %v387, %v685
        %v687 = vpop.f32.mrb[0].mxu0
        %688 = vmatprep.mubr.bf16.mxu0 0
        %689 = vmatmul.mubr.bf16.gmra.mrb[0].mxu0 %v337
        %v690 = vpop.f32.mrb[0].mxu0
        %v691 = vadd.f32 %v387, %v690
        %v692 = vpop.f32.mrb[0].mxu0
        %v693 = vpop.f32.mrb[0].mxu0
        %v694 = vadd.f32 %v387, %v693
        %v695 = vpop.f32.mrb[0].mxu0
        %696 = vmatprep.mubr.bf16.mxu0 0
        %697 = vmatmul.mubr.bf16.gmra.mrb[0].mxu0 %v338
        %v698 = vpop.f32.mrb[0].mxu0
        %v699 = vadd.f32 %v387, %v698
        %v700 = vpop.f32.mrb[0].mxu0
        %v701 = vpop.f32.mrb[0].mxu0
        %v702 = vadd.f32 %v387, %v701
        %v703 = vpop.f32.mrb[0].mxu0
        %704 = vmatprep.mubr.bf16.mxu0 0
        %705 = vmatmul.mubr.bf16.gmra.mrb[0].mxu0 %v339
        %v706 = vpop.f32.mrb[0].mxu0
        %v707 = vadd.f32 %v387, %v706
        %v708 = vpop.f32.mrb[0].mxu0
        %v709 = vpop.f32.mrb[0].mxu0
        %v710 = vadd.f32 %v387, %v709
        %v711 = vpop.f32.mrb[0].mxu0
        %712 = vmatprep.mubr.bf16.mxu0 0
        %713 = vmatmul.mubr.bf16.gmra.mrb[0].mxu0 %v340
        %v714 = vpop.f32.mrb[0].mxu0
        %v715 = vadd.f32 %v387, %v714
        %v716 = vpop.f32.mrb[0].mxu0
        %v717 = vpop.f32.mrb[0].mxu0
        %v718 = vadd.f32 %v387, %v717
        %v719 = vpop.f32.mrb[0].mxu0
        %720 = vmatprep.mubr.bf16.mxu0 0
        %721 = vmatmul.mubr.bf16.gmra.mrb[0].mxu0 %v341
        %v722 = vpop.f32.mrb[0].mxu0
        %v723 = vadd.f32 %v387, %v722
        %v724 = vpop.f32.mrb[0].mxu0
        %v725 = vpop.f32.mrb[0].mxu0
        %v726 = vadd.f32 %v387, %v725
        %v727 = vpop.f32.mrb[0].mxu0
        %728 = vdwg.mxu0
        %v729 = vld [vmem:[#allocation8] sm:$0xf]
        %v730 = vld [vmem:[#allocation8 + $0x4] sm:$0xf]
        %v731 = vld [vmem:[#allocation8 + $0x8] sm:$0xf]
        %v732 = vld [vmem:[#allocation8 + $0xc] sm:$0xf]
        %v733 = vld [vmem:[#allocation8 + $0x10] sm:$0xf]
        %v734 = vld [vmem:[#allocation8 + $0x14] sm:$0xf]
        %v735 = vld [vmem:[#allocation8 + $0x18] sm:$0xf]
        %v736 = vld [vmem:[#allocation8 + $0x1c] sm:$0xf]
        %v737 = vld [vmem:[#allocation8 + $0x20] sm:$0xf]
        %v738 = vld [vmem:[#allocation8 + $0x24] sm:$0xf]
        %v739 = vld [vmem:[#allocation8 + $0x28] sm:$0xf]
        %v740 = vld [vmem:[#allocation8 + $0x2c] sm:$0xf]
        %v741 = vld [vmem:[#allocation8 + $0x30] sm:$0xf]
        %v742 = vld [vmem:[#allocation8 + $0x34] sm:$0xf]
        %v743 = vld [vmem:[#allocation8 + $0x38] sm:$0xf]
        %v744 = vld [vmem:[#allocation8 + $0x3c] sm:$0xf]
        %v745 = vpack.c.bf16 %v558, %v554
        %v746 = vpack.c.bf16 %v568, %v564
        %v747 = vpack.c.bf16 %v578, %v574
        %v748 = vpack.c.bf16 %v588, %v584
        %v749 = vpack.c.bf16 %v598, %v594
        %v750 = vpack.c.bf16 %v608, %v604
        %v751 = vpack.c.bf16 %v618, %v614
        %v752 = vpack.c.bf16 %v628, %v624
        %v753 = vpack.c.bf16 %v560, %v556
        %v754 = vpack.c.bf16 %v570, %v566
        %v755 = vpack.c.bf16 %v580, %v576
        %v756 = vpack.c.bf16 %v590, %v586
        %v757 = vpack.c.bf16 %v600, %v596
        %v758 = vpack.c.bf16 %v610, %v606
        %v759 = vpack.c.bf16 %v620, %v616
        %v760 = vpack.c.bf16 %v630, %v626
        %v761 = vpack.c.bf16 %v670, %v667
        %v762 = vpack.c.bf16 %v678, %v675
        %v763 = vpack.c.bf16 %v686, %v683
        %v764 = vpack.c.bf16 %v694, %v691
        %v765 = vpack.c.bf16 %v702, %v699
        %v766 = vpack.c.bf16 %v710, %v707
        %v767 = vpack.c.bf16 %v718, %v715
        %v768 = vpack.c.bf16 %v726, %v723
        %v769 = vld [vmem:[#allocation7] sm:$0xff]
        %v770 = vld [vmem:[#allocation7 + $0x8] sm:$0xff]
        %vm771 = vcmask 261120
        %v773 = vsel %vm771, %v745, 0
        %v776 = vsel %vm771, %v753, 0
        %778 = vmatprep.subr.bf16.mxu0 0
        %779 = vmatpush1.bf16.xpose.msra.mxu0 %v776
        %780 = vmatprep.subr.bf16.mxu0 0
        %781 = vmatpush1.bf16.xpose.msra.mxu0 0
        %782 = vmatprep.subr.bf16.mxu0 0
        %783 = vmatpush1.bf16.xpose.msra.mxu0 0
        %784 = vmatprep.subr.bf16.mxu0 0
        %785 = vmatpush1.bf16.xpose.msra.mxu0 0
        %786 = vmatprep.subr.bf16.mxu0 0
        %787 = vmatpush1.bf16.xpose.msra.mxu0 0
        %788 = vmatprep.subr.bf16.mxu0 0
        %789 = vmatpush1.bf16.xpose.msra.mxu0 0
        %790 = vmatprep.subr.bf16.mxu0 0
        %791 = vmatpush1.bf16.xpose.msra.mxu0 0
        %792 = vmatprep.subr.bf16.mxu0 0
        %793 = vmatpush1.bf16.xpose.msra.mxu0 0
        %794 = vmatprep.subr.bf16.mxu0 0
        %795 = vmatpush1.bf16.xpose.msra.mxu0 0
        %796 = vmatprep.subr.bf16.mxu0 0
        %797 = vmatpush1.bf16.xpose.msra.mxu0 0
        %798 = vmatprep.subr.bf16.mxu0 0
        %799 = vmatpush1.bf16.xpose.msra.mxu0 0
        %800 = vmatprep.subr.bf16.mxu0 0
        %801 = vmatpush1.bf16.xpose.msra.mxu0 0
        %802 = vmatprep.subr.bf16.mxu0 0
        %803 = vmatpush1.bf16.xpose.msra.mxu0 0
        %804 = vmatprep.subr.bf16.mxu0 0
        %805 = vmatpush1.bf16.xpose.msra.mxu0 0
        %806 = vmatprep.subr.bf16.mxu0 0
        %807 = vmatpush1.bf16.xpose.msra.mxu0 0
        %808 = vmatprep.subr.bf16.mxu0 0
        %809 = vmatpush1.bf16.xpose.msra.mxu0 0
        %810 = vmatprep.mubr.bf16.mxu0 0
        %811 = vmatmul.mubr.bf16.gmra.mrb[0].mxu0 %v773
        %v812 = vpop.f32.mrb[0].mxu0
        %v813 = vadd.f32 %v769, %v812
        %v814 = vpop.f32.mrb[0].mxu0
        %v815 = vpop.f32.mrb[0].mxu0
        %v816 = vadd.f32 %v770, %v815
        %v817 = vpop.f32.mrb[0].mxu0
        %818 = vdwg.mxu0
        %v820 = vsel %vm771, %v746, 0
        %v823 = vsel %vm771, %v754, 0
        %825 = vmatprep.subr.bf16.mxu0 0
        %826 = vmatpush1.bf16.xpose.msra.mxu0 %v823
        %827 = vmatprep.subr.bf16.mxu0 0
        %828 = vmatpush1.bf16.xpose.msra.mxu0 0
        %829 = vmatprep.subr.bf16.mxu0 0
        %830 = vmatpush1.bf16.xpose.msra.mxu0 0
        %831 = vmatprep.subr.bf16.mxu0 0
        %832 = vmatpush1.bf16.xpose.msra.mxu0 0
        %833 = vmatprep.subr.bf16.mxu0 0
        %834 = vmatpush1.bf16.xpose.msra.mxu0 0
        %835 = vmatprep.subr.bf16.mxu0 0
        %836 = vmatpush1.bf16.xpose.msra.mxu0 0
        %837 = vmatprep.subr.bf16.mxu0 0
        %838 = vmatpush1.bf16.xpose.msra.mxu0 0
        %839 = vmatprep.subr.bf16.mxu0 0
        %840 = vmatpush1.bf16.xpose.msra.mxu0 0
        %841 = vmatprep.subr.bf16.mxu0 0
        %842 = vmatpush1.bf16.xpose.msra.mxu0 0
        %843 = vmatprep.subr.bf16.mxu0 0
        %844 = vmatpush1.bf16.xpose.msra.mxu0 0
        %845 = vmatprep.subr.bf16.mxu0 0
        %846 = vmatpush1.bf16.xpose.msra.mxu0 0
        %847 = vmatprep.subr.bf16.mxu0 0
        %848 = vmatpush1.bf16.xpose.msra.mxu0 0
        %849 = vmatprep.subr.bf16.mxu0 0
        %850 = vmatpush1.bf16.xpose.msra.mxu0 0
        %851 = vmatprep.subr.bf16.mxu0 0
        %852 = vmatpush1.bf16.xpose.msra.mxu0 0
        %853 = vmatprep.subr.bf16.mxu0 0
        %854 = vmatpush1.bf16.xpose.msra.mxu0 0
        %855 = vmatprep.subr.bf16.mxu0 0
        %856 = vmatpush1.bf16.xpose.msra.mxu0 0
        %857 = vmatprep.mubr.bf16.mxu0 0
        %858 = vmatmul.mubr.bf16.gmra.mrb[0].mxu0 %v820
        %v859 = vpop.f32.mrb[0].mxu0
        %v860 = vadd.f32 %v769, %v859
        %v861 = vpop.f32.mrb[0].mxu0
        %v862 = vpop.f32.mrb[0].mxu0
        %v863 = vadd.f32 %v770, %v862
        %v864 = vpop.f32.mrb[0].mxu0
        %865 = vdwg.mxu0
        %v867 = vsel %vm771, %v747, 0
        %v870 = vsel %vm771, %v755, 0
        %872 = vmatprep.subr.bf16.mxu0 0
        %873 = vmatpush1.bf16.xpose.msra.mxu0 %v870
        %874 = vmatprep.subr.bf16.mxu0 0
        %875 = vmatpush1.bf16.xpose.msra.mxu0 0
        %876 = vmatprep.subr.bf16.mxu0 0
        %877 = vmatpush1.bf16.xpose.msra.mxu0 0
        %878 = vmatprep.subr.bf16.mxu0 0
        %879 = vmatpush1.bf16.xpose.msra.mxu0 0
        %880 = vmatprep.subr.bf16.mxu0 0
        %881 = vmatpush1.bf16.xpose.msra.mxu0 0
        %882 = vmatprep.subr.bf16.mxu0 0
        %883 = vmatpush1.bf16.xpose.msra.mxu0 0
        %884 = vmatprep.subr.bf16.mxu0 0
        %885 = vmatpush1.bf16.xpose.msra.mxu0 0
        %886 = vmatprep.subr.bf16.mxu0 0
        %887 = vmatpush1.bf16.xpose.msra.mxu0 0
        %888 = vmatprep.subr.bf16.mxu0 0
        %889 = vmatpush1.bf16.xpose.msra.mxu0 0
        %890 = vmatprep.subr.bf16.mxu0 0
        %891 = vmatpush1.bf16.xpose.msra.mxu0 0
        %892 = vmatprep.subr.bf16.mxu0 0
        %893 = vmatpush1.bf16.xpose.msra.mxu0 0
        %894 = vmatprep.subr.bf16.mxu0 0
        %895 = vmatpush1.bf16.xpose.msra.mxu0 0
        %896 = vmatprep.subr.bf16.mxu0 0
        %897 = vmatpush1.bf16.xpose.msra.mxu0 0
        %898 = vmatprep.subr.bf16.mxu0 0
        %899 = vmatpush1.bf16.xpose.msra.mxu0 0
        %900 = vmatprep.subr.bf16.mxu0 0
        %901 = vmatpush1.bf16.xpose.msra.mxu0 0
        %902 = vmatprep.subr.bf16.mxu0 0
        %903 = vmatpush1.bf16.xpose.msra.mxu0 0
        %904 = vmatprep.mubr.bf16.mxu0 0
        %905 = vmatmul.mubr.bf16.gmra.mrb[0].mxu0 %v867
        %v906 = vpop.f32.mrb[0].mxu0
        %v907 = vadd.f32 %v769, %v906
        %v908 = vpop.f32.mrb[0].mxu0
        %v909 = vpop.f32.mrb[0].mxu0
        %v910 = vadd.f32 %v770, %v909
        %v911 = vpop.f32.mrb[0].mxu0
        %912 = vdwg.mxu0
        %v914 = vsel %vm771, %v748, 0
        %v917 = vsel %vm771, %v756, 0
        %919 = vmatprep.subr.bf16.mxu0 0
        %920 = vmatpush1.bf16.xpose.msra.mxu0 %v917
        %921 = vmatprep.subr.bf16.mxu0 0
        %922 = vmatpush1.bf16.xpose.msra.mxu0 0
        %923 = vmatprep.subr.bf16.mxu0 0
        %924 = vmatpush1.bf16.xpose.msra.mxu0 0
        %925 = vmatprep.subr.bf16.mxu0 0
        %926 = vmatpush1.bf16.xpose.msra.mxu0 0
        %927 = vmatprep.subr.bf16.mxu0 0
        %928 = vmatpush1.bf16.xpose.msra.mxu0 0
        %929 = vmatprep.subr.bf16.mxu0 0
        %930 = vmatpush1.bf16.xpose.msra.mxu0 0
        %931 = vmatprep.subr.bf16.mxu0 0
        %932 = vmatpush1.bf16.xpose.msra.mxu0 0
        %933 = vmatprep.subr.bf16.mxu0 0
        %934 = vmatpush1.bf16.xpose.msra.mxu0 0
        %935 = vmatprep.subr.bf16.mxu0 0
        %936 = vmatpush1.bf16.xpose.msra.mxu0 0
        %937 = vmatprep.subr.bf16.mxu0 0
        %938 = vmatpush1.bf16.xpose.msra.mxu0 0
        %939 = vmatprep.subr.bf16.mxu0 0
        %940 = vmatpush1.bf16.xpose.msra.mxu0 0
        %941 = vmatprep.subr.bf16.mxu0 0
        %942 = vmatpush1.bf16.xpose.msra.mxu0 0
        %943 = vmatprep.subr.bf16.mxu0 0
        %944 = vmatpush1.bf16.xpose.msra.mxu0 0
        %945 = vmatprep.subr.bf16.mxu0 0
        %946 = vmatpush1.bf16.xpose.msra.mxu0 0
        %947 = vmatprep.subr.bf16.mxu0 0
        %948 = vmatpush1.bf16.xpose.msra.mxu0 0
        %949 = vmatprep.subr.bf16.mxu0 0
        %950 = vmatpush1.bf16.xpose.msra.mxu0 0
        %951 = vmatprep.mubr.bf16.mxu0 0
        %952 = vmatmul.mubr.bf16.gmra.mrb[0].mxu0 %v914
        %v953 = vpop.f32.mrb[0].mxu0
        %v954 = vadd.f32 %v769, %v953
        %v955 = vpop.f32.mrb[0].mxu0
        %v956 = vpop.f32.mrb[0].mxu0
        %v957 = vadd.f32 %v770, %v956
        %v958 = vpop.f32.mrb[0].mxu0
        %959 = vdwg.mxu0
        %v961 = vsel %vm771, %v749, 0
        %v964 = vsel %vm771, %v757, 0
        %966 = vmatprep.subr.bf16.mxu0 0
        %967 = vmatpush1.bf16.xpose.msra.mxu0 %v964
        %968 = vmatprep.subr.bf16.mxu0 0
        %969 = vmatpush1.bf16.xpose.msra.mxu0 0
        %970 = vmatprep.subr.bf16.mxu0 0
        %971 = vmatpush1.bf16.xpose.msra.mxu0 0
        %972 = vmatprep.subr.bf16.mxu0 0
        %973 = vmatpush1.bf16.xpose.msra.mxu0 0
        %974 = vmatprep.subr.bf16.mxu0 0
        %975 = vmatpush1.bf16.xpose.msra.mxu0 0
        %976 = vmatprep.subr.bf16.mxu0 0
        %977 = vmatpush1.bf16.xpose.msra.mxu0 0
        %978 = vmatprep.subr.bf16.mxu0 0
        %979 = vmatpush1.bf16.xpose.msra.mxu0 0
        %980 = vmatprep.subr.bf16.mxu0 0
        %981 = vmatpush1.bf16.xpose.msra.mxu0 0
        %982 = vmatprep.subr.bf16.mxu0 0
        %983 = vmatpush1.bf16.xpose.msra.mxu0 0
        %984 = vmatprep.subr.bf16.mxu0 0
        %985 = vmatpush1.bf16.xpose.msra.mxu0 0
        %986 = vmatprep.subr.bf16.mxu0 0
        %987 = vmatpush1.bf16.xpose.msra.mxu0 0
        %988 = vmatprep.subr.bf16.mxu0 0
        %989 = vmatpush1.bf16.xpose.msra.mxu0 0
        %990 = vmatprep.subr.bf16.mxu0 0
        %991 = vmatpush1.bf16.xpose.msra.mxu0 0
        %992 = vmatprep.subr.bf16.mxu0 0
        %993 = vmatpush1.bf16.xpose.msra.mxu0 0
        %994 = vmatprep.subr.bf16.mxu0 0
        %995 = vmatpush1.bf16.xpose.msra.mxu0 0
        %996 = vmatprep.subr.bf16.mxu0 0
        %997 = vmatpush1.bf16.xpose.msra.mxu0 0
        %998 = vmatprep.mubr.bf16.mxu0 0
        %999 = vmatmul.mubr.bf16.gmra.mrb[0].mxu0 %v961
        %v1000 = vpop.f32.mrb[0].mxu0
        %v1001 = vadd.f32 %v769, %v1000
        %v1002 = vpop.f32.mrb[0].mxu0
        %v1003 = vpop.f32.mrb[0].mxu0
        %v1004 = vadd.f32 %v770, %v1003
        %v1005 = vpop.f32.mrb[0].mxu0
        %1006 = vdwg.mxu0
        %v1008 = vsel %vm771, %v750, 0
        %v1011 = vsel %vm771, %v758, 0
        %1013 = vmatprep.subr.bf16.mxu0 0
        %1014 = vmatpush1.bf16.xpose.msra.mxu0 %v1011
        %1015 = vmatprep.subr.bf16.mxu0 0
        %1016 = vmatpush1.bf16.xpose.msra.mxu0 0
        %1017 = vmatprep.subr.bf16.mxu0 0
        %1018 = vmatpush1.bf16.xpose.msra.mxu0 0
        %1019 = vmatprep.subr.bf16.mxu0 0
        %1020 = vmatpush1.bf16.xpose.msra.mxu0 0
        %1021 = vmatprep.subr.bf16.mxu0 0
        %1022 = vmatpush1.bf16.xpose.msra.mxu0 0
        %1023 = vmatprep.subr.bf16.mxu0 0
        %1024 = vmatpush1.bf16.xpose.msra.mxu0 0
        %1025 = vmatprep.subr.bf16.mxu0 0
        %1026 = vmatpush1.bf16.xpose.msra.mxu0 0
        %1027 = vmatprep.subr.bf16.mxu0 0
        %1028 = vmatpush1.bf16.xpose.msra.mxu0 0
        %1029 = vmatprep.subr.bf16.mxu0 0
        %1030 = vmatpush1.bf16.xpose.msra.mxu0 0
        %1031 = vmatprep.subr.bf16.mxu0 0
        %1032 = vmatpush1.bf16.xpose.msra.mxu0 0
        %1033 = vmatprep.subr.bf16.mxu0 0
        %1034 = vmatpush1.bf16.xpose.msra.mxu0 0
        %1035 = vmatprep.subr.bf16.mxu0 0
        %1036 = vmatpush1.bf16.xpose.msra.mxu0 0
        %1037 = vmatprep.subr.bf16.mxu0 0
        %1038 = vmatpush1.bf16.xpose.msra.mxu0 0
        %1039 = vmatprep.subr.bf16.mxu0 0
        %1040 = vmatpush1.bf16.xpose.msra.mxu0 0
        %1041 = vmatprep.subr.bf16.mxu0 0
        %1042 = vmatpush1.bf16.xpose.msra.mxu0 0
        %1043 = vmatprep.subr.bf16.mxu0 0
        %1044 = vmatpush1.bf16.xpose.msra.mxu0 0
        %1045 = vmatprep.mubr.bf16.mxu0 0
        %1046 = vmatmul.mubr.bf16.gmra.mrb[0].mxu0 %v1008
        %v1047 = vpop.f32.mrb[0].mxu0
        %v1048 = vadd.f32 %v769, %v1047
        %v1049 = vpop.f32.mrb[0].mxu0
        %v1050 = vpop.f32.mrb[0].mxu0
        %v1051 = vadd.f32 %v770, %v1050
        %v1052 = vpop.f32.mrb[0].mxu0
        %1053 = vdwg.mxu0
        %v1055 = vsel %vm771, %v751, 0
        %v1058 = vsel %vm771, %v759, 0
        %1060 = vmatprep.subr.bf16.mxu0 0
        %1061 = vmatpush1.bf16.xpose.msra.mxu0 %v1058
        %1062 = vmatprep.subr.bf16.mxu0 0
        %1063 = vmatpush1.bf16.xpose.msra.mxu0 0
        %1064 = vmatprep.subr.bf16.mxu0 0
        %1065 = vmatpush1.bf16.xpose.msra.mxu0 0
        %1066 = vmatprep.subr.bf16.mxu0 0
        %1067 = vmatpush1.bf16.xpose.msra.mxu0 0
        %1068 = vmatprep.subr.bf16.mxu0 0
        %1069 = vmatpush1.bf16.xpose.msra.mxu0 0
        %1070 = vmatprep.subr.bf16.mxu0 0
        %1071 = vmatpush1.bf16.xpose.msra.mxu0 0
        %1072 = vmatprep.subr.bf16.mxu0 0
        %1073 = vmatpush1.bf16.xpose.msra.mxu0 0
        %1074 = vmatprep.subr.bf16.mxu0 0
        %1075 = vmatpush1.bf16.xpose.msra.mxu0 0
        %1076 = vmatprep.subr.bf16.mxu0 0
        %1077 = vmatpush1.bf16.xpose.msra.mxu0 0
        %1078 = vmatprep.subr.bf16.mxu0 0
        %1079 = vmatpush1.bf16.xpose.msra.mxu0 0
        %1080 = vmatprep.subr.bf16.mxu0 0
        %1081 = vmatpush1.bf16.xpose.msra.mxu0 0
        %1082 = vmatprep.subr.bf16.mxu0 0
        %1083 = vmatpush1.bf16.xpose.msra.mxu0 0
        %1084 = vmatprep.subr.bf16.mxu0 0
        %1085 = vmatpush1.bf16.xpose.msra.mxu0 0
        %1086 = vmatprep.subr.bf16.mxu0 0
        %1087 = vmatpush1.bf16.xpose.msra.mxu0 0
        %1088 = vmatprep.subr.bf16.mxu0 0
        %1089 = vmatpush1.bf16.xpose.msra.mxu0 0
        %1090 = vmatprep.subr.bf16.mxu0 0
        %1091 = vmatpush1.bf16.xpose.msra.mxu0 0
        %1092 = vmatprep.mubr.bf16.mxu0 0
        %1093 = vmatmul.mubr.bf16.gmra.mrb[0].mxu0 %v1055
        %v1094 = vpop.f32.mrb[0].mxu0
        %v1095 = vadd.f32 %v769, %v1094
        %v1096 = vpop.f32.mrb[0].mxu0
        %v1097 = vpop.f32.mrb[0].mxu0
        %v1098 = vadd.f32 %v770, %v1097
        %v1099 = vpop.f32.mrb[0].mxu0
        %1100 = vdwg.mxu0
        %v1102 = vsel %vm771, %v752, 0
        %v1105 = vsel %vm771, %v760, 0
        %1107 = vmatprep.subr.bf16.mxu0 0
        %1108 = vmatpush1.bf16.xpose.msra.mxu0 %v1105
        %1109 = vmatprep.subr.bf16.mxu0 0
        %1110 = vmatpush1.bf16.xpose.msra.mxu0 0
        %1111 = vmatprep.subr.bf16.mxu0 0
        %1112 = vmatpush1.bf16.xpose.msra.mxu0 0
        %1113 = vmatprep.subr.bf16.mxu0 0
        %1114 = vmatpush1.bf16.xpose.msra.mxu0 0
        %1115 = vmatprep.subr.bf16.mxu0 0
        %1116 = vmatpush1.bf16.xpose.msra.mxu0 0
        %1117 = vmatprep.subr.bf16.mxu0 0
        %1118 = vmatpush1.bf16.xpose.msra.mxu0 0
        %1119 = vmatprep.subr.bf16.mxu0 0
        %1120 = vmatpush1.bf16.xpose.msra.mxu0 0
        %1121 = vmatprep.subr.bf16.mxu0 0
        %1122 = vmatpush1.bf16.xpose.msra.mxu0 0
        %1123 = vmatprep.subr.bf16.mxu0 0
        %1124 = vmatpush1.bf16.xpose.msra.mxu0 0
        %1125 = vmatprep.subr.bf16.mxu0 0
        %1126 = vmatpush1.bf16.xpose.msra.mxu0 0
        %1127 = vmatprep.subr.bf16.mxu0 0
        %1128 = vmatpush1.bf16.xpose.msra.mxu0 0
        %1129 = vmatprep.subr.bf16.mxu0 0
        %1130 = vmatpush1.bf16.xpose.msra.mxu0 0
        %1131 = vmatprep.subr.bf16.mxu0 0
        %1132 = vmatpush1.bf16.xpose.msra.mxu0 0
        %1133 = vmatprep.subr.bf16.mxu0 0
        %1134 = vmatpush1.bf16.xpose.msra.mxu0 0
        %1135 = vmatprep.subr.bf16.mxu0 0
        %1136 = vmatpush1.bf16.xpose.msra.mxu0 0
        %1137 = vmatprep.subr.bf16.mxu0 0
        %1138 = vmatpush1.bf16.xpose.msra.mxu0 0
        %1139 = vmatprep.mubr.bf16.mxu0 0
        %1140 = vmatmul.mubr.bf16.gmra.mrb[0].mxu0 %v1102
        %v1141 = vpop.f32.mrb[0].mxu0
        %v1142 = vadd.f32 %v769, %v1141
        %v1143 = vpop.f32.mrb[0].mxu0
        %v1144 = vpop.f32.mrb[0].mxu0
        %v1145 = vadd.f32 %v770, %v1144
        %v1146 = vpop.f32.mrb[0].mxu0
        %1147 = vdwg.mxu0
        %vm1148 = vcmask 130048
        %v1149 = vsel %vm1148, %v813, -inf
        %1150 = vmax.xlane.f32.xlu0 %v1149
        %v1151 = vpop.xlane.xlu0 %1150
        %v1152 = vsel %vm1148, %v816, -inf
        %1153 = vmax.xlane.f32.xlu0 %v1152
        %v1154 = vpop.xlane.xlu0 %1153
        %v1155 = vsel %vm1148, %v860, -inf
        %1156 = vmax.xlane.f32.xlu0 %v1155
        %v1157 = vpop.xlane.xlu0 %1156
        %v1158 = vsel %vm1148, %v863, -inf
        %1159 = vmax.xlane.f32.xlu0 %v1158
        %v1160 = vpop.xlane.xlu0 %1159
        %v1161 = vsel %vm1148, %v907, -inf
        %1162 = vmax.xlane.f32.xlu0 %v1161
        %v1163 = vpop.xlane.xlu0 %1162
        %v1164 = vsel %vm1148, %v910, -inf
        %1165 = vmax.xlane.f32.xlu0 %v1164
        %v1166 = vpop.xlane.xlu0 %1165
        %v1167 = vsel %vm1148, %v954, -inf
        %1168 = vmax.xlane.f32.xlu0 %v1167
        %v1169 = vpop.xlane.xlu0 %1168
        %v1170 = vsel %vm1148, %v957, -inf
        %1171 = vmax.xlane.f32.xlu0 %v1170
        %v1172 = vpop.xlane.xlu0 %1171
        %v1173 = vsel %vm1148, %v1001, -inf
        %1174 = vmax.xlane.f32.xlu0 %v1173
        %v1175 = vpop.xlane.xlu0 %1174
        %v1176 = vsel %vm1148, %v1004, -inf
        %1177 = vmax.xlane.f32.xlu0 %v1176
        %v1178 = vpop.xlane.xlu0 %1177
        %v1179 = vsel %vm1148, %v1048, -inf
        %1180 = vmax.xlane.f32.xlu0 %v1179
        %v1181 = vpop.xlane.xlu0 %1180
        %v1182 = vsel %vm1148, %v1051, -inf
        %1183 = vmax.xlane.f32.xlu0 %v1182
        %v1184 = vpop.xlane.xlu0 %1183
        %v1185 = vsel %vm1148, %v1095, -inf
        %1186 = vmax.xlane.f32.xlu0 %v1185
        %v1187 = vpop.xlane.xlu0 %1186
        %v1188 = vsel %vm1148, %v1098, -inf
        %1189 = vmax.xlane.f32.xlu0 %v1188
        %v1190 = vpop.xlane.xlu0 %1189
        %v1191 = vsel %vm1148, %v1142, -inf
        %1192 = vmax.xlane.f32.xlu0 %v1191
        %v1193 = vpop.xlane.xlu0 %1192
        %v1194 = vsel %vm1148, %v1145, -inf
        %1195 = vmax.xlane.f32.xlu0 %v1194
        %v1196 = vpop.xlane.xlu0 %1195
        %v1197 = vsub.f32 %v813, %v1151
        %v1198 = vsub.f32 %v816, %v1154
        %v1199 = vsub.f32 %v860, %v1157
        %v1200 = vsub.f32 %v863, %v1160
        %v1201 = vsub.f32 %v907, %v1163
        %v1202 = vsub.f32 %v910, %v1166
        %v1203 = vsub.f32 %v954, %v1169
        %v1204 = vsub.f32 %v957, %v1172
        %v1205 = vsub.f32 %v1001, %v1175
        %v1206 = vsub.f32 %v1004, %v1178
        %v1207 = vsub.f32 %v1048, %v1181
        %v1208 = vsub.f32 %v1051, %v1184
        %v1209 = vsub.f32 %v1095, %v1187
        %v1210 = vsub.f32 %v1098, %v1190
        %v1211 = vsub.f32 %v1142, %v1193
        %v1212 = vsub.f32 %v1145, %v1196
        %v1213 = vmul.f32 %v1197, 1.442695
        %v1214 = vpow.pop %v1213
        %v1215 = vmul.f32 %v1198, 1.442695
        %v1216 = vpow.pop %v1215
        %v1217 = vmul.f32 %v1199, 1.442695
        %v1218 = vpow.pop %v1217
        %v1219 = vmul.f32 %v1200, 1.442695
        %v1220 = vpow.pop %v1219
        %v1221 = vmul.f32 %v1201, 1.442695
        %v1222 = vpow.pop %v1221
        %v1223 = vmul.f32 %v1202, 1.442695
        %v1224 = vpow.pop %v1223
        %v1225 = vmul.f32 %v1203, 1.442695
        %v1226 = vpow.pop %v1225
        %v1227 = vmul.f32 %v1204, 1.442695
        %v1228 = vpow.pop %v1227
        %v1229 = vmul.f32 %v1205, 1.442695
        %v1230 = vpow.pop %v1229
        %v1231 = vmul.f32 %v1206, 1.442695
        %v1232 = vpow.pop %v1231
        %v1233 = vmul.f32 %v1207, 1.442695
        %v1234 = vpow.pop %v1233
        %v1235 = vmul.f32 %v1208, 1.442695
        %v1236 = vpow.pop %v1235
        %v1237 = vmul.f32 %v1209, 1.442695
        %v1238 = vpow.pop %v1237
        %v1239 = vmul.f32 %v1210, 1.442695
        %v1240 = vpow.pop %v1239
        %v1241 = vmul.f32 %v1211, 1.442695
        %v1242 = vpow.pop %v1241
        %v1243 = vmul.f32 %v1212, 1.442695
        %v1244 = vpow.pop %v1243
        %v1245 = vsel %vm1148, %v1214, 0.0
        %1246 = vadd.xlane.f32.xlu0 %v1245
        %v1247 = vpop.xlane.xlu0 %1246
        %v1248 = vsel %vm1148, %v1216, 0.0
        %1249 = vadd.xlane.f32.xlu0 %v1248
        %v1250 = vpop.xlane.xlu0 %1249
        %v1251 = vsel %vm1148, %v1218, 0.0
        %1252 = vadd.xlane.f32.xlu0 %v1251
        %v1253 = vpop.xlane.xlu0 %1252
        %v1254 = vsel %vm1148, %v1220, 0.0
        %1255 = vadd.xlane.f32.xlu0 %v1254
        %v1256 = vpop.xlane.xlu0 %1255
        %v1257 = vsel %vm1148, %v1222, 0.0
        %1258 = vadd.xlane.f32.xlu0 %v1257
        %v1259 = vpop.xlane.xlu0 %1258
        %v1260 = vsel %vm1148, %v1224, 0.0
        %1261 = vadd.xlane.f32.xlu0 %v1260
        %v1262 = vpop.xlane.xlu0 %1261
        %v1263 = vsel %vm1148, %v1226, 0.0
        %1264 = vadd.xlane.f32.xlu0 %v1263
        %v1265 = vpop.xlane.xlu0 %1264
        %v1266 = vsel %vm1148, %v1228, 0.0
        %1267 = vadd.xlane.f32.xlu0 %v1266
        %v1268 = vpop.xlane.xlu0 %1267
        %v1269 = vsel %vm1148, %v1230, 0.0
        %1270 = vadd.xlane.f32.xlu0 %v1269
        %v1271 = vpop.xlane.xlu0 %1270
        %v1272 = vsel %vm1148, %v1232, 0.0
        %1273 = vadd.xlane.f32.xlu0 %v1272
        %v1274 = vpop.xlane.xlu0 %1273
        %v1275 = vsel %vm1148, %v1234, 0.0
        %1276 = vadd.xlane.f32.xlu0 %v1275
        %v1277 = vpop.xlane.xlu0 %1276
        %v1278 = vsel %vm1148, %v1236, 0.0
        %1279 = vadd.xlane.f32.xlu0 %v1278
        %v1280 = vpop.xlane.xlu0 %1279
        %v1281 = vsel %vm1148, %v1238, 0.0
        %1282 = vadd.xlane.f32.xlu0 %v1281
        %v1283 = vpop.xlane.xlu0 %1282
        %v1284 = vsel %vm1148, %v1240, 0.0
        %1285 = vadd.xlane.f32.xlu0 %v1284
        %v1286 = vpop.xlane.xlu0 %1285
        %v1287 = vsel %vm1148, %v1242, 0.0
        %1288 = vadd.xlane.f32.xlu0 %v1287
        %v1289 = vpop.xlane.xlu0 %1288
        %v1290 = vsel %vm1148, %v1244, 0.0
        %1291 = vadd.xlane.f32.xlu0 %v1290
        %v1292 = vpop.xlane.xlu0 %1291
        %v1293 = vrcp.pop %v1247
        %v1294 = vrcp.pop %v1250
        %v1295 = vrcp.pop %v1253
        %v1296 = vrcp.pop %v1256
        %v1297 = vrcp.pop %v1259
        %v1298 = vrcp.pop %v1262
        %v1299 = vrcp.pop %v1265
        %v1300 = vrcp.pop %v1268
        %v1301 = vrcp.pop %v1271
        %v1302 = vrcp.pop %v1274
        %v1303 = vrcp.pop %v1277
        %v1304 = vrcp.pop %v1280
        %v1305 = vrcp.pop %v1283
        %v1306 = vrcp.pop %v1286
        %v1307 = vrcp.pop %v1289
        %v1308 = vrcp.pop %v1292
        %v1309 = vmul.f32 %v1214, %v1293
        %v1310 = vmul.f32 %v1216, %v1294
        %v1311 = vmul.f32 %v1218, %v1295
        %v1312 = vmul.f32 %v1220, %v1296
        %v1313 = vmul.f32 %v1222, %v1297
        %v1314 = vmul.f32 %v1224, %v1298
        %v1315 = vmul.f32 %v1226, %v1299
        %v1316 = vmul.f32 %v1228, %v1300
        %v1317 = vmul.f32 %v1230, %v1301
        %v1318 = vmul.f32 %v1232, %v1302
        %v1319 = vmul.f32 %v1234, %v1303
        %v1320 = vmul.f32 %v1236, %v1304
        %v1321 = vmul.f32 %v1238, %v1305
        %v1322 = vmul.f32 %v1240, %v1306
        %v1323 = vmul.f32 %v1242, %v1307
        %v1324 = vmul.f32 %v1244, %v1308
        %v1325 = vpack.c.bf16 %v1310, %v1309
        %v1326 = vpack.c.bf16 %v1312, %v1311
        %v1327 = vpack.c.bf16 %v1314, %v1313
        %v1328 = vpack.c.bf16 %v1316, %v1315
        %v1329 = vpack.c.bf16 %v1318, %v1317
        %v1330 = vpack.c.bf16 %v1320, %v1319
        %v1331 = vpack.c.bf16 %v1322, %v1321
        %v1332 = vpack.c.bf16 %v1324, %v1323
        %v1334 = vsel %vm1148, %v1325, 0
        %1336 = vmatprep.subr.bf16.mxu0 0
        %1337 = vmatpush1.bf16.msra.mxu0 %v761
        %1338 = vmatprep.subr.bf16.mxu0 0
        %1339 = vmatpush1.bf16.msra.mxu0 0
        %1340 = vmatprep.subr.bf16.mxu0 0
        %1341 = vmatpush1.bf16.msra.mxu0 0
        %1342 = vmatprep.subr.bf16.mxu0 0
        %1343 = vmatpush1.bf16.msra.mxu0 0
        %1344 = vmatprep.subr.bf16.mxu0 0
        %1345 = vmatpush1.bf16.msra.mxu0 0
        %1346 = vmatprep.subr.bf16.mxu0 0
        %1347 = vmatpush1.bf16.msra.mxu0 0
        %1348 = vmatprep.subr.bf16.mxu0 0
        %1349 = vmatpush1.bf16.msra.mxu0 0
        %1350 = vmatprep.subr.bf16.mxu0 0
        %1351 = vmatpush1.bf16.msra.mxu0 0
        %1352 = vmatprep.subr.bf16.mxu0 0
        %1353 = vmatpush1.bf16.msra.mxu0 0
        %1354 = vmatprep.subr.bf16.mxu0 0
        %1355 = vmatpush1.bf16.msra.mxu0 0
        %1356 = vmatprep.subr.bf16.mxu0 0
        %1357 = vmatpush1.bf16.msra.mxu0 0
        %1358 = vmatprep.subr.bf16.mxu0 0
        %1359 = vmatpush1.bf16.msra.mxu0 0
        %1360 = vmatprep.subr.bf16.mxu0 0
        %1361 = vmatpush1.bf16.msra.mxu0 0
        %1362 = vmatprep.subr.bf16.mxu0 0
        %1363 = vmatpush1.bf16.msra.mxu0 0
        %1364 = vmatprep.subr.bf16.mxu0 0
        %1365 = vmatpush1.bf16.msra.mxu0 0
        %1366 = vmatprep.subr.bf16.mxu0 0
        %1367 = vmatpush1.bf16.msra.mxu0 0
        %1368 = vmatprep.mubr.bf16.mxu0 0
        %1369 = vmatmul.mubr.bf16.gmra.mrb[0].mxu0 %v1334
        %v1370 = vpop.f32.mrb[0].mxu0
        %v1371 = vadd.f32 0.0, %v1370
        %v1372 = vpop.f32.mrb[0].mxu0
        %v1373 = vpop.f32.mrb[0].mxu0
        %v1374 = vadd.f32 0.0, %v1373
        %v1375 = vpop.f32.mrb[0].mxu0
        %1376 = vdwg.mxu0
        %v1378 = vsel %vm1148, %v1326, 0
        %1380 = vmatprep.subr.bf16.mxu0 0
        %1381 = vmatpush1.bf16.msra.mxu0 %v762
        %1382 = vmatprep.subr.bf16.mxu0 0
        %1383 = vmatpush1.bf16.msra.mxu0 0
        %1384 = vmatprep.subr.bf16.mxu0 0
        %1385 = vmatpush1.bf16.msra.mxu0 0
        %1386 = vmatprep.subr.bf16.mxu0 0
        %1387 = vmatpush1.bf16.msra.mxu0 0
        %1388 = vmatprep.subr.bf16.mxu0 0
        %1389 = vmatpush1.bf16.msra.mxu0 0
        %1390 = vmatprep.subr.bf16.mxu0 0
        %1391 = vmatpush1.bf16.msra.mxu0 0
        %1392 = vmatprep.subr.bf16.mxu0 0
        %1393 = vmatpush1.bf16.msra.mxu0 0
        %1394 = vmatprep.subr.bf16.mxu0 0
        %1395 = vmatpush1.bf16.msra.mxu0 0
        %1396 = vmatprep.subr.bf16.mxu0 0
        %1397 = vmatpush1.bf16.msra.mxu0 0
        %1398 = vmatprep.subr.bf16.mxu0 0
        %1399 = vmatpush1.bf16.msra.mxu0 0
        %1400 = vmatprep.subr.bf16.mxu0 0
        %1401 = vmatpush1.bf16.msra.mxu0 0
        %1402 = vmatprep.subr.bf16.mxu0 0
        %1403 = vmatpush1.bf16.msra.mxu0 0
        %1404 = vmatprep.subr.bf16.mxu0 0
        %1405 = vmatpush1.bf16.msra.mxu0 0
        %1406 = vmatprep.subr.bf16.mxu0 0
        %1407 = vmatpush1.bf16.msra.mxu0 0
        %1408 = vmatprep.subr.bf16.mxu0 0
        %1409 = vmatpush1.bf16.msra.mxu0 0
        %1410 = vmatprep.subr.bf16.mxu0 0
        %1411 = vmatpush1.bf16.msra.mxu0 0
        %1412 = vmatprep.mubr.bf16.mxu0 0
        %1413 = vmatmul.mubr.bf16.gmra.mrb[0].mxu0 %v1378
        %v1414 = vpop.f32.mrb[0].mxu0
        %v1415 = vadd.f32 0.0, %v1414
        %v1416 = vpop.f32.mrb[0].mxu0
        %v1417 = vpop.f32.mrb[0].mxu0
        %v1418 = vadd.f32 0.0, %v1417
        %v1419 = vpop.f32.mrb[0].mxu0
        %1420 = vdwg.mxu0
        %v1422 = vsel %vm1148, %v1327, 0
        %1424 = vmatprep.subr.bf16.mxu0 0
        %1425 = vmatpush1.bf16.msra.mxu0 %v763
        %1426 = vmatprep.subr.bf16.mxu0 0
        %1427 = vmatpush1.bf16.msra.mxu0 0
        %1428 = vmatprep.subr.bf16.mxu0 0
        %1429 = vmatpush1.bf16.msra.mxu0 0
        %1430 = vmatprep.subr.bf16.mxu0 0
        %1431 = vmatpush1.bf16.msra.mxu0 0
        %1432 = vmatprep.subr.bf16.mxu0 0
        %1433 = vmatpush1.bf16.msra.mxu0 0
        %1434 = vmatprep.subr.bf16.mxu0 0
        %1435 = vmatpush1.bf16.msra.mxu0 0
        %1436 = vmatprep.subr.bf16.mxu0 0
        %1437 = vmatpush1.bf16.msra.mxu0 0
        %1438 = vmatprep.subr.bf16.mxu0 0
        %1439 = vmatpush1.bf16.msra.mxu0 0
        %1440 = vmatprep.subr.bf16.mxu0 0
        %1441 = vmatpush1.bf16.msra.mxu0 0
        %1442 = vmatprep.subr.bf16.mxu0 0
        %1443 = vmatpush1.bf16.msra.mxu0 0
        %1444 = vmatprep.subr.bf16.mxu0 0
        %1445 = vmatpush1.bf16.msra.mxu0 0
        %1446 = vmatprep.subr.bf16.mxu0 0
        %1447 = vmatpush1.bf16.msra.mxu0 0
        %1448 = vmatprep.subr.bf16.mxu0 0
        %1449 = vmatpush1.bf16.msra.mxu0 0
        %1450 = vmatprep.subr.bf16.mxu0 0
        %1451 = vmatpush1.bf16.msra.mxu0 0
        %1452 = vmatprep.subr.bf16.mxu0 0
        %1453 = vmatpush1.bf16.msra.mxu0 0
        %1454 = vmatprep.subr.bf16.mxu0 0
        %1455 = vmatpush1.bf16.msra.mxu0 0
        %1456 = vmatprep.mubr.bf16.mxu0 0
        %1457 = vmatmul.mubr.bf16.gmra.mrb[0].mxu0 %v1422
        %v1458 = vpop.f32.mrb[0].mxu0
        %v1459 = vadd.f32 0.0, %v1458
        %v1460 = vpop.f32.mrb[0].mxu0
        %v1461 = vpop.f32.mrb[0].mxu0
        %v1462 = vadd.f32 0.0, %v1461
        %v1463 = vpop.f32.mrb[0].mxu0
        %1464 = vdwg.mxu0
        %v1466 = vsel %vm1148, %v1328, 0
        %1468 = vmatprep.subr.bf16.mxu0 0
        %1469 = vmatpush1.bf16.msra.mxu0 %v764
        %1470 = vmatprep.subr.bf16.mxu0 0
        %1471 = vmatpush1.bf16.msra.mxu0 0
        %1472 = vmatprep.subr.bf16.mxu0 0
        %1473 = vmatpush1.bf16.msra.mxu0 0
        %1474 = vmatprep.subr.bf16.mxu0 0
        %1475 = vmatpush1.bf16.msra.mxu0 0
        %1476 = vmatprep.subr.bf16.mxu0 0
        %1477 = vmatpush1.bf16.msra.mxu0 0
        %1478 = vmatprep.subr.bf16.mxu0 0
        %1479 = vmatpush1.bf16.msra.mxu0 0
        %1480 = vmatprep.subr.bf16.mxu0 0
        %1481 = vmatpush1.bf16.msra.mxu0 0
        %1482 = vmatprep.subr.bf16.mxu0 0
        %1483 = vmatpush1.bf16.msra.mxu0 0
        %1484 = vmatprep.subr.bf16.mxu0 0
        %1485 = vmatpush1.bf16.msra.mxu0 0
        %1486 = vmatprep.subr.bf16.mxu0 0
        %1487 = vmatpush1.bf16.msra.mxu0 0
        %1488 = vmatprep.subr.bf16.mxu0 0
        %1489 = vmatpush1.bf16.msra.mxu0 0
        %1490 = vmatprep.subr.bf16.mxu0 0
        %1491 = vmatpush1.bf16.msra.mxu0 0
        %1492 = vmatprep.subr.bf16.mxu0 0
        %1493 = vmatpush1.bf16.msra.mxu0 0
        %1494 = vmatprep.subr.bf16.mxu0 0
        %1495 = vmatpush1.bf16.msra.mxu0 0
        %1496 = vmatprep.subr.bf16.mxu0 0
        %1497 = vmatpush1.bf16.msra.mxu0 0
        %1498 = vmatprep.subr.bf16.mxu0 0
        %1499 = vmatpush1.bf16.msra.mxu0 0
        %1500 = vmatprep.mubr.bf16.mxu0 0
        %1501 = vmatmul.mubr.bf16.gmra.mrb[0].mxu0 %v1466
        %v1502 = vpop.f32.mrb[0].mxu0
        %v1503 = vadd.f32 0.0, %v1502
        %v1504 = vpop.f32.mrb[0].mxu0
        %v1505 = vpop.f32.mrb[0].mxu0
        %v1506 = vadd.f32 0.0, %v1505
        %v1507 = vpop.f32.mrb[0].mxu0
        %1508 = vdwg.mxu0
        %v1510 = vsel %vm1148, %v1329, 0
        %1512 = vmatprep.subr.bf16.mxu0 0
        %1513 = vmatpush1.bf16.msra.mxu0 %v765
        %1514 = vmatprep.subr.bf16.mxu0 0
        %1515 = vmatpush1.bf16.msra.mxu0 0
        %1516 = vmatprep.subr.bf16.mxu0 0
        %1517 = vmatpush1.bf16.msra.mxu0 0
        %1518 = vmatprep.subr.bf16.mxu0 0
        %1519 = vmatpush1.bf16.msra.mxu0 0
        %1520 = vmatprep.subr.bf16.mxu0 0
        %1521 = vmatpush1.bf16.msra.mxu0 0
        %1522 = vmatprep.subr.bf16.mxu0 0
        %1523 = vmatpush1.bf16.msra.mxu0 0
        %1524 = vmatprep.subr.bf16.mxu0 0
        %1525 = vmatpush1.bf16.msra.mxu0 0
        %1526 = vmatprep.subr.bf16.mxu0 0
        %1527 = vmatpush1.bf16.msra.mxu0 0
        %1528 = vmatprep.subr.bf16.mxu0 0
        %1529 = vmatpush1.bf16.msra.mxu0 0
        %1530 = vmatprep.subr.bf16.mxu0 0
        %1531 = vmatpush1.bf16.msra.mxu0 0
        %1532 = vmatprep.subr.bf16.mxu0 0
        %1533 = vmatpush1.bf16.msra.mxu0 0
        %1534 = vmatprep.subr.bf16.mxu0 0
        %1535 = vmatpush1.bf16.msra.mxu0 0
        %1536 = vmatprep.subr.bf16.mxu0 0
        %1537 = vmatpush1.bf16.msra.mxu0 0
        %1538 = vmatprep.subr.bf16.mxu0 0
        %1539 = vmatpush1.bf16.msra.mxu0 0
        %1540 = vmatprep.subr.bf16.mxu0 0
        %1541 = vmatpush1.bf16.msra.mxu0 0
        %1542 = vmatprep.subr.bf16.mxu0 0
        %1543 = vmatpush1.bf16.msra.mxu0 0
        %1544 = vmatprep.mubr.bf16.mxu0 0
        %1545 = vmatmul.mubr.bf16.gmra.mrb[0].mxu0 %v1510
        %v1546 = vpop.f32.mrb[0].mxu0
        %v1547 = vadd.f32 0.0, %v1546
        %v1548 = vpop.f32.mrb[0].mxu0
        %v1549 = vpop.f32.mrb[0].mxu0
        %v1550 = vadd.f32 0.0, %v1549
        %v1551 = vpop.f32.mrb[0].mxu0
        %1552 = vdwg.mxu0
        %v1554 = vsel %vm1148, %v1330, 0
        %1556 = vmatprep.subr.bf16.mxu0 0
        %1557 = vmatpush1.bf16.msra.mxu0 %v766
        %1558 = vmatprep.subr.bf16.mxu0 0
        %1559 = vmatpush1.bf16.msra.mxu0 0
        %1560 = vmatprep.subr.bf16.mxu0 0
        %1561 = vmatpush1.bf16.msra.mxu0 0
        %1562 = vmatprep.subr.bf16.mxu0 0
        %1563 = vmatpush1.bf16.msra.mxu0 0
        %1564 = vmatprep.subr.bf16.mxu0 0
        %1565 = vmatpush1.bf16.msra.mxu0 0
        %1566 = vmatprep.subr.bf16.mxu0 0
        %1567 = vmatpush1.bf16.msra.mxu0 0
        %1568 = vmatprep.subr.bf16.mxu0 0
        %1569 = vmatpush1.bf16.msra.mxu0 0
        %1570 = vmatprep.subr.bf16.mxu0 0
        %1571 = vmatpush1.bf16.msra.mxu0 0
        %1572 = vmatprep.subr.bf16.mxu0 0
        %1573 = vmatpush1.bf16.msra.mxu0 0
        %1574 = vmatprep.subr.bf16.mxu0 0
        %1575 = vmatpush1.bf16.msra.mxu0 0
        %1576 = vmatprep.subr.bf16.mxu0 0
        %1577 = vmatpush1.bf16.msra.mxu0 0
        %1578 = vmatprep.subr.bf16.mxu0 0
        %1579 = vmatpush1.bf16.msra.mxu0 0
        %1580 = vmatprep.subr.bf16.mxu0 0
        %1581 = vmatpush1.bf16.msra.mxu0 0
        %1582 = vmatprep.subr.bf16.mxu0 0
        %1583 = vmatpush1.bf16.msra.mxu0 0
        %1584 = vmatprep.subr.bf16.mxu0 0
        %1585 = vmatpush1.bf16.msra.mxu0 0
        %1586 = vmatprep.subr.bf16.mxu0 0
        %1587 = vmatpush1.bf16.msra.mxu0 0
        %1588 = vmatprep.mubr.bf16.mxu0 0
        %1589 = vmatmul.mubr.bf16.gmra.mrb[0].mxu0 %v1554
        %v1590 = vpop.f32.mrb[0].mxu0
        %v1591 = vadd.f32 0.0, %v1590
        %v1592 = vpop.f32.mrb[0].mxu0
        %v1593 = vpop.f32.mrb[0].mxu0
        %v1594 = vadd.f32 0.0, %v1593
        %v1595 = vpop.f32.mrb[0].mxu0
        %1596 = vdwg.mxu0
        %v1598 = vsel %vm1148, %v1331, 0
        %1600 = vmatprep.subr.bf16.mxu0 0
        %1601 = vmatpush1.bf16.msra.mxu0 %v767
        %1602 = vmatprep.subr.bf16.mxu0 0
        %1603 = vmatpush1.bf16.msra.mxu0 0
        %1604 = vmatprep.subr.bf16.mxu0 0
        %1605 = vmatpush1.bf16.msra.mxu0 0
        %1606 = vmatprep.subr.bf16.mxu0 0
        %1607 = vmatpush1.bf16.msra.mxu0 0
        %1608 = vmatprep.subr.bf16.mxu0 0
        %1609 = vmatpush1.bf16.msra.mxu0 0
        %1610 = vmatprep.subr.bf16.mxu0 0
        %1611 = vmatpush1.bf16.msra.mxu0 0
        %1612 = vmatprep.subr.bf16.mxu0 0
        %1613 = vmatpush1.bf16.msra.mxu0 0
        %1614 = vmatprep.subr.bf16.mxu0 0
        %1615 = vmatpush1.bf16.msra.mxu0 0
        %1616 = vmatprep.subr.bf16.mxu0 0
        %1617 = vmatpush1.bf16.msra.mxu0 0
        %1618 = vmatprep.subr.bf16.mxu0 0
        %1619 = vmatpush1.bf16.msra.mxu0 0
        %1620 = vmatprep.subr.bf16.mxu0 0
        %1621 = vmatpush1.bf16.msra.mxu0 0
        %1622 = vmatprep.subr.bf16.mxu0 0
        %1623 = vmatpush1.bf16.msra.mxu0 0
        %1624 = vmatprep.subr.bf16.mxu0 0
        %1625 = vmatpush1.bf16.msra.mxu0 0
        %1626 = vmatprep.subr.bf16.mxu0 0
        %1627 = vmatpush1.bf16.msra.mxu0 0
        %1628 = vmatprep.subr.bf16.mxu0 0
        %1629 = vmatpush1.bf16.msra.mxu0 0
        %1630 = vmatprep.subr.bf16.mxu0 0
        %1631 = vmatpush1.bf16.msra.mxu0 0
        %1632 = vmatprep.mubr.bf16.mxu0 0
        %1633 = vmatmul.mubr.bf16.gmra.mrb[0].mxu0 %v1598
        %v1634 = vpop.f32.mrb[0].mxu0
        %v1635 = vadd.f32 0.0, %v1634
        %v1636 = vpop.f32.mrb[0].mxu0
        %v1637 = vpop.f32.mrb[0].mxu0
        %v1638 = vadd.f32 0.0, %v1637
        %v1639 = vpop.f32.mrb[0].mxu0
        %1640 = vdwg.mxu0
        %v1642 = vsel %vm1148, %v1332, 0
        %1644 = vmatprep.subr.bf16.mxu0 0
        %1645 = vmatpush1.bf16.msra.mxu0 %v768
        %1646 = vmatprep.subr.bf16.mxu0 0
        %1647 = vmatpush1.bf16.msra.mxu0 0
        %1648 = vmatprep.subr.bf16.mxu0 0
        %1649 = vmatpush1.bf16.msra.mxu0 0
        %1650 = vmatprep.subr.bf16.mxu0 0
        %1651 = vmatpush1.bf16.msra.mxu0 0
        %1652 = vmatprep.subr.bf16.mxu0 0
        %1653 = vmatpush1.bf16.msra.mxu0 0
        %1654 = vmatprep.subr.bf16.mxu0 0
        %1655 = vmatpush1.bf16.msra.mxu0 0
        %1656 = vmatprep.subr.bf16.mxu0 0
        %1657 = vmatpush1.bf16.msra.mxu0 0
        %1658 = vmatprep.subr.bf16.mxu0 0
        %1659 = vmatpush1.bf16.msra.mxu0 0
        %1660 = vmatprep.subr.bf16.mxu0 0
        %1661 = vmatpush1.bf16.msra.mxu0 0
        %1662 = vmatprep.subr.bf16.mxu0 0
        %1663 = vmatpush1.bf16.msra.mxu0 0
        %1664 = vmatprep.subr.bf16.mxu0 0
        %1665 = vmatpush1.bf16.msra.mxu0 0
        %1666 = vmatprep.subr.bf16.mxu0 0
        %1667 = vmatpush1.bf16.msra.mxu0 0
        %1668 = vmatprep.subr.bf16.mxu0 0
        %1669 = vmatpush1.bf16.msra.mxu0 0
        %1670 = vmatprep.subr.bf16.mxu0 0
        %1671 = vmatpush1.bf16.msra.mxu0 0
        %1672 = vmatprep.subr.bf16.mxu0 0
        %1673 = vmatpush1.bf16.msra.mxu0 0
        %1674 = vmatprep.subr.bf16.mxu0 0
        %1675 = vmatpush1.bf16.msra.mxu0 0
        %1676 = vmatprep.mubr.bf16.mxu0 0
        %1677 = vmatmul.mubr.bf16.gmra.mrb[0].mxu0 %v1642
        %v1678 = vpop.f32.mrb[0].mxu0
        %v1679 = vadd.f32 0.0, %v1678
        %v1680 = vpop.f32.mrb[0].mxu0
        %v1681 = vpop.f32.mrb[0].mxu0
        %v1682 = vadd.f32 0.0, %v1681
        %v1683 = vpop.f32.mrb[0].mxu0
        %1684 = vdwg.mxu0
        %v1685 = vpack.c.bf16 %v1374, %v1371
        %v1686 = vpack.c.bf16 %v1418, %v1415
        %v1687 = vpack.c.bf16 %v1462, %v1459
        %v1688 = vpack.c.bf16 %v1506, %v1503
        %v1689 = vpack.c.bf16 %v1550, %v1547
        %v1690 = vpack.c.bf16 %v1594, %v1591
        %v1691 = vpack.c.bf16 %v1638, %v1635
        %v1692 = vpack.c.bf16 %v1682, %v1679
        %s1693 = scalar_lea.vmem [#allocation7], 16
        %v1694 = vld [vmem:[%s1693] sm:$0xff]
        %v1695 = vld [vmem:[%s1693 + $0x8] sm:$0xff]
        %1697 = vrot.lane.b32.xlu0 %v745, 96
        %v1698 = vpop.permute.xlu0 %1697
        %1700 = vrot.lane.b32.xlu0 %v753, 96
        %v1701 = vpop.permute.xlu0 %1700
        %v1703 = vsel %vm771, %v1698, 0
        %v1706 = vsel %vm771, %v1701, 0
        %1708 = vmatprep.subr.bf16.mxu0 0
        %1709 = vmatpush1.bf16.xpose.msra.mxu0 %v1706
        %1710 = vmatprep.subr.bf16.mxu0 0
        %1711 = vmatpush1.bf16.xpose.msra.mxu0 0
        %1712 = vmatprep.subr.bf16.mxu0 0
        %1713 = vmatpush1.bf16.xpose.msra.mxu0 0
        %1714 = vmatprep.subr.bf16.mxu0 0
        %1715 = vmatpush1.bf16.xpose.msra.mxu0 0
        %1716 = vmatprep.subr.bf16.mxu0 0
        %1717 = vmatpush1.bf16.xpose.msra.mxu0 0
        %1718 = vmatprep.subr.bf16.mxu0 0
        %1719 = vmatpush1.bf16.xpose.msra.mxu0 0
        %1720 = vmatprep.subr.bf16.mxu0 0
        %1721 = vmatpush1.bf16.xpose.msra.mxu0 0
        %1722 = vmatprep.subr.bf16.mxu0 0
        %1723 = vmatpush1.bf16.xpose.msra.mxu0 0
        %1724 = vmatprep.subr.bf16.mxu0 0
        %1725 = vmatpush1.bf16.xpose.msra.mxu0 0
        %1726 = vmatprep.subr.bf16.mxu0 0
        %1727 = vmatpush1.bf16.xpose.msra.mxu0 0
        %1728 = vmatprep.subr.bf16.mxu0 0
        %1729 = vmatpush1.bf16.xpose.msra.mxu0 0
        %1730 = vmatprep.subr.bf16.mxu0 0
        %1731 = vmatpush1.bf16.xpose.msra.mxu0 0
        %1732 = vmatprep.subr.bf16.mxu0 0
        %1733 = vmatpush1.bf16.xpose.msra.mxu0 0
        %1734 = vmatprep.subr.bf16.mxu0 0
        %1735 = vmatpush1.bf16.xpose.msra.mxu0 0
        %1736 = vmatprep.subr.bf16.mxu0 0
        %1737 = vmatpush1.bf16.xpose.msra.mxu0 0
        %1738 = vmatprep.subr.bf16.mxu0 0
        %1739 = vmatpush1.bf16.xpose.msra.mxu0 0
        %1740 = vmatprep.mubr.bf16.mxu0 0
        %1741 = vmatmul.mubr.bf16.gmra.mrb[0].mxu0 %v1703
        %v1742 = vpop.f32.mrb[0].mxu0
        %v1743 = vadd.f32 %v1694, %v1742
        %v1744 = vpop.f32.mrb[0].mxu0
        %v1745 = vpop.f32.mrb[0].mxu0
        %v1746 = vadd.f32 %v1695, %v1745
        %v1747 = vpop.f32.mrb[0].mxu0
        %1748 = vdwg.mxu0
        %1750 = vrot.lane.b32.xlu0 %v746, 96
        %v1751 = vpop.permute.xlu0 %1750
        %1753 = vrot.lane.b32.xlu0 %v754, 96
        %v1754 = vpop.permute.xlu0 %1753
        %v1756 = vsel %vm771, %v1751, 0
        %v1759 = vsel %vm771, %v1754, 0
        %1761 = vmatprep.subr.bf16.mxu0 0
        %1762 = vmatpush1.bf16.xpose.msra.mxu0 %v1759
        %1763 = vmatprep.subr.bf16.mxu0 0
        %1764 = vmatpush1.bf16.xpose.msra.mxu0 0
        %1765 = vmatprep.subr.bf16.mxu0 0
        %1766 = vmatpush1.bf16.xpose.msra.mxu0 0
        %1767 = vmatprep.subr.bf16.mxu0 0
        %1768 = vmatpush1.bf16.xpose.msra.mxu0 0
        %1769 = vmatprep.subr.bf16.mxu0 0
        %1770 = vmatpush1.bf16.xpose.msra.mxu0 0
        %1771 = vmatprep.subr.bf16.mxu0 0
        %1772 = vmatpush1.bf16.xpose.msra.mxu0 0
        %1773 = vmatprep.subr.bf16.mxu0 0
        %1774 = vmatpush1.bf16.xpose.msra.mxu0 0
        %1775 = vmatprep.subr.bf16.mxu0 0
        %1776 = vmatpush1.bf16.xpose.msra.mxu0 0
        %1777 = vmatprep.subr.bf16.mxu0 0
        %1778 = vmatpush1.bf16.xpose.msra.mxu0 0
        %1779 = vmatprep.subr.bf16.mxu0 0
        %1780 = vmatpush1.bf16.xpose.msra.mxu0 0
        %1781 = vmatprep.subr.bf16.mxu0 0
        %1782 = vmatpush1.bf16.xpose.msra.mxu0 0
        %1783 = vmatprep.subr.bf16.mxu0 0
        %1784 = vmatpush1.bf16.xpose.msra.mxu0 0
        %1785 = vmatprep.subr.bf16.mxu0 0
        %1786 = vmatpush1.bf16.xpose.msra.mxu0 0
        %1787 = vmatprep.subr.bf16.mxu0 0
        %1788 = vmatpush1.bf16.xpose.msra.mxu0 0
        %1789 = vmatprep.subr.bf16.mxu0 0
        %1790 = vmatpush1.bf16.xpose.msra.mxu0 0
        %1791 = vmatprep.subr.bf16.mxu0 0
        %1792 = vmatpush1.bf16.xpose.msra.mxu0 0
        %1793 = vmatprep.mubr.bf16.mxu0 0
        %1794 = vmatmul.mubr.bf16.gmra.mrb[0].mxu0 %v1756
        %v1795 = vpop.f32.mrb[0].mxu0
        %v1796 = vadd.f32 %v1694, %v1795
        %v1797 = vpop.f32.mrb[0].mxu0
        %v1798 = vpop.f32.mrb[0].mxu0
        %v1799 = vadd.f32 %v1695, %v1798
        %v1800 = vpop.f32.mrb[0].mxu0
        %1801 = vdwg.mxu0
        %1803 = vrot.lane.b32.xlu0 %v747, 96
        %v1804 = vpop.permute.xlu0 %1803
        %1806 = vrot.lane.b32.xlu0 %v755, 96
        %v1807 = vpop.permute.xlu0 %1806
        %v1809 = vsel %vm771, %v1804, 0
        %v1812 = vsel %vm771, %v1807, 0
        %1814 = vmatprep.subr.bf16.mxu0 0
        %1815 = vmatpush1.bf16.xpose.msra.mxu0 %v1812
        %1816 = vmatprep.subr.bf16.mxu0 0
        %1817 = vmatpush1.bf16.xpose.msra.mxu0 0
        %1818 = vmatprep.subr.bf16.mxu0 0
        %1819 = vmatpush1.bf16.xpose.msra.mxu0 0
        %1820 = vmatprep.subr.bf16.mxu0 0
        %1821 = vmatpush1.bf16.xpose.msra.mxu0 0
        %1822 = vmatprep.subr.bf16.mxu0 0
        %1823 = vmatpush1.bf16.xpose.msra.mxu0 0
        %1824 = vmatprep.subr.bf16.mxu0 0
        %1825 = vmatpush1.bf16.xpose.msra.mxu0 0
        %1826 = vmatprep.subr.bf16.mxu0 0
        %1827 = vmatpush1.bf16.xpose.msra.mxu0 0
        %1828 = vmatprep.subr.bf16.mxu0 0
        %1829 = vmatpush1.bf16.xpose.msra.mxu0 0
        %1830 = vmatprep.subr.bf16.mxu0 0
        %1831 = vmatpush1.bf16.xpose.msra.mxu0 0
        %1832 = vmatprep.subr.bf16.mxu0 0
        %1833 = vmatpush1.bf16.xpose.msra.mxu0 0
        %1834 = vmatprep.subr.bf16.mxu0 0
        %1835 = vmatpush1.bf16.xpose.msra.mxu0 0
        %1836 = vmatprep.subr.bf16.mxu0 0
        %1837 = vmatpush1.bf16.xpose.msra.mxu0 0
        %1838 = vmatprep.subr.bf16.mxu0 0
        %1839 = vmatpush1.bf16.xpose.msra.mxu0 0
        %1840 = vmatprep.subr.bf16.mxu0 0
        %1841 = vmatpush1.bf16.xpose.msra.mxu0 0
        %1842 = vmatprep.subr.bf16.mxu0 0
        %1843 = vmatpush1.bf16.xpose.msra.mxu0 0
        %1844 = vmatprep.subr.bf16.mxu0 0
        %1845 = vmatpush1.bf16.xpose.msra.mxu0 0
        %1846 = vmatprep.mubr.bf16.mxu0 0
        %1847 = vmatmul.mubr.bf16.gmra.mrb[0].mxu0 %v1809
        %v1848 = vpop.f32.mrb[0].mxu0
        %v1849 = vadd.f32 %v1694, %v1848
        %v1850 = vpop.f32.mrb[0].mxu0
        %v1851 = vpop.f32.mrb[0].mxu0
        %v1852 = vadd.f32 %v1695, %v1851
        %v1853 = vpop.f32.mrb[0].mxu0
        %1854 = vdwg.mxu0
        %1856 = vrot.lane.b32.xlu0 %v748, 96
        %v1857 = vpop.permute.xlu0 %1856
        %1859 = vrot.lane.b32.xlu0 %v756, 96
        %v1860 = vpop.permute.xlu0 %1859
        %v1862 = vsel %vm771, %v1857, 0
        %v1865 = vsel %vm771, %v1860, 0
        %1867 = vmatprep.subr.bf16.mxu0 0
        %1868 = vmatpush1.bf16.xpose.msra.mxu0 %v1865
        %1869 = vmatprep.subr.bf16.mxu0 0
        %1870 = vmatpush1.bf16.xpose.msra.mxu0 0
        %1871 = vmatprep.subr.bf16.mxu0 0
        %1872 = vmatpush1.bf16.xpose.msra.mxu0 0
        %1873 = vmatprep.subr.bf16.mxu0 0
        %1874 = vmatpush1.bf16.xpose.msra.mxu0 0
        %1875 = vmatprep.subr.bf16.mxu0 0
        %1876 = vmatpush1.bf16.xpose.msra.mxu0 0
        %1877 = vmatprep.subr.bf16.mxu0 0
        %1878 = vmatpush1.bf16.xpose.msra.mxu0 0
        %1879 = vmatprep.subr.bf16.mxu0 0
        %1880 = vmatpush1.bf16.xpose.msra.mxu0 0
        %1881 = vmatprep.subr.bf16.mxu0 0
        %1882 = vmatpush1.bf16.xpose.msra.mxu0 0
        %1883 = vmatprep.subr.bf16.mxu0 0
        %1884 = vmatpush1.bf16.xpose.msra.mxu0 0
        %1885 = vmatprep.subr.bf16.mxu0 0
        %1886 = vmatpush1.bf16.xpose.msra.mxu0 0
        %1887 = vmatprep.subr.bf16.mxu0 0
        %1888 = vmatpush1.bf16.xpose.msra.mxu0 0
        %1889 = vmatprep.subr.bf16.mxu0 0
        %1890 = vmatpush1.bf16.xpose.msra.mxu0 0
        %1891 = vmatprep.subr.bf16.mxu0 0
        %1892 = vmatpush1.bf16.xpose.msra.mxu0 0
        %1893 = vmatprep.subr.bf16.mxu0 0
        %1894 = vmatpush1.bf16.xpose.msra.mxu0 0
        %1895 = vmatprep.subr.bf16.mxu0 0
        %1896 = vmatpush1.bf16.xpose.msra.mxu0 0
        %1897 = vmatprep.subr.bf16.mxu0 0
        %1898 = vmatpush1.bf16.xpose.msra.mxu0 0
        %1899 = vmatprep.mubr.bf16.mxu0 0
        %1900 = vmatmul.mubr.bf16.gmra.mrb[0].mxu0 %v1862
        %v1901 = vpop.f32.mrb[0].mxu0
        %v1902 = vadd.f32 %v1694, %v1901
        %v1903 = vpop.f32.mrb[0].mxu0
        %v1904 = vpop.f32.mrb[0].mxu0
        %v1905 = vadd.f32 %v1695, %v1904
        %v1906 = vpop.f32.mrb[0].mxu0
        %1907 = vdwg.mxu0
        %1909 = vrot.lane.b32.xlu0 %v749, 96
        %v1910 = vpop.permute.xlu0 %1909
        %1912 = vrot.lane.b32.xlu0 %v757, 96
        %v1913 = vpop.permute.xlu0 %1912
        %v1915 = vsel %vm771, %v1910, 0
        %v1918 = vsel %vm771, %v1913, 0
        %1920 = vmatprep.subr.bf16.mxu0 0
        %1921 = vmatpush1.bf16.xpose.msra.mxu0 %v1918
        %1922 = vmatprep.subr.bf16.mxu0 0
        %1923 = vmatpush1.bf16.xpose.msra.mxu0 0
        %1924 = vmatprep.subr.bf16.mxu0 0
        %1925 = vmatpush1.bf16.xpose.msra.mxu0 0
        %1926 = vmatprep.subr.bf16.mxu0 0
        %1927 = vmatpush1.bf16.xpose.msra.mxu0 0
        %1928 = vmatprep.subr.bf16.mxu0 0
        %1929 = vmatpush1.bf16.xpose.msra.mxu0 0
        %1930 = vmatprep.subr.bf16.mxu0 0
        %1931 = vmatpush1.bf16.xpose.msra.mxu0 0
        %1932 = vmatprep.subr.bf16.mxu0 0
        %1933 = vmatpush1.bf16.xpose.msra.mxu0 0
        %1934 = vmatprep.subr.bf16.mxu0 0
        %1935 = vmatpush1.bf16.xpose.msra.mxu0 0
        %1936 = vmatprep.subr.bf16.mxu0 0
        %1937 = vmatpush1.bf16.xpose.msra.mxu0 0
        %1938 = vmatprep.subr.bf16.mxu0 0
        %1939 = vmatpush1.bf16.xpose.msra.mxu0 0
        %1940 = vmatprep.subr.bf16.mxu0 0
        %1941 = vmatpush1.bf16.xpose.msra.mxu0 0
        %1942 = vmatprep.subr.bf16.mxu0 0
        %1943 = vmatpush1.bf16.xpose.msra.mxu0 0
        %1944 = vmatprep.subr.bf16.mxu0 0
        %1945 = vmatpush1.bf16.xpose.msra.mxu0 0
        %1946 = vmatprep.subr.bf16.mxu0 0
        %1947 = vmatpush1.bf16.xpose.msra.mxu0 0
        %1948 = vmatprep.subr.bf16.mxu0 0
        %1949 = vmatpush1.bf16.xpose.msra.mxu0 0
        %1950 = vmatprep.subr.bf16.mxu0 0
        %1951 = vmatpush1.bf16.xpose.msra.mxu0 0
        %1952 = vmatprep.mubr.bf16.mxu0 0
        %1953 = vmatmul.mubr.bf16.gmra.mrb[0].mxu0 %v1915
        %v1954 = vpop.f32.mrb[0].mxu0
        %v1955 = vadd.f32 %v1694, %v1954
        %v1956 = vpop.f32.mrb[0].mxu0
        %v1957 = vpop.f32.mrb[0].mxu0
        %v1958 = vadd.f32 %v1695, %v1957
        %v1959 = vpop.f32.mrb[0].mxu0
        %1960 = vdwg.mxu0
        %1962 = vrot.lane.b32.xlu0 %v750, 96
        %v1963 = vpop.permute.xlu0 %1962
        %1965 = vrot.lane.b32.xlu0 %v758, 96
        %v1966 = vpop.permute.xlu0 %1965
        %v1968 = vsel %vm771, %v1963, 0
        %v1971 = vsel %vm771, %v1966, 0
        %1973 = vmatprep.subr.bf16.mxu0 0
        %1974 = vmatpush1.bf16.xpose.msra.mxu0 %v1971
        %1975 = vmatprep.subr.bf16.mxu0 0
        %1976 = vmatpush1.bf16.xpose.msra.mxu0 0
        %1977 = vmatprep.subr.bf16.mxu0 0
        %1978 = vmatpush1.bf16.xpose.msra.mxu0 0
        %1979 = vmatprep.subr.bf16.mxu0 0
        %1980 = vmatpush1.bf16.xpose.msra.mxu0 0
        %1981 = vmatprep.subr.bf16.mxu0 0
        %1982 = vmatpush1.bf16.xpose.msra.mxu0 0
        %1983 = vmatprep.subr.bf16.mxu0 0
        %1984 = vmatpush1.bf16.xpose.msra.mxu0 0
        %1985 = vmatprep.subr.bf16.mxu0 0
        %1986 = vmatpush1.bf16.xpose.msra.mxu0 0
        %1987 = vmatprep.subr.bf16.mxu0 0
        %1988 = vmatpush1.bf16.xpose.msra.mxu0 0
        %1989 = vmatprep.subr.bf16.mxu0 0
        %1990 = vmatpush1.bf16.xpose.msra.mxu0 0
        %1991 = vmatprep.subr.bf16.mxu0 0
        %1992 = vmatpush1.bf16.xpose.msra.mxu0 0
        %1993 = vmatprep.subr.bf16.mxu0 0
        %1994 = vmatpush1.bf16.xpose.msra.mxu0 0
        %1995 = vmatprep.subr.bf16.mxu0 0
        %1996 = vmatpush1.bf16.xpose.msra.mxu0 0
        %1997 = vmatprep.subr.bf16.mxu0 0
        %1998 = vmatpush1.bf16.xpose.msra.mxu0 0
        %1999 = vmatprep.subr.bf16.mxu0 0
        %2000 = vmatpush1.bf16.xpose.msra.mxu0 0
        %2001 = vmatprep.subr.bf16.mxu0 0
        %2002 = vmatpush1.bf16.xpose.msra.mxu0 0
        %2003 = vmatprep.subr.bf16.mxu0 0
        %2004 = vmatpush1.bf16.xpose.msra.mxu0 0
        %2005 = vmatprep.mubr.bf16.mxu0 0
        %2006 = vmatmul.mubr.bf16.gmra.mrb[0].mxu0 %v1968
        %v2007 = vpop.f32.mrb[0].mxu0
        %v2008 = vadd.f32 %v1694, %v2007
        %v2009 = vpop.f32.mrb[0].mxu0
        %v2010 = vpop.f32.mrb[0].mxu0
        %v2011 = vadd.f32 %v1695, %v2010
        %v2012 = vpop.f32.mrb[0].mxu0
        %2013 = vdwg.mxu0
        %2015 = vrot.lane.b32.xlu0 %v751, 96
        %v2016 = vpop.permute.xlu0 %2015
        %2018 = vrot.lane.b32.xlu0 %v759, 96
        %v2019 = vpop.permute.xlu0 %2018
        %v2021 = vsel %vm771, %v2016, 0
        %v2024 = vsel %vm771, %v2019, 0
        %2026 = vmatprep.subr.bf16.mxu0 0
        %2027 = vmatpush1.bf16.xpose.msra.mxu0 %v2024
        %2028 = vmatprep.subr.bf16.mxu0 0
        %2029 = vmatpush1.bf16.xpose.msra.mxu0 0
        %2030 = vmatprep.subr.bf16.mxu0 0
        %2031 = vmatpush1.bf16.xpose.msra.mxu0 0
        %2032 = vmatprep.subr.bf16.mxu0 0
        %2033 = vmatpush1.bf16.xpose.msra.mxu0 0
        %2034 = vmatprep.subr.bf16.mxu0 0
        %2035 = vmatpush1.bf16.xpose.msra.mxu0 0
        %2036 = vmatprep.subr.bf16.mxu0 0
        %2037 = vmatpush1.bf16.xpose.msra.mxu0 0
        %2038 = vmatprep.subr.bf16.mxu0 0
        %2039 = vmatpush1.bf16.xpose.msra.mxu0 0
        %2040 = vmatprep.subr.bf16.mxu0 0
        %2041 = vmatpush1.bf16.xpose.msra.mxu0 0
        %2042 = vmatprep.subr.bf16.mxu0 0
        %2043 = vmatpush1.bf16.xpose.msra.mxu0 0
        %2044 = vmatprep.subr.bf16.mxu0 0
        %2045 = vmatpush1.bf16.xpose.msra.mxu0 0
        %2046 = vmatprep.subr.bf16.mxu0 0
        %2047 = vmatpush1.bf16.xpose.msra.mxu0 0
        %2048 = vmatprep.subr.bf16.mxu0 0
        %2049 = vmatpush1.bf16.xpose.msra.mxu0 0
        %2050 = vmatprep.subr.bf16.mxu0 0
        %2051 = vmatpush1.bf16.xpose.msra.mxu0 0
        %2052 = vmatprep.subr.bf16.mxu0 0
        %2053 = vmatpush1.bf16.xpose.msra.mxu0 0
        %2054 = vmatprep.subr.bf16.mxu0 0
        %2055 = vmatpush1.bf16.xpose.msra.mxu0 0
        %2056 = vmatprep.subr.bf16.mxu0 0
        %2057 = vmatpush1.bf16.xpose.msra.mxu0 0
        %2058 = vmatprep.mubr.bf16.mxu0 0
        %2059 = vmatmul.mubr.bf16.gmra.mrb[0].mxu0 %v2021
        %v2060 = vpop.f32.mrb[0].mxu0
        %v2061 = vadd.f32 %v1694, %v2060
        %v2062 = vpop.f32.mrb[0].mxu0
        %v2063 = vpop.f32.mrb[0].mxu0
        %v2064 = vadd.f32 %v1695, %v2063
        %v2065 = vpop.f32.mrb[0].mxu0
        %2066 = vdwg.mxu0
        %2068 = vrot.lane.b32.xlu0 %v752, 96
        %v2069 = vpop.permute.xlu0 %2068
        %2071 = vrot.lane.b32.xlu0 %v760, 96
        %v2072 = vpop.permute.xlu0 %2071
        %v2074 = vsel %vm771, %v2069, 0
        %v2077 = vsel %vm771, %v2072, 0
        %2079 = vmatprep.subr.bf16.mxu0 0
        %2080 = vmatpush1.bf16.xpose.msra.mxu0 %v2077
        %2081 = vmatprep.subr.bf16.mxu0 0
        %2082 = vmatpush1.bf16.xpose.msra.mxu0 0
        %2083 = vmatprep.subr.bf16.mxu0 0
        %2084 = vmatpush1.bf16.xpose.msra.mxu0 0
        %2085 = vmatprep.subr.bf16.mxu0 0
        %2086 = vmatpush1.bf16.xpose.msra.mxu0 0
        %2087 = vmatprep.subr.bf16.mxu0 0
        %2088 = vmatpush1.bf16.xpose.msra.mxu0 0
        %2089 = vmatprep.subr.bf16.mxu0 0
        %2090 = vmatpush1.bf16.xpose.msra.mxu0 0
        %2091 = vmatprep.subr.bf16.mxu0 0
        %2092 = vmatpush1.bf16.xpose.msra.mxu0 0
        %2093 = vmatprep.subr.bf16.mxu0 0
        %2094 = vmatpush1.bf16.xpose.msra.mxu0 0
        %2095 = vmatprep.subr.bf16.mxu0 0
        %2096 = vmatpush1.bf16.xpose.msra.mxu0 0
        %2097 = vmatprep.subr.bf16.mxu0 0
        %2098 = vmatpush1.bf16.xpose.msra.mxu0 0
        %2099 = vmatprep.subr.bf16.mxu0 0
        %2100 = vmatpush1.bf16.xpose.msra.mxu0 0
        %2101 = vmatprep.subr.bf16.mxu0 0
        %2102 = vmatpush1.bf16.xpose.msra.mxu0 0
        %2103 = vmatprep.subr.bf16.mxu0 0
        %2104 = vmatpush1.bf16.xpose.msra.mxu0 0
        %2105 = vmatprep.subr.bf16.mxu0 0
        %2106 = vmatpush1.bf16.xpose.msra.mxu0 0
        %2107 = vmatprep.subr.bf16.mxu0 0
        %2108 = vmatpush1.bf16.xpose.msra.mxu0 0
        %2109 = vmatprep.subr.bf16.mxu0 0
        %2110 = vmatpush1.bf16.xpose.msra.mxu0 0
        %2111 = vmatprep.mubr.bf16.mxu0 0
        %2112 = vmatmul.mubr.bf16.gmra.mrb[0].mxu0 %v2074
        %v2113 = vpop.f32.mrb[0].mxu0
        %v2114 = vadd.f32 %v1694, %v2113
        %v2115 = vpop.f32.mrb[0].mxu0
        %v2116 = vpop.f32.mrb[0].mxu0
        %v2117 = vadd.f32 %v1695, %v2116
        %v2118 = vpop.f32.mrb[0].mxu0
        %2119 = vdwg.mxu0
        %v2120 = vsel %vm1148, %v1743, -inf
        %2121 = vmax.xlane.f32.xlu0 %v2120
        %v2122 = vpop.xlane.xlu0 %2121
        %v2123 = vsel %vm1148, %v1746, -inf
        %2124 = vmax.xlane.f32.xlu0 %v2123
        %v2125 = vpop.xlane.xlu0 %2124
        %v2126 = vsel %vm1148, %v1796, -inf
        %2127 = vmax.xlane.f32.xlu0 %v2126
        %v2128 = vpop.xlane.xlu0 %2127
        %v2129 = vsel %vm1148, %v1799, -inf
        %2130 = vmax.xlane.f32.xlu0 %v2129
        %v2131 = vpop.xlane.xlu0 %2130
        %v2132 = vsel %vm1148, %v1849, -inf
        %2133 = vmax.xlane.f32.xlu0 %v2132
        %v2134 = vpop.xlane.xlu0 %2133
        %v2135 = vsel %vm1148, %v1852, -inf
        %2136 = vmax.xlane.f32.xlu0 %v2135
        %v2137 = vpop.xlane.xlu0 %2136
        %v2138 = vsel %vm1148, %v1902, -inf
        %2139 = vmax.xlane.f32.xlu0 %v2138
        %v2140 = vpop.xlane.xlu0 %2139
        %v2141 = vsel %vm1148, %v1905, -inf
        %2142 = vmax.xlane.f32.xlu0 %v2141
        %v2143 = vpop.xlane.xlu0 %2142
        %v2144 = vsel %vm1148, %v1955, -inf
        %2145 = vmax.xlane.f32.xlu0 %v2144
        %v2146 = vpop.xlane.xlu0 %2145
        %v2147 = vsel %vm1148, %v1958, -inf
        %2148 = vmax.xlane.f32.xlu0 %v2147
        %v2149 = vpop.xlane.xlu0 %2148
        %v2150 = vsel %vm1148, %v2008, -inf
        %2151 = vmax.xlane.f32.xlu0 %v2150
        %v2152 = vpop.xlane.xlu0 %2151
        %v2153 = vsel %vm1148, %v2011, -inf
        %2154 = vmax.xlane.f32.xlu0 %v2153
        %v2155 = vpop.xlane.xlu0 %2154
        %v2156 = vsel %vm1148, %v2061, -inf
        %2157 = vmax.xlane.f32.xlu0 %v2156
        %v2158 = vpop.xlane.xlu0 %2157
        %v2159 = vsel %vm1148, %v2064, -inf
        %2160 = vmax.xlane.f32.xlu0 %v2159
        %v2161 = vpop.xlane.xlu0 %2160
        %v2162 = vsel %vm1148, %v2114, -inf
        %2163 = vmax.xlane.f32.xlu0 %v2162
        %v2164 = vpop.xlane.xlu0 %2163
        %v2165 = vsel %vm1148, %v2117, -inf
        %2166 = vmax.xlane.f32.xlu0 %v2165
        %v2167 = vpop.xlane.xlu0 %2166
        %v2168 = vsub.f32 %v1743, %v2122
        %v2169 = vsub.f32 %v1746, %v2125
        %v2170 = vsub.f32 %v1796, %v2128
        %v2171 = vsub.f32 %v1799, %v2131
        %v2172 = vsub.f32 %v1849, %v2134
        %v2173 = vsub.f32 %v1852, %v2137
        %v2174 = vsub.f32 %v1902, %v2140
        %v2175 = vsub.f32 %v1905, %v2143
        %v2176 = vsub.f32 %v1955, %v2146
        %v2177 = vsub.f32 %v1958, %v2149
        %v2178 = vsub.f32 %v2008, %v2152
        %v2179 = vsub.f32 %v2011, %v2155
        %v2180 = vsub.f32 %v2061, %v2158
        %v2181 = vsub.f32 %v2064, %v2161
        %v2182 = vsub.f32 %v2114, %v2164
        %v2183 = vsub.f32 %v2117, %v2167
        %v2184 = vmul.f32 %v2168, 1.442695
        %v2185 = vpow.pop %v2184
        %v2186 = vmul.f32 %v2169, 1.442695
        %v2187 = vpow.pop %v2186
        %v2188 = vmul.f32 %v2170, 1.442695
        %v2189 = vpow.pop %v2188
        %v2190 = vmul.f32 %v2171, 1.442695
        %v2191 = vpow.pop %v2190
        %v2192 = vmul.f32 %v2172, 1.442695
        %v2193 = vpow.pop %v2192
        %v2194 = vmul.f32 %v2173, 1.442695
        %v2195 = vpow.pop %v2194
        %v2196 = vmul.f32 %v2174, 1.442695
        %v2197 = vpow.pop %v2196
        %v2198 = vmul.f32 %v2175, 1.442695
        %v2199 = vpow.pop %v2198
        %v2200 = vmul.f32 %v2176, 1.442695
        %v2201 = vpow.pop %v2200
        %v2202 = vmul.f32 %v2177, 1.442695
        %v2203 = vpow.pop %v2202
        %v2204 = vmul.f32 %v2178, 1.442695
        %v2205 = vpow.pop %v2204
        %v2206 = vmul.f32 %v2179, 1.442695
        %v2207 = vpow.pop %v2206
        %v2208 = vmul.f32 %v2180, 1.442695
        %v2209 = vpow.pop %v2208
        %v2210 = vmul.f32 %v2181, 1.442695
        %v2211 = vpow.pop %v2210
        %v2212 = vmul.f32 %v2182, 1.442695
        %v2213 = vpow.pop %v2212
        %v2214 = vmul.f32 %v2183, 1.442695
        %v2215 = vpow.pop %v2214
        %v2216 = vsel %vm1148, %v2185, 0.0
        %2217 = vadd.xlane.f32.xlu0 %v2216
        %v2218 = vpop.xlane.xlu0 %2217
        %v2219 = vsel %vm1148, %v2187, 0.0
        %2220 = vadd.xlane.f32.xlu0 %v2219
        %v2221 = vpop.xlane.xlu0 %2220
        %v2222 = vsel %vm1148, %v2189, 0.0
        %2223 = vadd.xlane.f32.xlu0 %v2222
        %v2224 = vpop.xlane.xlu0 %2223
        %v2225 = vsel %vm1148, %v2191, 0.0
        %2226 = vadd.xlane.f32.xlu0 %v2225
        %v2227 = vpop.xlane.xlu0 %2226
        %v2228 = vsel %vm1148, %v2193, 0.0
        %2229 = vadd.xlane.f32.xlu0 %v2228
        %v2230 = vpop.xlane.xlu0 %2229
        %v2231 = vsel %vm1148, %v2195, 0.0
        %2232 = vadd.xlane.f32.xlu0 %v2231
        %v2233 = vpop.xlane.xlu0 %2232
        %v2234 = vsel %vm1148, %v2197, 0.0
        %2235 = vadd.xlane.f32.xlu0 %v2234
        %v2236 = vpop.xlane.xlu0 %2235
        %v2237 = vsel %vm1148, %v2199, 0.0
        %2238 = vadd.xlane.f32.xlu0 %v2237
        %v2239 = vpop.xlane.xlu0 %2238
        %v2240 = vsel %vm1148, %v2201, 0.0
        %2241 = vadd.xlane.f32.xlu0 %v2240
        %v2242 = vpop.xlane.xlu0 %2241
        %v2243 = vsel %vm1148, %v2203, 0.0
        %2244 = vadd.xlane.f32.xlu0 %v2243
        %v2245 = vpop.xlane.xlu0 %2244
        %v2246 = vsel %vm1148, %v2205, 0.0
        %2247 = vadd.xlane.f32.xlu0 %v2246
        %v2248 = vpop.xlane.xlu0 %2247
        %v2249 = vsel %vm1148, %v2207, 0.0
        %2250 = vadd.xlane.f32.xlu0 %v2249
        %v2251 = vpop.xlane.xlu0 %2250
        %v2252 = vsel %vm1148, %v2209, 0.0
        %2253 = vadd.xlane.f32.xlu0 %v2252
        %v2254 = vpop.xlane.xlu0 %2253
        %v2255 = vsel %vm1148, %v2211, 0.0
        %2256 = vadd.xlane.f32.xlu0 %v2255
        %v2257 = vpop.xlane.xlu0 %2256
        %v2258 = vsel %vm1148, %v2213, 0.0
        %2259 = vadd.xlane.f32.xlu0 %v2258
        %v2260 = vpop.xlane.xlu0 %2259
        %v2261 = vsel %vm1148, %v2215, 0.0
        %2262 = vadd.xlane.f32.xlu0 %v2261
        %v2263 = vpop.xlane.xlu0 %2262
        %v2264 = vrcp.pop %v2218
        %v2265 = vrcp.pop %v2221
        %v2266 = vrcp.pop %v2224
        %v2267 = vrcp.pop %v2227
        %v2268 = vrcp.pop %v2230
        %v2269 = vrcp.pop %v2233
        %v2270 = vrcp.pop %v2236
        %v2271 = vrcp.pop %v2239
        %v2272 = vrcp.pop %v2242
        %v2273 = vrcp.pop %v2245
        %v2274 = vrcp.pop %v2248
        %v2275 = vrcp.pop %v2251
        %v2276 = vrcp.pop %v2254
        %v2277 = vrcp.pop %v2257
        %v2278 = vrcp.pop %v2260
        %v2279 = vrcp.pop %v2263
        %v2280 = vmul.f32 %v2185, %v2264
        %v2281 = vmul.f32 %v2187, %v2265
        %v2282 = vmul.f32 %v2189, %v2266
        %v2283 = vmul.f32 %v2191, %v2267
        %v2284 = vmul.f32 %v2193, %v2268
        %v2285 = vmul.f32 %v2195, %v2269
        %v2286 = vmul.f32 %v2197, %v2270
        %v2287 = vmul.f32 %v2199, %v2271
        %v2288 = vmul.f32 %v2201, %v2272
        %v2289 = vmul.f32 %v2203, %v2273
        %v2290 = vmul.f32 %v2205, %v2274
        %v2291 = vmul.f32 %v2207, %v2275
        %v2292 = vmul.f32 %v2209, %v2276
        %v2293 = vmul.f32 %v2211, %v2277
        %v2294 = vmul.f32 %v2213, %v2278
        %v2295 = vmul.f32 %v2215, %v2279
        %v2296 = vpack.c.bf16 %v2281, %v2280
        %v2297 = vpack.c.bf16 %v2283, %v2282
        %v2298 = vpack.c.bf16 %v2285, %v2284
        %v2299 = vpack.c.bf16 %v2287, %v2286
        %v2300 = vpack.c.bf16 %v2289, %v2288
        %v2301 = vpack.c.bf16 %v2291, %v2290
        %v2302 = vpack.c.bf16 %v2293, %v2292
        %v2303 = vpack.c.bf16 %v2295, %v2294
        %2305 = vrot.lane.b32.xlu0 %v761, 96
        %v2306 = vpop.permute.xlu0 %2305
        %v2309 = vsel %vm1148, %v2296, 0
        %2311 = vmatprep.subr.bf16.mxu0 0
        %2312 = vmatpush1.bf16.msra.mxu0 %v2306
        %2313 = vmatprep.subr.bf16.mxu0 0
        %2314 = vmatpush1.bf16.msra.mxu0 0
        %2315 = vmatprep.subr.bf16.mxu0 0
        %2316 = vmatpush1.bf16.msra.mxu0 0
        %2317 = vmatprep.subr.bf16.mxu0 0
        %2318 = vmatpush1.bf16.msra.mxu0 0
        %2319 = vmatprep.subr.bf16.mxu0 0
        %2320 = vmatpush1.bf16.msra.mxu0 0
        %2321 = vmatprep.subr.bf16.mxu0 0
        %2322 = vmatpush1.bf16.msra.mxu0 0
        %2323 = vmatprep.subr.bf16.mxu0 0
        %2324 = vmatpush1.bf16.msra.mxu0 0
        %2325 = vmatprep.subr.bf16.mxu0 0
        %2326 = vmatpush1.bf16.msra.mxu0 0
        %2327 = vmatprep.subr.bf16.mxu0 0
        %2328 = vmatpush1.bf16.msra.mxu0 0
        %2329 = vmatprep.subr.bf16.mxu0 0
        %2330 = vmatpush1.bf16.msra.mxu0 0
        %2331 = vmatprep.subr.bf16.mxu0 0
        %2332 = vmatpush1.bf16.msra.mxu0 0
        %2333 = vmatprep.subr.bf16.mxu0 0
        %2334 = vmatpush1.bf16.msra.mxu0 0
        %2335 = vmatprep.subr.bf16.mxu0 0
        %2336 = vmatpush1.bf16.msra.mxu0 0
        %2337 = vmatprep.subr.bf16.mxu0 0
        %2338 = vmatpush1.bf16.msra.mxu0 0
        %2339 = vmatprep.subr.bf16.mxu0 0
        %2340 = vmatpush1.bf16.msra.mxu0 0
        %2341 = vmatprep.subr.bf16.mxu0 0
        %2342 = vmatpush1.bf16.msra.mxu0 0
        %2343 = vmatprep.mubr.bf16.mxu0 0
        %2344 = vmatmul.mubr.bf16.gmra.mrb[0].mxu0 %v2309
        %v2345 = vpop.f32.mrb[0].mxu0
        %v2346 = vadd.f32 0.0, %v2345
        %v2347 = vpop.f32.mrb[0].mxu0
        %v2348 = vpop.f32.mrb[0].mxu0
        %v2349 = vadd.f32 0.0, %v2348
        %v2350 = vpop.f32.mrb[0].mxu0
        %2351 = vdwg.mxu0
        %2353 = vrot.lane.b32.xlu0 %v762, 96
        %v2354 = vpop.permute.xlu0 %2353
        %v2357 = vsel %vm1148, %v2297, 0
        %2359 = vmatprep.subr.bf16.mxu0 0
        %2360 = vmatpush1.bf16.msra.mxu0 %v2354
        %2361 = vmatprep.subr.bf16.mxu0 0
        %2362 = vmatpush1.bf16.msra.mxu0 0
        %2363 = vmatprep.subr.bf16.mxu0 0
        %2364 = vmatpush1.bf16.msra.mxu0 0
        %2365 = vmatprep.subr.bf16.mxu0 0
        %2366 = vmatpush1.bf16.msra.mxu0 0
        %2367 = vmatprep.subr.bf16.mxu0 0
        %2368 = vmatpush1.bf16.msra.mxu0 0
        %2369 = vmatprep.subr.bf16.mxu0 0
        %2370 = vmatpush1.bf16.msra.mxu0 0
        %2371 = vmatprep.subr.bf16.mxu0 0
        %2372 = vmatpush1.bf16.msra.mxu0 0
        %2373 = vmatprep.subr.bf16.mxu0 0
        %2374 = vmatpush1.bf16.msra.mxu0 0
        %2375 = vmatprep.subr.bf16.mxu0 0
        %2376 = vmatpush1.bf16.msra.mxu0 0
        %2377 = vmatprep.subr.bf16.mxu0 0
        %2378 = vmatpush1.bf16.msra.mxu0 0
        %2379 = vmatprep.subr.bf16.mxu0 0
        %2380 = vmatpush1.bf16.msra.mxu0 0
        %2381 = vmatprep.subr.bf16.mxu0 0
        %2382 = vmatpush1.bf16.msra.mxu0 0
        %2383 = vmatprep.subr.bf16.mxu0 0
        %2384 = vmatpush1.bf16.msra.mxu0 0
        %2385 = vmatprep.subr.bf16.mxu0 0
        %2386 = vmatpush1.bf16.msra.mxu0 0
        %2387 = vmatprep.subr.bf16.mxu0 0
        %2388 = vmatpush1.bf16.msra.mxu0 0
        %2389 = vmatprep.subr.bf16.mxu0 0
        %2390 = vmatpush1.bf16.msra.mxu0 0
        %2391 = vmatprep.mubr.bf16.mxu0 0
        %2392 = vmatmul.mubr.bf16.gmra.mrb[0].mxu0 %v2357
        %v2393 = vpop.f32.mrb[0].mxu0
        %v2394 = vadd.f32 0.0, %v2393
        %v2395 = vpop.f32.mrb[0].mxu0
        %v2396 = vpop.f32.mrb[0].mxu0
        %v2397 = vadd.f32 0.0, %v2396
        %v2398 = vpop.f32.mrb[0].mxu0
        %2399 = vdwg.mxu0
        %2401 = vrot.lane.b32.xlu0 %v763, 96
        %v2402 = vpop.permute.xlu0 %2401
        %v2405 = vsel %vm1148, %v2298, 0
        %2407 = vmatprep.subr.bf16.mxu0 0
        %2408 = vmatpush1.bf16.msra.mxu0 %v2402
        %2409 = vmatprep.subr.bf16.mxu0 0
        %2410 = vmatpush1.bf16.msra.mxu0 0
        %2411 = vmatprep.subr.bf16.mxu0 0
        %2412 = vmatpush1.bf16.msra.mxu0 0
        %2413 = vmatprep.subr.bf16.mxu0 0
        %2414 = vmatpush1.bf16.msra.mxu0 0
        %2415 = vmatprep.subr.bf16.mxu0 0
        %2416 = vmatpush1.bf16.msra.mxu0 0
        %2417 = vmatprep.subr.bf16.mxu0 0
        %2418 = vmatpush1.bf16.msra.mxu0 0
        %2419 = vmatprep.subr.bf16.mxu0 0
        %2420 = vmatpush1.bf16.msra.mxu0 0
        %2421 = vmatprep.subr.bf16.mxu0 0
        %2422 = vmatpush1.bf16.msra.mxu0 0
        %2423 = vmatprep.subr.bf16.mxu0 0
        %2424 = vmatpush1.bf16.msra.mxu0 0
        %2425 = vmatprep.subr.bf16.mxu0 0
        %2426 = vmatpush1.bf16.msra.mxu0 0
        %2427 = vmatprep.subr.bf16.mxu0 0
        %2428 = vmatpush1.bf16.msra.mxu0 0
        %2429 = vmatprep.subr.bf16.mxu0 0
        %2430 = vmatpush1.bf16.msra.mxu0 0
        %2431 = vmatprep.subr.bf16.mxu0 0
        %2432 = vmatpush1.bf16.msra.mxu0 0
        %2433 = vmatprep.subr.bf16.mxu0 0
        %2434 = vmatpush1.bf16.msra.mxu0 0
        %2435 = vmatprep.subr.bf16.mxu0 0
        %2436 = vmatpush1.bf16.msra.mxu0 0
        %2437 = vmatprep.subr.bf16.mxu0 0
        %2438 = vmatpush1.bf16.msra.mxu0 0
        %2439 = vmatprep.mubr.bf16.mxu0 0
        %2440 = vmatmul.mubr.bf16.gmra.mrb[0].mxu0 %v2405
        %v2441 = vpop.f32.mrb[0].mxu0
        %v2442 = vadd.f32 0.0, %v2441
        %v2443 = vpop.f32.mrb[0].mxu0
        %v2444 = vpop.f32.mrb[0].mxu0
        %v2445 = vadd.f32 0.0, %v2444
        %v2446 = vpop.f32.mrb[0].mxu0
        %2447 = vdwg.mxu0
        %2449 = vrot.lane.b32.xlu0 %v764, 96
        %v2450 = vpop.permute.xlu0 %2449
        %v2453 = vsel %vm1148, %v2299, 0
        %2455 = vmatprep.subr.bf16.mxu0 0
        %2456 = vmatpush1.bf16.msra.mxu0 %v2450
        %2457 = vmatprep.subr.bf16.mxu0 0
        %2458 = vmatpush1.bf16.msra.mxu0 0
        %2459 = vmatprep.subr.bf16.mxu0 0
        %2460 = vmatpush1.bf16.msra.mxu0 0
        %2461 = vmatprep.subr.bf16.mxu0 0
        %2462 = vmatpush1.bf16.msra.mxu0 0
        %2463 = vmatprep.subr.bf16.mxu0 0
        %2464 = vmatpush1.bf16.msra.mxu0 0
        %2465 = vmatprep.subr.bf16.mxu0 0
        %2466 = vmatpush1.bf16.msra.mxu0 0
        %2467 = vmatprep.subr.bf16.mxu0 0
        %2468 = vmatpush1.bf16.msra.mxu0 0
        %2469 = vmatprep.subr.bf16.mxu0 0
        %2470 = vmatpush1.bf16.msra.mxu0 0
        %2471 = vmatprep.subr.bf16.mxu0 0
        %2472 = vmatpush1.bf16.msra.mxu0 0
        %2473 = vmatprep.subr.bf16.mxu0 0
        %2474 = vmatpush1.bf16.msra.mxu0 0
        %2475 = vmatprep.subr.bf16.mxu0 0
        %2476 = vmatpush1.bf16.msra.mxu0 0
        %2477 = vmatprep.subr.bf16.mxu0 0
        %2478 = vmatpush1.bf16.msra.mxu0 0
        %2479 = vmatprep.subr.bf16.mxu0 0
        %2480 = vmatpush1.bf16.msra.mxu0 0
        %2481 = vmatprep.subr.bf16.mxu0 0
        %2482 = vmatpush1.bf16.msra.mxu0 0
        %2483 = vmatprep.subr.bf16.mxu0 0
        %2484 = vmatpush1.bf16.msra.mxu0 0
        %2485 = vmatprep.subr.bf16.mxu0 0
        %2486 = vmatpush1.bf16.msra.mxu0 0
        %2487 = vmatprep.mubr.bf16.mxu0 0
        %2488 = vmatmul.mubr.bf16.gmra.mrb[0].mxu0 %v2453
        %v2489 = vpop.f32.mrb[0].mxu0
        %v2490 = vadd.f32 0.0, %v2489
        %v2491 = vpop.f32.mrb[0].mxu0
        %v2492 = vpop.f32.mrb[0].mxu0
        %v2493 = vadd.f32 0.0, %v2492
        %v2494 = vpop.f32.mrb[0].mxu0
        %2495 = vdwg.mxu0
        %2497 = vrot.lane.b32.xlu0 %v765, 96
        %v2498 = vpop.permute.xlu0 %2497
        %v2501 = vsel %vm1148, %v2300, 0
        %2503 = vmatprep.subr.bf16.mxu0 0
        %2504 = vmatpush1.bf16.msra.mxu0 %v2498
        %2505 = vmatprep.subr.bf16.mxu0 0
        %2506 = vmatpush1.bf16.msra.mxu0 0
        %2507 = vmatprep.subr.bf16.mxu0 0
        %2508 = vmatpush1.bf16.msra.mxu0 0
        %2509 = vmatprep.subr.bf16.mxu0 0
        %2510 = vmatpush1.bf16.msra.mxu0 0
        %2511 = vmatprep.subr.bf16.mxu0 0
        %2512 = vmatpush1.bf16.msra.mxu0 0
        %2513 = vmatprep.subr.bf16.mxu0 0
        %2514 = vmatpush1.bf16.msra.mxu0 0
        %2515 = vmatprep.subr.bf16.mxu0 0
        %2516 = vmatpush1.bf16.msra.mxu0 0
        %2517 = vmatprep.subr.bf16.mxu0 0
        %2518 = vmatpush1.bf16.msra.mxu0 0
        %2519 = vmatprep.subr.bf16.mxu0 0
        %2520 = vmatpush1.bf16.msra.mxu0 0
        %2521 = vmatprep.subr.bf16.mxu0 0
        %2522 = vmatpush1.bf16.msra.mxu0 0
        %2523 = vmatprep.subr.bf16.mxu0 0
        %2524 = vmatpush1.bf16.msra.mxu0 0
        %2525 = vmatprep.subr.bf16.mxu0 0
        %2526 = vmatpush1.bf16.msra.mxu0 0
        %2527 = vmatprep.subr.bf16.mxu0 0
        %2528 = vmatpush1.bf16.msra.mxu0 0
        %2529 = vmatprep.subr.bf16.mxu0 0
        %2530 = vmatpush1.bf16.msra.mxu0 0
        %2531 = vmatprep.subr.bf16.mxu0 0
        %2532 = vmatpush1.bf16.msra.mxu0 0
        %2533 = vmatprep.subr.bf16.mxu0 0
        %2534 = vmatpush1.bf16.msra.mxu0 0
        %2535 = vmatprep.mubr.bf16.mxu0 0
        %2536 = vmatmul.mubr.bf16.gmra.mrb[0].mxu0 %v2501
        %v2537 = vpop.f32.mrb[0].mxu0
        %v2538 = vadd.f32 0.0, %v2537
        %v2539 = vpop.f32.mrb[0].mxu0
        %v2540 = vpop.f32.mrb[0].mxu0
        %v2541 = vadd.f32 0.0, %v2540
        %v2542 = vpop.f32.mrb[0].mxu0
        %2543 = vdwg.mxu0
        %2545 = vrot.lane.b32.xlu0 %v766, 96
        %v2546 = vpop.permute.xlu0 %2545
        %v2549 = vsel %vm1148, %v2301, 0
        %2551 = vmatprep.subr.bf16.mxu0 0
        %2552 = vmatpush1.bf16.msra.mxu0 %v2546
        %2553 = vmatprep.subr.bf16.mxu0 0
        %2554 = vmatpush1.bf16.msra.mxu0 0
        %2555 = vmatprep.subr.bf16.mxu0 0
        %2556 = vmatpush1.bf16.msra.mxu0 0
        %2557 = vmatprep.subr.bf16.mxu0 0
        %2558 = vmatpush1.bf16.msra.mxu0 0
        %2559 = vmatprep.subr.bf16.mxu0 0
        %2560 = vmatpush1.bf16.msra.mxu0 0
        %2561 = vmatprep.subr.bf16.mxu0 0
        %2562 = vmatpush1.bf16.msra.mxu0 0
        %2563 = vmatprep.subr.bf16.mxu0 0
        %2564 = vmatpush1.bf16.msra.mxu0 0
        %2565 = vmatprep.subr.bf16.mxu0 0
        %2566 = vmatpush1.bf16.msra.mxu0 0
        %2567 = vmatprep.subr.bf16.mxu0 0
        %2568 = vmatpush1.bf16.msra.mxu0 0
        %2569 = vmatprep.subr.bf16.mxu0 0
        %2570 = vmatpush1.bf16.msra.mxu0 0
        %2571 = vmatprep.subr.bf16.mxu0 0
        %2572 = vmatpush1.bf16.msra.mxu0 0
        %2573 = vmatprep.subr.bf16.mxu0 0
        %2574 = vmatpush1.bf16.msra.mxu0 0
        %2575 = vmatprep.subr.bf16.mxu0 0
        %2576 = vmatpush1.bf16.msra.mxu0 0
        %2577 = vmatprep.subr.bf16.mxu0 0
        %2578 = vmatpush1.bf16.msra.mxu0 0
        %2579 = vmatprep.subr.bf16.mxu0 0
        %2580 = vmatpush1.bf16.msra.mxu0 0
        %2581 = vmatprep.subr.bf16.mxu0 0
        %2582 = vmatpush1.bf16.msra.mxu0 0
        %2583 = vmatprep.mubr.bf16.mxu0 0
        %2584 = vmatmul.mubr.bf16.gmra.mrb[0].mxu0 %v2549
        %v2585 = vpop.f32.mrb[0].mxu0
        %v2586 = vadd.f32 0.0, %v2585
        %v2587 = vpop.f32.mrb[0].mxu0
        %v2588 = vpop.f32.mrb[0].mxu0
        %v2589 = vadd.f32 0.0, %v2588
        %v2590 = vpop.f32.mrb[0].mxu0
        %2591 = vdwg.mxu0
        %2593 = vrot.lane.b32.xlu0 %v767, 96
        %v2594 = vpop.permute.xlu0 %2593
        %v2597 = vsel %vm1148, %v2302, 0
        %2599 = vmatprep.subr.bf16.mxu0 0
        %2600 = vmatpush1.bf16.msra.mxu0 %v2594
        %2601 = vmatprep.subr.bf16.mxu0 0
        %2602 = vmatpush1.bf16.msra.mxu0 0
        %2603 = vmatprep.subr.bf16.mxu0 0
        %2604 = vmatpush1.bf16.msra.mxu0 0
        %2605 = vmatprep.subr.bf16.mxu0 0
        %2606 = vmatpush1.bf16.msra.mxu0 0
        %2607 = vmatprep.subr.bf16.mxu0 0
        %2608 = vmatpush1.bf16.msra.mxu0 0
        %2609 = vmatprep.subr.bf16.mxu0 0
        %2610 = vmatpush1.bf16.msra.mxu0 0
        %2611 = vmatprep.subr.bf16.mxu0 0
        %2612 = vmatpush1.bf16.msra.mxu0 0
        %2613 = vmatprep.subr.bf16.mxu0 0
        %2614 = vmatpush1.bf16.msra.mxu0 0
        %2615 = vmatprep.subr.bf16.mxu0 0
        %2616 = vmatpush1.bf16.msra.mxu0 0
        %2617 = vmatprep.subr.bf16.mxu0 0
        %2618 = vmatpush1.bf16.msra.mxu0 0
        %2619 = vmatprep.subr.bf16.mxu0 0
        %2620 = vmatpush1.bf16.msra.mxu0 0
        %2621 = vmatprep.subr.bf16.mxu0 0
        %2622 = vmatpush1.bf16.msra.mxu0 0
        %2623 = vmatprep.subr.bf16.mxu0 0
        %2624 = vmatpush1.bf16.msra.mxu0 0
        %2625 = vmatprep.subr.bf16.mxu0 0
        %2626 = vmatpush1.bf16.msra.mxu0 0
        %2627 = vmatprep.subr.bf16.mxu0 0
        %2628 = vmatpush1.bf16.msra.mxu0 0
        %2629 = vmatprep.subr.bf16.mxu0 0
        %2630 = vmatpush1.bf16.msra.mxu0 0
        %2631 = vmatprep.mubr.bf16.mxu0 0
        %2632 = vmatmul.mubr.bf16.gmra.mrb[0].mxu0 %v2597
        %v2633 = vpop.f32.mrb[0].mxu0
        %v2634 = vadd.f32 0.0, %v2633
        %v2635 = vpop.f32.mrb[0].mxu0
        %v2636 = vpop.f32.mrb[0].mxu0
        %v2637 = vadd.f32 0.0, %v2636
        %v2638 = vpop.f32.mrb[0].mxu0
        %2639 = vdwg.mxu0
        %2641 = vrot.lane.b32.xlu0 %v768, 96
        %v2642 = vpop.permute.xlu0 %2641
        %v2645 = vsel %vm1148, %v2303, 0
        %2647 = vmatprep.subr.bf16.mxu0 0
        %2648 = vmatpush1.bf16.msra.mxu0 %v2642
        %2649 = vmatprep.subr.bf16.mxu0 0
        %2650 = vmatpush1.bf16.msra.mxu0 0
        %2651 = vmatprep.subr.bf16.mxu0 0
        %2652 = vmatpush1.bf16.msra.mxu0 0
        %2653 = vmatprep.subr.bf16.mxu0 0
        %2654 = vmatpush1.bf16.msra.mxu0 0
        %2655 = vmatprep.subr.bf16.mxu0 0
        %2656 = vmatpush1.bf16.msra.mxu0 0
        %2657 = vmatprep.subr.bf16.mxu0 0
        %2658 = vmatpush1.bf16.msra.mxu0 0
        %2659 = vmatprep.subr.bf16.mxu0 0
        %2660 = vmatpush1.bf16.msra.mxu0 0
        %2661 = vmatprep.subr.bf16.mxu0 0
        %2662 = vmatpush1.bf16.msra.mxu0 0
        %2663 = vmatprep.subr.bf16.mxu0 0
        %2664 = vmatpush1.bf16.msra.mxu0 0
        %2665 = vmatprep.subr.bf16.mxu0 0
        %2666 = vmatpush1.bf16.msra.mxu0 0
        %2667 = vmatprep.subr.bf16.mxu0 0
        %2668 = vmatpush1.bf16.msra.mxu0 0
        %2669 = vmatprep.subr.bf16.mxu0 0
        %2670 = vmatpush1.bf16.msra.mxu0 0
        %2671 = vmatprep.subr.bf16.mxu0 0
        %2672 = vmatpush1.bf16.msra.mxu0 0
        %2673 = vmatprep.subr.bf16.mxu0 0
        %2674 = vmatpush1.bf16.msra.mxu0 0
        %2675 = vmatprep.subr.bf16.mxu0 0
        %2676 = vmatpush1.bf16.msra.mxu0 0
        %2677 = vmatprep.subr.bf16.mxu0 0
        %2678 = vmatpush1.bf16.msra.mxu0 0
        %2679 = vmatprep.mubr.bf16.mxu0 0
        %2680 = vmatmul.mubr.bf16.gmra.mrb[0].mxu0 %v2645
        %v2681 = vpop.f32.mrb[0].mxu0
        %v2682 = vadd.f32 0.0, %v2681
        %v2683 = vpop.f32.mrb[0].mxu0
        %v2684 = vpop.f32.mrb[0].mxu0
        %v2685 = vadd.f32 0.0, %v2684
        %v2686 = vpop.f32.mrb[0].mxu0
        %2687 = vdwg.mxu0
        %v2688 = vpack.c.bf16 %v2349, %v2346
        %v2689 = vpack.c.bf16 %v2397, %v2394
        %v2690 = vpack.c.bf16 %v2445, %v2442
        %v2691 = vpack.c.bf16 %v2493, %v2490
        %v2692 = vpack.c.bf16 %v2541, %v2538
        %v2693 = vpack.c.bf16 %v2589, %v2586
        %v2694 = vpack.c.bf16 %v2637, %v2634
        %v2695 = vpack.c.bf16 %v2685, %v2682
        %v2700 = vunpack.c.l.b16 %v733
        %v2701 = vunpack.c.l.b16 %v734
        %v2702 = vunpack.c.l.b16 %v735
        %v2703 = vunpack.c.l.b16 %v736
        %v2704 = vpack.c.b16 %v2701, %v2700
        %v2705 = vpack.c.b16 %v2703, %v2702
        %v2709 = vsel %vm771, %v2688, 0
        %v2712 = vsel %vm771, %v2689, 0
        %v2715 = vsel %vm771, %v2690, 0
        %v2718 = vsel %vm771, %v2691, 0
        %v2721 = vsel %vm771, %v2692, 0
        %v2724 = vsel %vm771, %v2693, 0
        %v2727 = vsel %vm771, %v2694, 0
        %v2730 = vsel %vm771, %v2695, 0
        %2732 = vmatprep.subr.bf16.mxu0 0
        %2733 = vmatpush1.bf16.msra.mxu0 %v2704
        %2734 = vmatprep.subr.bf16.mxu0 0
        %2735 = vmatpush1.bf16.msra.mxu0 %v2705
        %2736 = vmatprep.subr.bf16.mxu0 0
        %2737 = vmatpush1.bf16.msra.mxu0 0
        %2738 = vmatprep.subr.bf16.mxu0 0
        %2739 = vmatpush1.bf16.msra.mxu0 0
        %2740 = vmatprep.subr.bf16.mxu0 0
        %2741 = vmatpush1.bf16.msra.mxu0 0
        %2742 = vmatprep.subr.bf16.mxu0 0
        %2743 = vmatpush1.bf16.msra.mxu0 0
        %2744 = vmatprep.subr.bf16.mxu0 0
        %2745 = vmatpush1.bf16.msra.mxu0 0
        %2746 = vmatprep.subr.bf16.mxu0 0
        %2747 = vmatpush1.bf16.msra.mxu0 0
        %2748 = vmatprep.subr.bf16.mxu0 0
        %2749 = vmatpush1.bf16.msra.mxu0 0
        %2750 = vmatprep.subr.bf16.mxu0 0
        %2751 = vmatpush1.bf16.msra.mxu0 0
        %2752 = vmatprep.subr.bf16.mxu0 0
        %2753 = vmatpush1.bf16.msra.mxu0 0
        %2754 = vmatprep.subr.bf16.mxu0 0
        %2755 = vmatpush1.bf16.msra.mxu0 0
        %2756 = vmatprep.subr.bf16.mxu0 0
        %2757 = vmatpush1.bf16.msra.mxu0 0
        %2758 = vmatprep.subr.bf16.mxu0 0
        %2759 = vmatpush1.bf16.msra.mxu0 0
        %2760 = vmatprep.subr.bf16.mxu0 0
        %2761 = vmatpush1.bf16.msra.mxu0 0
        %2762 = vmatprep.subr.bf16.mxu0 0
        %2763 = vmatpush1.bf16.msra.mxu0 0
        %2764 = vmatprep.mubr.bf16.mxu0 0
        %2765 = vmatmul.mubr.bf16.gmra.mrb[0].mxu0 %v2709
        %v2766 = vpop.f32.mrb[0].mxu0
        %v2767 = vadd.f32 0.0, %v2766
        %v2768 = vpop.f32.mrb[0].mxu0
        %v2769 = vpop.f32.mrb[0].mxu0
        %v2770 = vadd.f32 0.0, %v2769
        %v2771 = vpop.f32.mrb[0].mxu0
        %2772 = vmatprep.mubr.bf16.mxu0 0
        %2773 = vmatmul.mubr.bf16.gmra.mrb[0].mxu0 %v2712
        %v2774 = vpop.f32.mrb[0].mxu0
        %v2775 = vadd.f32 0.0, %v2774
        %v2776 = vpop.f32.mrb[0].mxu0
        %v2777 = vpop.f32.mrb[0].mxu0
        %v2778 = vadd.f32 0.0, %v2777
        %v2779 = vpop.f32.mrb[0].mxu0
        %2780 = vmatprep.mubr.bf16.mxu0 0
        %2781 = vmatmul.mubr.bf16.gmra.mrb[0].mxu0 %v2715
        %v2782 = vpop.f32.mrb[0].mxu0
        %v2783 = vadd.f32 0.0, %v2782
        %v2784 = vpop.f32.mrb[0].mxu0
        %v2785 = vpop.f32.mrb[0].mxu0
        %v2786 = vadd.f32 0.0, %v2785
        %v2787 = vpop.f32.mrb[0].mxu0
        %2788 = vmatprep.mubr.bf16.mxu0 0
        %2789 = vmatmul.mubr.bf16.gmra.mrb[0].mxu0 %v2718
        %v2790 = vpop.f32.mrb[0].mxu0
        %v2791 = vadd.f32 0.0, %v2790
        %v2792 = vpop.f32.mrb[0].mxu0
        %v2793 = vpop.f32.mrb[0].mxu0
        %v2794 = vadd.f32 0.0, %v2793
        %v2795 = vpop.f32.mrb[0].mxu0
        %2796 = vmatprep.mubr.bf16.mxu0 0
        %2797 = vmatmul.mubr.bf16.gmra.mrb[0].mxu0 %v2721
        %v2798 = vpop.f32.mrb[0].mxu0
        %v2799 = vadd.f32 0.0, %v2798
        %v2800 = vpop.f32.mrb[0].mxu0
        %v2801 = vpop.f32.mrb[0].mxu0
        %v2802 = vadd.f32 0.0, %v2801
        %v2803 = vpop.f32.mrb[0].mxu0
        %2804 = vmatprep.mubr.bf16.mxu0 0
        %2805 = vmatmul.mubr.bf16.gmra.mrb[0].mxu0 %v2724
        %v2806 = vpop.f32.mrb[0].mxu0
        %v2807 = vadd.f32 0.0, %v2806
        %v2808 = vpop.f32.mrb[0].mxu0
        %v2809 = vpop.f32.mrb[0].mxu0
        %v2810 = vadd.f32 0.0, %v2809
        %v2811 = vpop.f32.mrb[0].mxu0
        %2812 = vmatprep.mubr.bf16.mxu0 0
        %2813 = vmatmul.mubr.bf16.gmra.mrb[0].mxu0 %v2727
        %v2814 = vpop.f32.mrb[0].mxu0
        %v2815 = vadd.f32 0.0, %v2814
        %v2816 = vpop.f32.mrb[0].mxu0
        %v2817 = vpop.f32.mrb[0].mxu0
        %v2818 = vadd.f32 0.0, %v2817
        %v2819 = vpop.f32.mrb[0].mxu0
        %2820 = vmatprep.mubr.bf16.mxu0 0
        %2821 = vmatmul.mubr.bf16.gmra.mrb[0].mxu0 %v2730
        %v2822 = vpop.f32.mrb[0].mxu0
        %v2823 = vadd.f32 0.0, %v2822
        %v2824 = vpop.f32.mrb[0].mxu0
        %v2825 = vpop.f32.mrb[0].mxu0
        %v2826 = vadd.f32 0.0, %v2825
        %v2827 = vpop.f32.mrb[0].mxu0
        %2828 = vdwg.mxu0
        %v2833 = vunpack.c.l.b16 %v729
        %v2834 = vunpack.c.l.b16 %v730
        %v2835 = vunpack.c.l.b16 %v731
        %v2836 = vunpack.c.l.b16 %v732
        %v2837 = vpack.c.b16 %v2834, %v2833
        %v2838 = vpack.c.b16 %v2836, %v2835
        %v2842 = vsel %vm771, %v1685, 0
        %v2845 = vsel %vm771, %v1686, 0
        %v2848 = vsel %vm771, %v1687, 0
        %v2851 = vsel %vm771, %v1688, 0
        %v2854 = vsel %vm771, %v1689, 0
        %v2857 = vsel %vm771, %v1690, 0
        %v2860 = vsel %vm771, %v1691, 0
        %v2863 = vsel %vm771, %v1692, 0
        %2865 = vmatprep.subr.bf16.mxu0 0
        %2866 = vmatpush1.bf16.msra.mxu0 %v2837
        %2867 = vmatprep.subr.bf16.mxu0 0
        %2868 = vmatpush1.bf16.msra.mxu0 %v2838
        %2869 = vmatprep.subr.bf16.mxu0 0
        %2870 = vmatpush1.bf16.msra.mxu0 0
        %2871 = vmatprep.subr.bf16.mxu0 0
        %2872 = vmatpush1.bf16.msra.mxu0 0
        %2873 = vmatprep.subr.bf16.mxu0 0
        %2874 = vmatpush1.bf16.msra.mxu0 0
        %2875 = vmatprep.subr.bf16.mxu0 0
        %2876 = vmatpush1.bf16.msra.mxu0 0
        %2877 = vmatprep.subr.bf16.mxu0 0
        %2878 = vmatpush1.bf16.msra.mxu0 0
        %2879 = vmatprep.subr.bf16.mxu0 0
        %2880 = vmatpush1.bf16.msra.mxu0 0
        %2881 = vmatprep.subr.bf16.mxu0 0
        %2882 = vmatpush1.bf16.msra.mxu0 0
        %2883 = vmatprep.subr.bf16.mxu0 0
        %2884 = vmatpush1.bf16.msra.mxu0 0
        %2885 = vmatprep.subr.bf16.mxu0 0
        %2886 = vmatpush1.bf16.msra.mxu0 0
        %2887 = vmatprep.subr.bf16.mxu0 0
        %2888 = vmatpush1.bf16.msra.mxu0 0
        %2889 = vmatprep.subr.bf16.mxu0 0
        %2890 = vmatpush1.bf16.msra.mxu0 0
        %2891 = vmatprep.subr.bf16.mxu0 0
        %2892 = vmatpush1.bf16.msra.mxu0 0
        %2893 = vmatprep.subr.bf16.mxu0 0
        %2894 = vmatpush1.bf16.msra.mxu0 0
        %2895 = vmatprep.subr.bf16.mxu0 0
        %2896 = vmatpush1.bf16.msra.mxu0 0
        %2897 = vmatprep.mubr.bf16.mxu0 0
        %2898 = vmatmul.mubr.bf16.gmra.mrb[0].mxu0 %v2842
        %v2899 = vpop.f32.mrb[0].mxu0
        %v2900 = vadd.f32 %v2767, %v2899
        %v2901 = vpop.f32.mrb[0].mxu0
        %v2902 = vpop.f32.mrb[0].mxu0
        %v2903 = vadd.f32 %v2770, %v2902
        %v2904 = vpop.f32.mrb[0].mxu0
        %2905 = vmatprep.mubr.bf16.mxu0 0
        %2906 = vmatmul.mubr.bf16.gmra.mrb[0].mxu0 %v2845
        %v2907 = vpop.f32.mrb[0].mxu0
        %v2908 = vadd.f32 %v2775, %v2907
        %v2909 = vpop.f32.mrb[0].mxu0
        %v2910 = vpop.f32.mrb[0].mxu0
        %v2911 = vadd.f32 %v2778, %v2910
        %v2912 = vpop.f32.mrb[0].mxu0
        %2913 = vmatprep.mubr.bf16.mxu0 0
        %2914 = vmatmul.mubr.bf16.gmra.mrb[0].mxu0 %v2848
        %v2915 = vpop.f32.mrb[0].mxu0
        %v2916 = vadd.f32 %v2783, %v2915
        %v2917 = vpop.f32.mrb[0].mxu0
        %v2918 = vpop.f32.mrb[0].mxu0
        %v2919 = vadd.f32 %v2786, %v2918
        %v2920 = vpop.f32.mrb[0].mxu0
        %2921 = vmatprep.mubr.bf16.mxu0 0
        %2922 = vmatmul.mubr.bf16.gmra.mrb[0].mxu0 %v2851
        %v2923 = vpop.f32.mrb[0].mxu0
        %v2924 = vadd.f32 %v2791, %v2923
        %v2925 = vpop.f32.mrb[0].mxu0
        %v2926 = vpop.f32.mrb[0].mxu0
        %v2927 = vadd.f32 %v2794, %v2926
        %v2928 = vpop.f32.mrb[0].mxu0
        %2929 = vmatprep.mubr.bf16.mxu0 0
        %2930 = vmatmul.mubr.bf16.gmra.mrb[0].mxu0 %v2854
        %v2931 = vpop.f32.mrb[0].mxu0
        %v2932 = vadd.f32 %v2799, %v2931
        %v2933 = vpop.f32.mrb[0].mxu0
        %v2934 = vpop.f32.mrb[0].mxu0
        %v2935 = vadd.f32 %v2802, %v2934
        %v2936 = vpop.f32.mrb[0].mxu0
        %2937 = vmatprep.mubr.bf16.mxu0 0
        %2938 = vmatmul.mubr.bf16.gmra.mrb[0].mxu0 %v2857
        %v2939 = vpop.f32.mrb[0].mxu0
        %v2940 = vadd.f32 %v2807, %v2939
        %v2941 = vpop.f32.mrb[0].mxu0
        %v2942 = vpop.f32.mrb[0].mxu0
        %v2943 = vadd.f32 %v2810, %v2942
        %v2944 = vpop.f32.mrb[0].mxu0
        %2945 = vmatprep.mubr.bf16.mxu0 0
        %2946 = vmatmul.mubr.bf16.gmra.mrb[0].mxu0 %v2860
        %v2947 = vpop.f32.mrb[0].mxu0
        %v2948 = vadd.f32 %v2815, %v2947
        %v2949 = vpop.f32.mrb[0].mxu0
        %v2950 = vpop.f32.mrb[0].mxu0
        %v2951 = vadd.f32 %v2818, %v2950
        %v2952 = vpop.f32.mrb[0].mxu0
        %2953 = vmatprep.mubr.bf16.mxu0 0
        %2954 = vmatmul.mubr.bf16.gmra.mrb[0].mxu0 %v2863
        %v2955 = vpop.f32.mrb[0].mxu0
        %v2956 = vadd.f32 %v2823, %v2955
        %v2957 = vpop.f32.mrb[0].mxu0
        %v2958 = vpop.f32.mrb[0].mxu0
        %v2959 = vadd.f32 %v2826, %v2958
        %v2960 = vpop.f32.mrb[0].mxu0
        %2961 = vdwg.mxu0
        %s2962 = scalar_lea.vmem [#allocation7], 32
        %v2963 = vld [vmem:[%s2962] sm:$0xff]
        %v2964 = vld [vmem:[%s2962 + $0x8] sm:$0xff]
        %2965 = vrot.lane.b32.xlu0 %v745, 64
        %v2966 = vpop.permute.xlu0 %2965
        %2967 = vrot.lane.b32.xlu0 %v753, 64
        %v2968 = vpop.permute.xlu0 %2967
        %v2970 = vsel %vm771, %v2966, 0
        %v2973 = vsel %vm771, %v2968, 0
        %2975 = vmatprep.subr.bf16.mxu0 0
        %2976 = vmatpush1.bf16.xpose.msra.mxu0 %v2973
        %2977 = vmatprep.subr.bf16.mxu0 0
        %2978 = vmatpush1.bf16.xpose.msra.mxu0 0
        %2979 = vmatprep.subr.bf16.mxu0 0
        %2980 = vmatpush1.bf16.xpose.msra.mxu0 0
        %2981 = vmatprep.subr.bf16.mxu0 0
        %2982 = vmatpush1.bf16.xpose.msra.mxu0 0
        %2983 = vmatprep.subr.bf16.mxu0 0
        %2984 = vmatpush1.bf16.xpose.msra.mxu0 0
        %2985 = vmatprep.subr.bf16.mxu0 0
        %2986 = vmatpush1.bf16.xpose.msra.mxu0 0
        %2987 = vmatprep.subr.bf16.mxu0 0
        %2988 = vmatpush1.bf16.xpose.msra.mxu0 0
        %2989 = vmatprep.subr.bf16.mxu0 0
        %2990 = vmatpush1.bf16.xpose.msra.mxu0 0
        %2991 = vmatprep.subr.bf16.mxu0 0
        %2992 = vmatpush1.bf16.xpose.msra.mxu0 0
        %2993 = vmatprep.subr.bf16.mxu0 0
        %2994 = vmatpush1.bf16.xpose.msra.mxu0 0
        %2995 = vmatprep.subr.bf16.mxu0 0
        %2996 = vmatpush1.bf16.xpose.msra.mxu0 0
        %2997 = vmatprep.subr.bf16.mxu0 0
        %2998 = vmatpush1.bf16.xpose.msra.mxu0 0
        %2999 = vmatprep.subr.bf16.mxu0 0
        %3000 = vmatpush1.bf16.xpose.msra.mxu0 0
        %3001 = vmatprep.subr.bf16.mxu0 0
        %3002 = vmatpush1.bf16.xpose.msra.mxu0 0
        %3003 = vmatprep.subr.bf16.mxu0 0
        %3004 = vmatpush1.bf16.xpose.msra.mxu0 0
        %3005 = vmatprep.subr.bf16.mxu0 0
        %3006 = vmatpush1.bf16.xpose.msra.mxu0 0
        %3007 = vmatprep.mubr.bf16.mxu0 0
        %3008 = vmatmul.mubr.bf16.gmra.mrb[0].mxu0 %v2970
        %v3009 = vpop.f32.mrb[0].mxu0
        %v3010 = vadd.f32 %v2963, %v3009
        %v3011 = vpop.f32.mrb[0].mxu0
        %v3012 = vpop.f32.mrb[0].mxu0
        %v3013 = vadd.f32 %v2964, %v3012
        %v3014 = vpop.f32.mrb[0].mxu0
        %3015 = vdwg.mxu0
        %3016 = vrot.lane.b32.xlu0 %v746, 64
        %v3017 = vpop.permute.xlu0 %3016
        %3018 = vrot.lane.b32.xlu0 %v754, 64
        %v3019 = vpop.permute.xlu0 %3018
        %v3021 = vsel %vm771, %v3017, 0
        %v3024 = vsel %vm771, %v3019, 0
        %3026 = vmatprep.subr.bf16.mxu0 0
        %3027 = vmatpush1.bf16.xpose.msra.mxu0 %v3024
        %3028 = vmatprep.subr.bf16.mxu0 0
        %3029 = vmatpush1.bf16.xpose.msra.mxu0 0
        %3030 = vmatprep.subr.bf16.mxu0 0
        %3031 = vmatpush1.bf16.xpose.msra.mxu0 0
        %3032 = vmatprep.subr.bf16.mxu0 0
        %3033 = vmatpush1.bf16.xpose.msra.mxu0 0
        %3034 = vmatprep.subr.bf16.mxu0 0
        %3035 = vmatpush1.bf16.xpose.msra.mxu0 0
        %3036 = vmatprep.subr.bf16.mxu0 0
        %3037 = vmatpush1.bf16.xpose.msra.mxu0 0
        %3038 = vmatprep.subr.bf16.mxu0 0
        %3039 = vmatpush1.bf16.xpose.msra.mxu0 0
        %3040 = vmatprep.subr.bf16.mxu0 0
        %3041 = vmatpush1.bf16.xpose.msra.mxu0 0
        %3042 = vmatprep.subr.bf16.mxu0 0
        %3043 = vmatpush1.bf16.xpose.msra.mxu0 0
        %3044 = vmatprep.subr.bf16.mxu0 0
        %3045 = vmatpush1.bf16.xpose.msra.mxu0 0
        %3046 = vmatprep.subr.bf16.mxu0 0
        %3047 = vmatpush1.bf16.xpose.msra.mxu0 0
        %3048 = vmatprep.subr.bf16.mxu0 0
        %3049 = vmatpush1.bf16.xpose.msra.mxu0 0
        %3050 = vmatprep.subr.bf16.mxu0 0
        %3051 = vmatpush1.bf16.xpose.msra.mxu0 0
        %3052 = vmatprep.subr.bf16.mxu0 0
        %3053 = vmatpush1.bf16.xpose.msra.mxu0 0
        %3054 = vmatprep.subr.bf16.mxu0 0
        %3055 = vmatpush1.bf16.xpose.msra.mxu0 0
        %3056 = vmatprep.subr.bf16.mxu0 0
        %3057 = vmatpush1.bf16.xpose.msra.mxu0 0
        %3058 = vmatprep.mubr.bf16.mxu0 0
        %3059 = vmatmul.mubr.bf16.gmra.mrb[0].mxu0 %v3021
        %v3060 = vpop.f32.mrb[0].mxu0
        %v3061 = vadd.f32 %v2963, %v3060
        %v3062 = vpop.f32.mrb[0].mxu0
        %v3063 = vpop.f32.mrb[0].mxu0
        %v3064 = vadd.f32 %v2964, %v3063
        %v3065 = vpop.f32.mrb[0].mxu0
        %3066 = vdwg.mxu0
        %3067 = vrot.lane.b32.xlu0 %v747, 64
        %v3068 = vpop.permute.xlu0 %3067
        %3069 = vrot.lane.b32.xlu0 %v755, 64
        %v3070 = vpop.permute.xlu0 %3069
        %v3072 = vsel %vm771, %v3068, 0
        %v3075 = vsel %vm771, %v3070, 0
        %3077 = vmatprep.subr.bf16.mxu0 0
        %3078 = vmatpush1.bf16.xpose.msra.mxu0 %v3075
        %3079 = vmatprep.subr.bf16.mxu0 0
        %3080 = vmatpush1.bf16.xpose.msra.mxu0 0
        %3081 = vmatprep.subr.bf16.mxu0 0
        %3082 = vmatpush1.bf16.xpose.msra.mxu0 0
        %3083 = vmatprep.subr.bf16.mxu0 0
        %3084 = vmatpush1.bf16.xpose.msra.mxu0 0
        %3085 = vmatprep.subr.bf16.mxu0 0
        %3086 = vmatpush1.bf16.xpose.msra.mxu0 0
        %3087 = vmatprep.subr.bf16.mxu0 0
        %3088 = vmatpush1.bf16.xpose.msra.mxu0 0
        %3089 = vmatprep.subr.bf16.mxu0 0
        %3090 = vmatpush1.bf16.xpose.msra.mxu0 0
        %3091 = vmatprep.subr.bf16.mxu0 0
        %3092 = vmatpush1.bf16.xpose.msra.mxu0 0
        %3093 = vmatprep.subr.bf16.mxu0 0
        %3094 = vmatpush1.bf16.xpose.msra.mxu0 0
        %3095 = vmatprep.subr.bf16.mxu0 0
        %3096 = vmatpush1.bf16.xpose.msra.mxu0 0
        %3097 = vmatprep.subr.bf16.mxu0 0
        %3098 = vmatpush1.bf16.xpose.msra.mxu0 0
        %3099 = vmatprep.subr.bf16.mxu0 0
        %3100 = vmatpush1.bf16.xpose.msra.mxu0 0
        %3101 = vmatprep.subr.bf16.mxu0 0
        %3102 = vmatpush1.bf16.xpose.msra.mxu0 0
        %3103 = vmatprep.subr.bf16.mxu0 0
        %3104 = vmatpush1.bf16.xpose.msra.mxu0 0
        %3105 = vmatprep.subr.bf16.mxu0 0
        %3106 = vmatpush1.bf16.xpose.msra.mxu0 0
        %3107 = vmatprep.subr.bf16.mxu0 0
        %3108 = vmatpush1.bf16.xpose.msra.mxu0 0
        %3109 = vmatprep.mubr.bf16.mxu0 0
        %3110 = vmatmul.mubr.bf16.gmra.mrb[0].mxu0 %v3072
        %v3111 = vpop.f32.mrb[0].mxu0
        %v3112 = vadd.f32 %v2963, %v3111
        %v3113 = vpop.f32.mrb[0].mxu0
        %v3114 = vpop.f32.mrb[0].mxu0
        %v3115 = vadd.f32 %v2964, %v3114
        %v3116 = vpop.f32.mrb[0].mxu0
        %3117 = vdwg.mxu0
        %3118 = vrot.lane.b32.xlu0 %v748, 64
        %v3119 = vpop.permute.xlu0 %3118
        %3120 = vrot.lane.b32.xlu0 %v756, 64
        %v3121 = vpop.permute.xlu0 %3120
        %v3123 = vsel %vm771, %v3119, 0
        %v3126 = vsel %vm771, %v3121, 0
        %3128 = vmatprep.subr.bf16.mxu0 0
        %3129 = vmatpush1.bf16.xpose.msra.mxu0 %v3126
        %3130 = vmatprep.subr.bf16.mxu0 0
        %3131 = vmatpush1.bf16.xpose.msra.mxu0 0
        %3132 = vmatprep.subr.bf16.mxu0 0
        %3133 = vmatpush1.bf16.xpose.msra.mxu0 0
        %3134 = vmatprep.subr.bf16.mxu0 0
        %3135 = vmatpush1.bf16.xpose.msra.mxu0 0
        %3136 = vmatprep.subr.bf16.mxu0 0
        %3137 = vmatpush1.bf16.xpose.msra.mxu0 0
        %3138 = vmatprep.subr.bf16.mxu0 0
        %3139 = vmatpush1.bf16.xpose.msra.mxu0 0
        %3140 = vmatprep.subr.bf16.mxu0 0
        %3141 = vmatpush1.bf16.xpose.msra.mxu0 0
        %3142 = vmatprep.subr.bf16.mxu0 0
        %3143 = vmatpush1.bf16.xpose.msra.mxu0 0
        %3144 = vmatprep.subr.bf16.mxu0 0
        %3145 = vmatpush1.bf16.xpose.msra.mxu0 0
        %3146 = vmatprep.subr.bf16.mxu0 0
        %3147 = vmatpush1.bf16.xpose.msra.mxu0 0
        %3148 = vmatprep.subr.bf16.mxu0 0
        %3149 = vmatpush1.bf16.xpose.msra.mxu0 0
        %3150 = vmatprep.subr.bf16.mxu0 0
        %3151 = vmatpush1.bf16.xpose.msra.mxu0 0
        %3152 = vmatprep.subr.bf16.mxu0 0
        %3153 = vmatpush1.bf16.xpose.msra.mxu0 0
        %3154 = vmatprep.subr.bf16.mxu0 0
        %3155 = vmatpush1.bf16.xpose.msra.mxu0 0
        %3156 = vmatprep.subr.bf16.mxu0 0
        %3157 = vmatpush1.bf16.xpose.msra.mxu0 0
        %3158 = vmatprep.subr.bf16.mxu0 0
        %3159 = vmatpush1.bf16.xpose.msra.mxu0 0
        %3160 = vmatprep.mubr.bf16.mxu0 0
        %3161 = vmatmul.mubr.bf16.gmra.mrb[0].mxu0 %v3123
        %v3162 = vpop.f32.mrb[0].mxu0
        %v3163 = vadd.f32 %v2963, %v3162
        %v3164 = vpop.f32.mrb[0].mxu0
        %v3165 = vpop.f32.mrb[0].mxu0
        %v3166 = vadd.f32 %v2964, %v3165
        %v3167 = vpop.f32.mrb[0].mxu0
        %3168 = vdwg.mxu0
        %3169 = vrot.lane.b32.xlu0 %v749, 64
        %v3170 = vpop.permute.xlu0 %3169
        %3171 = vrot.lane.b32.xlu0 %v757, 64
        %v3172 = vpop.permute.xlu0 %3171
        %v3174 = vsel %vm771, %v3170, 0
        %v3177 = vsel %vm771, %v3172, 0
        %3179 = vmatprep.subr.bf16.mxu0 0
        %3180 = vmatpush1.bf16.xpose.msra.mxu0 %v3177
        %3181 = vmatprep.subr.bf16.mxu0 0
        %3182 = vmatpush1.bf16.xpose.msra.mxu0 0
        %3183 = vmatprep.subr.bf16.mxu0 0
        %3184 = vmatpush1.bf16.xpose.msra.mxu0 0
        %3185 = vmatprep.subr.bf16.mxu0 0
        %3186 = vmatpush1.bf16.xpose.msra.mxu0 0
        %3187 = vmatprep.subr.bf16.mxu0 0
        %3188 = vmatpush1.bf16.xpose.msra.mxu0 0
        %3189 = vmatprep.subr.bf16.mxu0 0
        %3190 = vmatpush1.bf16.xpose.msra.mxu0 0
        %3191 = vmatprep.subr.bf16.mxu0 0
        %3192 = vmatpush1.bf16.xpose.msra.mxu0 0
        %3193 = vmatprep.subr.bf16.mxu0 0
        %3194 = vmatpush1.bf16.xpose.msra.mxu0 0
        %3195 = vmatprep.subr.bf16.mxu0 0
        %3196 = vmatpush1.bf16.xpose.msra.mxu0 0
        %3197 = vmatprep.subr.bf16.mxu0 0
        %3198 = vmatpush1.bf16.xpose.msra.mxu0 0
        %3199 = vmatprep.subr.bf16.mxu0 0
        %3200 = vmatpush1.bf16.xpose.msra.mxu0 0
        %3201 = vmatprep.subr.bf16.mxu0 0
        %3202 = vmatpush1.bf16.xpose.msra.mxu0 0
        %3203 = vmatprep.subr.bf16.mxu0 0
        %3204 = vmatpush1.bf16.xpose.msra.mxu0 0
        %3205 = vmatprep.subr.bf16.mxu0 0
        %3206 = vmatpush1.bf16.xpose.msra.mxu0 0
        %3207 = vmatprep.subr.bf16.mxu0 0
        %3208 = vmatpush1.bf16.xpose.msra.mxu0 0
        %3209 = vmatprep.subr.bf16.mxu0 0
        %3210 = vmatpush1.bf16.xpose.msra.mxu0 0
        %3211 = vmatprep.mubr.bf16.mxu0 0
        %3212 = vmatmul.mubr.bf16.gmra.mrb[0].mxu0 %v3174
        %v3213 = vpop.f32.mrb[0].mxu0
        %v3214 = vadd.f32 %v2963, %v3213
        %v3215 = vpop.f32.mrb[0].mxu0
        %v3216 = vpop.f32.mrb[0].mxu0
        %v3217 = vadd.f32 %v2964, %v3216
        %v3218 = vpop.f32.mrb[0].mxu0
        %3219 = vdwg.mxu0
        %3220 = vrot.lane.b32.xlu0 %v750, 64
        %v3221 = vpop.permute.xlu0 %3220
        %3222 = vrot.lane.b32.xlu0 %v758, 64
        %v3223 = vpop.permute.xlu0 %3222
        %v3225 = vsel %vm771, %v3221, 0
        %v3228 = vsel %vm771, %v3223, 0
        %3230 = vmatprep.subr.bf16.mxu0 0
        %3231 = vmatpush1.bf16.xpose.msra.mxu0 %v3228
        %3232 = vmatprep.subr.bf16.mxu0 0
        %3233 = vmatpush1.bf16.xpose.msra.mxu0 0
        %3234 = vmatprep.subr.bf16.mxu0 0
        %3235 = vmatpush1.bf16.xpose.msra.mxu0 0
        %3236 = vmatprep.subr.bf16.mxu0 0
        %3237 = vmatpush1.bf16.xpose.msra.mxu0 0
        %3238 = vmatprep.subr.bf16.mxu0 0
        %3239 = vmatpush1.bf16.xpose.msra.mxu0 0
        %3240 = vmatprep.subr.bf16.mxu0 0
        %3241 = vmatpush1.bf16.xpose.msra.mxu0 0
        %3242 = vmatprep.subr.bf16.mxu0 0
        %3243 = vmatpush1.bf16.xpose.msra.mxu0 0
        %3244 = vmatprep.subr.bf16.mxu0 0
        %3245 = vmatpush1.bf16.xpose.msra.mxu0 0
        %3246 = vmatprep.subr.bf16.mxu0 0
        %3247 = vmatpush1.bf16.xpose.msra.mxu0 0
        %3248 = vmatprep.subr.bf16.mxu0 0
        %3249 = vmatpush1.bf16.xpose.msra.mxu0 0
        %3250 = vmatprep.subr.bf16.mxu0 0
        %3251 = vmatpush1.bf16.xpose.msra.mxu0 0
        %3252 = vmatprep.subr.bf16.mxu0 0
        %3253 = vmatpush1.bf16.xpose.msra.mxu0 0
        %3254 = vmatprep.subr.bf16.mxu0 0
        %3255 = vmatpush1.bf16.xpose.msra.mxu0 0
        %3256 = vmatprep.subr.bf16.mxu0 0
        %3257 = vmatpush1.bf16.xpose.msra.mxu0 0
        %3258 = vmatprep.subr.bf16.mxu0 0
        %3259 = vmatpush1.bf16.xpose.msra.mxu0 0
        %3260 = vmatprep.subr.bf16.mxu0 0
        %3261 = vmatpush1.bf16.xpose.msra.mxu0 0
        %3262 = vmatprep.mubr.bf16.mxu0 0
        %3263 = vmatmul.mubr.bf16.gmra.mrb[0].mxu0 %v3225
        %v3264 = vpop.f32.mrb[0].mxu0
        %v3265 = vadd.f32 %v2963, %v3264
        %v3266 = vpop.f32.mrb[0].mxu0
        %v3267 = vpop.f32.mrb[0].mxu0
        %v3268 = vadd.f32 %v2964, %v3267
        %v3269 = vpop.f32.mrb[0].mxu0
        %3270 = vdwg.mxu0
        %3271 = vrot.lane.b32.xlu0 %v751, 64
        %v3272 = vpop.permute.xlu0 %3271
        %3273 = vrot.lane.b32.xlu0 %v759, 64
        %v3274 = vpop.permute.xlu0 %3273
        %v3276 = vsel %vm771, %v3272, 0
        %v3279 = vsel %vm771, %v3274, 0
        %3281 = vmatprep.subr.bf16.mxu0 0
        %3282 = vmatpush1.bf16.xpose.msra.mxu0 %v3279
        %3283 = vmatprep.subr.bf16.mxu0 0
        %3284 = vmatpush1.bf16.xpose.msra.mxu0 0
        %3285 = vmatprep.subr.bf16.mxu0 0
        %3286 = vmatpush1.bf16.xpose.msra.mxu0 0
        %3287 = vmatprep.subr.bf16.mxu0 0
        %3288 = vmatpush1.bf16.xpose.msra.mxu0 0
        %3289 = vmatprep.subr.bf16.mxu0 0
        %3290 = vmatpush1.bf16.xpose.msra.mxu0 0
        %3291 = vmatprep.subr.bf16.mxu0 0
        %3292 = vmatpush1.bf16.xpose.msra.mxu0 0
        %3293 = vmatprep.subr.bf16.mxu0 0
        %3294 = vmatpush1.bf16.xpose.msra.mxu0 0
        %3295 = vmatprep.subr.bf16.mxu0 0
        %3296 = vmatpush1.bf16.xpose.msra.mxu0 0
        %3297 = vmatprep.subr.bf16.mxu0 0
        %3298 = vmatpush1.bf16.xpose.msra.mxu0 0
        %3299 = vmatprep.subr.bf16.mxu0 0
        %3300 = vmatpush1.bf16.xpose.msra.mxu0 0
        %3301 = vmatprep.subr.bf16.mxu0 0
        %3302 = vmatpush1.bf16.xpose.msra.mxu0 0
        %3303 = vmatprep.subr.bf16.mxu0 0
        %3304 = vmatpush1.bf16.xpose.msra.mxu0 0
        %3305 = vmatprep.subr.bf16.mxu0 0
        %3306 = vmatpush1.bf16.xpose.msra.mxu0 0
        %3307 = vmatprep.subr.bf16.mxu0 0
        %3308 = vmatpush1.bf16.xpose.msra.mxu0 0
        %3309 = vmatprep.subr.bf16.mxu0 0
        %3310 = vmatpush1.bf16.xpose.msra.mxu0 0
        %3311 = vmatprep.subr.bf16.mxu0 0
        %3312 = vmatpush1.bf16.xpose.msra.mxu0 0
        %3313 = vmatprep.mubr.bf16.mxu0 0
        %3314 = vmatmul.mubr.bf16.gmra.mrb[0].mxu0 %v3276
        %v3315 = vpop.f32.mrb[0].mxu0
        %v3316 = vadd.f32 %v2963, %v3315
        %v3317 = vpop.f32.mrb[0].mxu0
        %v3318 = vpop.f32.mrb[0].mxu0
        %v3319 = vadd.f32 %v2964, %v3318
        %v3320 = vpop.f32.mrb[0].mxu0
        %3321 = vdwg.mxu0
        %3322 = vrot.lane.b32.xlu0 %v752, 64
        %v3323 = vpop.permute.xlu0 %3322
        %3324 = vrot.lane.b32.xlu0 %v760, 64
        %v3325 = vpop.permute.xlu0 %3324
        %v3327 = vsel %vm771, %v3323, 0
        %v3330 = vsel %vm771, %v3325, 0
        %3332 = vmatprep.subr.bf16.mxu0 0
        %3333 = vmatpush1.bf16.xpose.msra.mxu0 %v3330
        %3334 = vmatprep.subr.bf16.mxu0 0
        %3335 = vmatpush1.bf16.xpose.msra.mxu0 0
        %3336 = vmatprep.subr.bf16.mxu0 0
        %3337 = vmatpush1.bf16.xpose.msra.mxu0 0
        %3338 = vmatprep.subr.bf16.mxu0 0
        %3339 = vmatpush1.bf16.xpose.msra.mxu0 0
        %3340 = vmatprep.subr.bf16.mxu0 0
        %3341 = vmatpush1.bf16.xpose.msra.mxu0 0
        %3342 = vmatprep.subr.bf16.mxu0 0
        %3343 = vmatpush1.bf16.xpose.msra.mxu0 0
        %3344 = vmatprep.subr.bf16.mxu0 0
        %3345 = vmatpush1.bf16.xpose.msra.mxu0 0
        %3346 = vmatprep.subr.bf16.mxu0 0
        %3347 = vmatpush1.bf16.xpose.msra.mxu0 0
        %3348 = vmatprep.subr.bf16.mxu0 0
        %3349 = vmatpush1.bf16.xpose.msra.mxu0 0
        %3350 = vmatprep.subr.bf16.mxu0 0
        %3351 = vmatpush1.bf16.xpose.msra.mxu0 0
        %3352 = vmatprep.subr.bf16.mxu0 0
        %3353 = vmatpush1.bf16.xpose.msra.mxu0 0
        %3354 = vmatprep.subr.bf16.mxu0 0
        %3355 = vmatpush1.bf16.xpose.msra.mxu0 0
        %3356 = vmatprep.subr.bf16.mxu0 0
        %3357 = vmatpush1.bf16.xpose.msra.mxu0 0
        %3358 = vmatprep.subr.bf16.mxu0 0
        %3359 = vmatpush1.bf16.xpose.msra.mxu0 0
        %3360 = vmatprep.subr.bf16.mxu0 0
        %3361 = vmatpush1.bf16.xpose.msra.mxu0 0
        %3362 = vmatprep.subr.bf16.mxu0 0
        %3363 = vmatpush1.bf16.xpose.msra.mxu0 0
        %3364 = vmatprep.mubr.bf16.mxu0 0
        %3365 = vmatmul.mubr.bf16.gmra.mrb[0].mxu0 %v3327
        %v3366 = vpop.f32.mrb[0].mxu0
        %v3367 = vadd.f32 %v2963, %v3366
        %v3368 = vpop.f32.mrb[0].mxu0
        %v3369 = vpop.f32.mrb[0].mxu0
        %v3370 = vadd.f32 %v2964, %v3369
        %v3371 = vpop.f32.mrb[0].mxu0
        %3372 = vdwg.mxu0
        %v3373 = vsel %vm1148, %v3010, -inf
        %3374 = vmax.xlane.f32.xlu0 %v3373
        %v3375 = vpop.xlane.xlu0 %3374
        %v3376 = vsel %vm1148, %v3013, -inf
        %3377 = vmax.xlane.f32.xlu0 %v3376
        %v3378 = vpop.xlane.xlu0 %3377
        %v3379 = vsel %vm1148, %v3061, -inf
        %3380 = vmax.xlane.f32.xlu0 %v3379
        %v3381 = vpop.xlane.xlu0 %3380
        %v3382 = vsel %vm1148, %v3064, -inf
        %3383 = vmax.xlane.f32.xlu0 %v3382
        %v3384 = vpop.xlane.xlu0 %3383
        %v3385 = vsel %vm1148, %v3112, -inf
        %3386 = vmax.xlane.f32.xlu0 %v3385
        %v3387 = vpop.xlane.xlu0 %3386
        %v3388 = vsel %vm1148, %v3115, -inf
        %3389 = vmax.xlane.f32.xlu0 %v3388
        %v3390 = vpop.xlane.xlu0 %3389
        %v3391 = vsel %vm1148, %v3163, -inf
        %3392 = vmax.xlane.f32.xlu0 %v3391
        %v3393 = vpop.xlane.xlu0 %3392
        %v3394 = vsel %vm1148, %v3166, -inf
        %3395 = vmax.xlane.f32.xlu0 %v3394
        %v3396 = vpop.xlane.xlu0 %3395
        %v3397 = vsel %vm1148, %v3214, -inf
        %3398 = vmax.xlane.f32.xlu0 %v3397
        %v3399 = vpop.xlane.xlu0 %3398
        %v3400 = vsel %vm1148, %v3217, -inf
        %3401 = vmax.xlane.f32.xlu0 %v3400
        %v3402 = vpop.xlane.xlu0 %3401
        %v3403 = vsel %vm1148, %v3265, -inf
        %3404 = vmax.xlane.f32.xlu0 %v3403
        %v3405 = vpop.xlane.xlu0 %3404
        %v3406 = vsel %vm1148, %v3268, -inf
        %3407 = vmax.xlane.f32.xlu0 %v3406
        %v3408 = vpop.xlane.xlu0 %3407
        %v3409 = vsel %vm1148, %v3316, -inf
        %3410 = vmax.xlane.f32.xlu0 %v3409
        %v3411 = vpop.xlane.xlu0 %3410
        %v3412 = vsel %vm1148, %v3319, -inf
        %3413 = vmax.xlane.f32.xlu0 %v3412
        %v3414 = vpop.xlane.xlu0 %3413
        %v3415 = vsel %vm1148, %v3367, -inf
        %3416 = vmax.xlane.f32.xlu0 %v3415
        %v3417 = vpop.xlane.xlu0 %3416
        %v3418 = vsel %vm1148, %v3370, -inf
        %3419 = vmax.xlane.f32.xlu0 %v3418
        %v3420 = vpop.xlane.xlu0 %3419
        %v3421 = vsub.f32 %v3010, %v3375
        %v3422 = vsub.f32 %v3013, %v3378
        %v3423 = vsub.f32 %v3061, %v3381
        %v3424 = vsub.f32 %v3064, %v3384
        %v3425 = vsub.f32 %v3112, %v3387
        %v3426 = vsub.f32 %v3115, %v3390
        %v3427 = vsub.f32 %v3163, %v3393
        %v3428 = vsub.f32 %v3166, %v3396
        %v3429 = vsub.f32 %v3214, %v3399
        %v3430 = vsub.f32 %v3217, %v3402
        %v3431 = vsub.f32 %v3265, %v3405
        %v3432 = vsub.f32 %v3268, %v3408
        %v3433 = vsub.f32 %v3316, %v3411
        %v3434 = vsub.f32 %v3319, %v3414
        %v3435 = vsub.f32 %v3367, %v3417
        %v3436 = vsub.f32 %v3370, %v3420
        %v3437 = vmul.f32 %v3421, 1.442695
        %v3438 = vpow.pop %v3437
        %v3439 = vmul.f32 %v3422, 1.442695
        %v3440 = vpow.pop %v3439
        %v3441 = vmul.f32 %v3423, 1.442695
        %v3442 = vpow.pop %v3441
        %v3443 = vmul.f32 %v3424, 1.442695
        %v3444 = vpow.pop %v3443
        %v3445 = vmul.f32 %v3425, 1.442695
        %v3446 = vpow.pop %v3445
        %v3447 = vmul.f32 %v3426, 1.442695
        %v3448 = vpow.pop %v3447
        %v3449 = vmul.f32 %v3427, 1.442695
        %v3450 = vpow.pop %v3449
        %v3451 = vmul.f32 %v3428, 1.442695
        %v3452 = vpow.pop %v3451
        %v3453 = vmul.f32 %v3429, 1.442695
        %v3454 = vpow.pop %v3453
        %v3455 = vmul.f32 %v3430, 1.442695
        %v3456 = vpow.pop %v3455
        %v3457 = vmul.f32 %v3431, 1.442695
        %v3458 = vpow.pop %v3457
        %v3459 = vmul.f32 %v3432, 1.442695
        %v3460 = vpow.pop %v3459
        %v3461 = vmul.f32 %v3433, 1.442695
        %v3462 = vpow.pop %v3461
        %v3463 = vmul.f32 %v3434, 1.442695
        %v3464 = vpow.pop %v3463
        %v3465 = vmul.f32 %v3435, 1.442695
        %v3466 = vpow.pop %v3465
        %v3467 = vmul.f32 %v3436, 1.442695
        %v3468 = vpow.pop %v3467
        %v3469 = vsel %vm1148, %v3438, 0.0
        %3470 = vadd.xlane.f32.xlu0 %v3469
        %v3471 = vpop.xlane.xlu0 %3470
        %v3472 = vsel %vm1148, %v3440, 0.0
        %3473 = vadd.xlane.f32.xlu0 %v3472
        %v3474 = vpop.xlane.xlu0 %3473
        %v3475 = vsel %vm1148, %v3442, 0.0
        %3476 = vadd.xlane.f32.xlu0 %v3475
        %v3477 = vpop.xlane.xlu0 %3476
        %v3478 = vsel %vm1148, %v3444, 0.0
        %3479 = vadd.xlane.f32.xlu0 %v3478
        %v3480 = vpop.xlane.xlu0 %3479
        %v3481 = vsel %vm1148, %v3446, 0.0
        %3482 = vadd.xlane.f32.xlu0 %v3481
        %v3483 = vpop.xlane.xlu0 %3482
        %v3484 = vsel %vm1148, %v3448, 0.0
        %3485 = vadd.xlane.f32.xlu0 %v3484
        %v3486 = vpop.xlane.xlu0 %3485
        %v3487 = vsel %vm1148, %v3450, 0.0
        %3488 = vadd.xlane.f32.xlu0 %v3487
        %v3489 = vpop.xlane.xlu0 %3488
        %v3490 = vsel %vm1148, %v3452, 0.0
        %3491 = vadd.xlane.f32.xlu0 %v3490
        %v3492 = vpop.xlane.xlu0 %3491
        %v3493 = vsel %vm1148, %v3454, 0.0
        %3494 = vadd.xlane.f32.xlu0 %v3493
        %v3495 = vpop.xlane.xlu0 %3494
        %v3496 = vsel %vm1148, %v3456, 0.0
        %3497 = vadd.xlane.f32.xlu0 %v3496
        %v3498 = vpop.xlane.xlu0 %3497
        %v3499 = vsel %vm1148, %v3458, 0.0
        %3500 = vadd.xlane.f32.xlu0 %v3499
        %v3501 = vpop.xlane.xlu0 %3500
        %v3502 = vsel %vm1148, %v3460, 0.0
        %3503 = vadd.xlane.f32.xlu0 %v3502
        %v3504 = vpop.xlane.xlu0 %3503
        %v3505 = vsel %vm1148, %v3462, 0.0
        %3506 = vadd.xlane.f32.xlu0 %v3505
        %v3507 = vpop.xlane.xlu0 %3506
        %v3508 = vsel %vm1148, %v3464, 0.0
        %3509 = vadd.xlane.f32.xlu0 %v3508
        %v3510 = vpop.xlane.xlu0 %3509
        %v3511 = vsel %vm1148, %v3466, 0.0
        %3512 = vadd.xlane.f32.xlu0 %v3511
        %v3513 = vpop.xlane.xlu0 %3512
        %v3514 = vsel %vm1148, %v3468, 0.0
        %3515 = vadd.xlane.f32.xlu0 %v3514
        %v3516 = vpop.xlane.xlu0 %3515
        %v3517 = vrcp.pop %v3471
        %v3518 = vrcp.pop %v3474
        %v3519 = vrcp.pop %v3477
        %v3520 = vrcp.pop %v3480
        %v3521 = vrcp.pop %v3483
        %v3522 = vrcp.pop %v3486
        %v3523 = vrcp.pop %v3489
        %v3524 = vrcp.pop %v3492
        %v3525 = vrcp.pop %v3495
        %v3526 = vrcp.pop %v3498
        %v3527 = vrcp.pop %v3501
        %v3528 = vrcp.pop %v3504
        %v3529 = vrcp.pop %v3507
        %v3530 = vrcp.pop %v3510
        %v3531 = vrcp.pop %v3513
        %v3532 = vrcp.pop %v3516
        %v3533 = vmul.f32 %v3438, %v3517
        %v3534 = vmul.f32 %v3440, %v3518
        %v3535 = vmul.f32 %v3442, %v3519
        %v3536 = vmul.f32 %v3444, %v3520
        %v3537 = vmul.f32 %v3446, %v3521
        %v3538 = vmul.f32 %v3448, %v3522
        %v3539 = vmul.f32 %v3450, %v3523
        %v3540 = vmul.f32 %v3452, %v3524
        %v3541 = vmul.f32 %v3454, %v3525
        %v3542 = vmul.f32 %v3456, %v3526
        %v3543 = vmul.f32 %v3458, %v3527
        %v3544 = vmul.f32 %v3460, %v3528
        %v3545 = vmul.f32 %v3462, %v3529
        %v3546 = vmul.f32 %v3464, %v3530
        %v3547 = vmul.f32 %v3466, %v3531
        %v3548 = vmul.f32 %v3468, %v3532
        %v3549 = vpack.c.bf16 %v3534, %v3533
        %v3550 = vpack.c.bf16 %v3536, %v3535
        %v3551 = vpack.c.bf16 %v3538, %v3537
        %v3552 = vpack.c.bf16 %v3540, %v3539
        %v3553 = vpack.c.bf16 %v3542, %v3541
        %v3554 = vpack.c.bf16 %v3544, %v3543
        %v3555 = vpack.c.bf16 %v3546, %v3545
        %v3556 = vpack.c.bf16 %v3548, %v3547
        %3557 = vrot.lane.b32.xlu0 %v761, 64
        %v3558 = vpop.permute.xlu0 %3557
        %v3561 = vsel %vm1148, %v3549, 0
        %3563 = vmatprep.subr.bf16.mxu0 0
        %3564 = vmatpush1.bf16.msra.mxu0 %v3558
        %3565 = vmatprep.subr.bf16.mxu0 0
        %3566 = vmatpush1.bf16.msra.mxu0 0
        %3567 = vmatprep.subr.bf16.mxu0 0
        %3568 = vmatpush1.bf16.msra.mxu0 0
        %3569 = vmatprep.subr.bf16.mxu0 0
        %3570 = vmatpush1.bf16.msra.mxu0 0
        %3571 = vmatprep.subr.bf16.mxu0 0
        %3572 = vmatpush1.bf16.msra.mxu0 0
        %3573 = vmatprep.subr.bf16.mxu0 0
        %3574 = vmatpush1.bf16.msra.mxu0 0
        %3575 = vmatprep.subr.bf16.mxu0 0
        %3576 = vmatpush1.bf16.msra.mxu0 0
        %3577 = vmatprep.subr.bf16.mxu0 0
        %3578 = vmatpush1.bf16.msra.mxu0 0
        %3579 = vmatprep.subr.bf16.mxu0 0
        %3580 = vmatpush1.bf16.msra.mxu0 0
        %3581 = vmatprep.subr.bf16.mxu0 0
        %3582 = vmatpush1.bf16.msra.mxu0 0
        %3583 = vmatprep.subr.bf16.mxu0 0
        %3584 = vmatpush1.bf16.msra.mxu0 0
        %3585 = vmatprep.subr.bf16.mxu0 0
        %3586 = vmatpush1.bf16.msra.mxu0 0
        %3587 = vmatprep.subr.bf16.mxu0 0
        %3588 = vmatpush1.bf16.msra.mxu0 0
        %3589 = vmatprep.subr.bf16.mxu0 0
        %3590 = vmatpush1.bf16.msra.mxu0 0
        %3591 = vmatprep.subr.bf16.mxu0 0
        %3592 = vmatpush1.bf16.msra.mxu0 0
        %3593 = vmatprep.subr.bf16.mxu0 0
        %3594 = vmatpush1.bf16.msra.mxu0 0
        %3595 = vmatprep.mubr.bf16.mxu0 0
        %3596 = vmatmul.mubr.bf16.gmra.mrb[0].mxu0 %v3561
        %v3597 = vpop.f32.mrb[0].mxu0
        %v3598 = vadd.f32 0.0, %v3597
        %v3599 = vpop.f32.mrb[0].mxu0
        %v3600 = vpop.f32.mrb[0].mxu0
        %v3601 = vadd.f32 0.0, %v3600
        %v3602 = vpop.f32.mrb[0].mxu0
        %3603 = vdwg.mxu0
        %3604 = vrot.lane.b32.xlu0 %v762, 64
        %v3605 = vpop.permute.xlu0 %3604
        %v3608 = vsel %vm1148, %v3550, 0
        %3610 = vmatprep.subr.bf16.mxu0 0
        %3611 = vmatpush1.bf16.msra.mxu0 %v3605
        %3612 = vmatprep.subr.bf16.mxu0 0
        %3613 = vmatpush1.bf16.msra.mxu0 0
        %3614 = vmatprep.subr.bf16.mxu0 0
        %3615 = vmatpush1.bf16.msra.mxu0 0
        %3616 = vmatprep.subr.bf16.mxu0 0
        %3617 = vmatpush1.bf16.msra.mxu0 0
        %3618 = vmatprep.subr.bf16.mxu0 0
        %3619 = vmatpush1.bf16.msra.mxu0 0
        %3620 = vmatprep.subr.bf16.mxu0 0
        %3621 = vmatpush1.bf16.msra.mxu0 0
        %3622 = vmatprep.subr.bf16.mxu0 0
        %3623 = vmatpush1.bf16.msra.mxu0 0
        %3624 = vmatprep.subr.bf16.mxu0 0
        %3625 = vmatpush1.bf16.msra.mxu0 0
        %3626 = vmatprep.subr.bf16.mxu0 0
        %3627 = vmatpush1.bf16.msra.mxu0 0
        %3628 = vmatprep.subr.bf16.mxu0 0
        %3629 = vmatpush1.bf16.msra.mxu0 0
        %3630 = vmatprep.subr.bf16.mxu0 0
        %3631 = vmatpush1.bf16.msra.mxu0 0
        %3632 = vmatprep.subr.bf16.mxu0 0
        %3633 = vmatpush1.bf16.msra.mxu0 0
        %3634 = vmatprep.subr.bf16.mxu0 0
        %3635 = vmatpush1.bf16.msra.mxu0 0
        %3636 = vmatprep.subr.bf16.mxu0 0
        %3637 = vmatpush1.bf16.msra.mxu0 0
        %3638 = vmatprep.subr.bf16.mxu0 0
        %3639 = vmatpush1.bf16.msra.mxu0 0
        %3640 = vmatprep.subr.bf16.mxu0 0
        %3641 = vmatpush1.bf16.msra.mxu0 0
        %3642 = vmatprep.mubr.bf16.mxu0 0
        %3643 = vmatmul.mubr.bf16.gmra.mrb[0].mxu0 %v3608
        %v3644 = vpop.f32.mrb[0].mxu0
        %v3645 = vadd.f32 0.0, %v3644
        %v3646 = vpop.f32.mrb[0].mxu0
        %v3647 = vpop.f32.mrb[0].mxu0
        %v3648 = vadd.f32 0.0, %v3647
        %v3649 = vpop.f32.mrb[0].mxu0
        %3650 = vdwg.mxu0
        %3651 = vrot.lane.b32.xlu0 %v763, 64
        %v3652 = vpop.permute.xlu0 %3651
        %v3655 = vsel %vm1148, %v3551, 0
        %3657 = vmatprep.subr.bf16.mxu0 0
        %3658 = vmatpush1.bf16.msra.mxu0 %v3652
        %3659 = vmatprep.subr.bf16.mxu0 0
        %3660 = vmatpush1.bf16.msra.mxu0 0
        %3661 = vmatprep.subr.bf16.mxu0 0
        %3662 = vmatpush1.bf16.msra.mxu0 0
        %3663 = vmatprep.subr.bf16.mxu0 0
        %3664 = vmatpush1.bf16.msra.mxu0 0
        %3665 = vmatprep.subr.bf16.mxu0 0
        %3666 = vmatpush1.bf16.msra.mxu0 0
        %3667 = vmatprep.subr.bf16.mxu0 0
        %3668 = vmatpush1.bf16.msra.mxu0 0
        %3669 = vmatprep.subr.bf16.mxu0 0
        %3670 = vmatpush1.bf16.msra.mxu0 0
        %3671 = vmatprep.subr.bf16.mxu0 0
        %3672 = vmatpush1.bf16.msra.mxu0 0
        %3673 = vmatprep.subr.bf16.mxu0 0
        %3674 = vmatpush1.bf16.msra.mxu0 0
        %3675 = vmatprep.subr.bf16.mxu0 0
        %3676 = vmatpush1.bf16.msra.mxu0 0
        %3677 = vmatprep.subr.bf16.mxu0 0
        %3678 = vmatpush1.bf16.msra.mxu0 0
        %3679 = vmatprep.subr.bf16.mxu0 0
        %3680 = vmatpush1.bf16.msra.mxu0 0
        %3681 = vmatprep.subr.bf16.mxu0 0
        %3682 = vmatpush1.bf16.msra.mxu0 0
        %3683 = vmatprep.subr.bf16.mxu0 0
        %3684 = vmatpush1.bf16.msra.mxu0 0
        %3685 = vmatprep.subr.bf16.mxu0 0
        %3686 = vmatpush1.bf16.msra.mxu0 0
        %3687 = vmatprep.subr.bf16.mxu0 0
        %3688 = vmatpush1.bf16.msra.mxu0 0
        %3689 = vmatprep.mubr.bf16.mxu0 0
        %3690 = vmatmul.mubr.bf16.gmra.mrb[0].mxu0 %v3655
        %v3691 = vpop.f32.mrb[0].mxu0
        %v3692 = vadd.f32 0.0, %v3691
        %v3693 = vpop.f32.mrb[0].mxu0
        %v3694 = vpop.f32.mrb[0].mxu0
        %v3695 = vadd.f32 0.0, %v3694
        %v3696 = vpop.f32.mrb[0].mxu0
        %3697 = vdwg.mxu0
        %3698 = vrot.lane.b32.xlu0 %v764, 64
        %v3699 = vpop.permute.xlu0 %3698
        %v3702 = vsel %vm1148, %v3552, 0
        %3704 = vmatprep.subr.bf16.mxu0 0
        %3705 = vmatpush1.bf16.msra.mxu0 %v3699
        %3706 = vmatprep.subr.bf16.mxu0 0
        %3707 = vmatpush1.bf16.msra.mxu0 0
        %3708 = vmatprep.subr.bf16.mxu0 0
        %3709 = vmatpush1.bf16.msra.mxu0 0
        %3710 = vmatprep.subr.bf16.mxu0 0
        %3711 = vmatpush1.bf16.msra.mxu0 0
        %3712 = vmatprep.subr.bf16.mxu0 0
        %3713 = vmatpush1.bf16.msra.mxu0 0
        %3714 = vmatprep.subr.bf16.mxu0 0
        %3715 = vmatpush1.bf16.msra.mxu0 0
        %3716 = vmatprep.subr.bf16.mxu0 0
        %3717 = vmatpush1.bf16.msra.mxu0 0
        %3718 = vmatprep.subr.bf16.mxu0 0
        %3719 = vmatpush1.bf16.msra.mxu0 0
        %3720 = vmatprep.subr.bf16.mxu0 0
        %3721 = vmatpush1.bf16.msra.mxu0 0
        %3722 = vmatprep.subr.bf16.mxu0 0
        %3723 = vmatpush1.bf16.msra.mxu0 0
        %3724 = vmatprep.subr.bf16.mxu0 0
        %3725 = vmatpush1.bf16.msra.mxu0 0
        %3726 = vmatprep.subr.bf16.mxu0 0
        %3727 = vmatpush1.bf16.msra.mxu0 0
        %3728 = vmatprep.subr.bf16.mxu0 0
        %3729 = vmatpush1.bf16.msra.mxu0 0
        %3730 = vmatprep.subr.bf16.mxu0 0
        %3731 = vmatpush1.bf16.msra.mxu0 0
        %3732 = vmatprep.subr.bf16.mxu0 0
        %3733 = vmatpush1.bf16.msra.mxu0 0
        %3734 = vmatprep.subr.bf16.mxu0 0
        %3735 = vmatpush1.bf16.msra.mxu0 0
        %3736 = vmatprep.mubr.bf16.mxu0 0
        %3737 = vmatmul.mubr.bf16.gmra.mrb[0].mxu0 %v3702
        %v3738 = vpop.f32.mrb[0].mxu0
        %v3739 = vadd.f32 0.0, %v3738
        %v3740 = vpop.f32.mrb[0].mxu0
        %v3741 = vpop.f32.mrb[0].mxu0
        %v3742 = vadd.f32 0.0, %v3741
        %v3743 = vpop.f32.mrb[0].mxu0
        %3744 = vdwg.mxu0
        %3745 = vrot.lane.b32.xlu0 %v765, 64
        %v3746 = vpop.permute.xlu0 %3745
        %v3749 = vsel %vm1148, %v3553, 0
        %3751 = vmatprep.subr.bf16.mxu0 0
        %3752 = vmatpush1.bf16.msra.mxu0 %v3746
        %3753 = vmatprep.subr.bf16.mxu0 0
        %3754 = vmatpush1.bf16.msra.mxu0 0
        %3755 = vmatprep.subr.bf16.mxu0 0
        %3756 = vmatpush1.bf16.msra.mxu0 0
        %3757 = vmatprep.subr.bf16.mxu0 0
        %3758 = vmatpush1.bf16.msra.mxu0 0
        %3759 = vmatprep.subr.bf16.mxu0 0
        %3760 = vmatpush1.bf16.msra.mxu0 0
        %3761 = vmatprep.subr.bf16.mxu0 0
        %3762 = vmatpush1.bf16.msra.mxu0 0
        %3763 = vmatprep.subr.bf16.mxu0 0
        %3764 = vmatpush1.bf16.msra.mxu0 0
        %3765 = vmatprep.subr.bf16.mxu0 0
        %3766 = vmatpush1.bf16.msra.mxu0 0
        %3767 = vmatprep.subr.bf16.mxu0 0
        %3768 = vmatpush1.bf16.msra.mxu0 0
        %3769 = vmatprep.subr.bf16.mxu0 0
        %3770 = vmatpush1.bf16.msra.mxu0 0
        %3771 = vmatprep.subr.bf16.mxu0 0
        %3772 = vmatpush1.bf16.msra.mxu0 0
        %3773 = vmatprep.subr.bf16.mxu0 0
        %3774 = vmatpush1.bf16.msra.mxu0 0
        %3775 = vmatprep.subr.bf16.mxu0 0
        %3776 = vmatpush1.bf16.msra.mxu0 0
        %3777 = vmatprep.subr.bf16.mxu0 0
        %3778 = vmatpush1.bf16.msra.mxu0 0
        %3779 = vmatprep.subr.bf16.mxu0 0
        %3780 = vmatpush1.bf16.msra.mxu0 0
        %3781 = vmatprep.subr.bf16.mxu0 0
        %3782 = vmatpush1.bf16.msra.mxu0 0
        %3783 = vmatprep.mubr.bf16.mxu0 0
        %3784 = vmatmul.mubr.bf16.gmra.mrb[0].mxu0 %v3749
        %v3785 = vpop.f32.mrb[0].mxu0
        %v3786 = vadd.f32 0.0, %v3785
        %v3787 = vpop.f32.mrb[0].mxu0
        %v3788 = vpop.f32.mrb[0].mxu0
        %v3789 = vadd.f32 0.0, %v3788
        %v3790 = vpop.f32.mrb[0].mxu0
        %3791 = vdwg.mxu0
        %3792 = vrot.lane.b32.xlu0 %v766, 64
        %v3793 = vpop.permute.xlu0 %3792
        %v3796 = vsel %vm1148, %v3554, 0
        %3798 = vmatprep.subr.bf16.mxu0 0
        %3799 = vmatpush1.bf16.msra.mxu0 %v3793
        %3800 = vmatprep.subr.bf16.mxu0 0
        %3801 = vmatpush1.bf16.msra.mxu0 0
        %3802 = vmatprep.subr.bf16.mxu0 0
        %3803 = vmatpush1.bf16.msra.mxu0 0
        %3804 = vmatprep.subr.bf16.mxu0 0
        %3805 = vmatpush1.bf16.msra.mxu0 0
        %3806 = vmatprep.subr.bf16.mxu0 0
        %3807 = vmatpush1.bf16.msra.mxu0 0
        %3808 = vmatprep.subr.bf16.mxu0 0
        %3809 = vmatpush1.bf16.msra.mxu0 0
        %3810 = vmatprep.subr.bf16.mxu0 0
        %3811 = vmatpush1.bf16.msra.mxu0 0
        %3812 = vmatprep.subr.bf16.mxu0 0
        %3813 = vmatpush1.bf16.msra.mxu0 0
        %3814 = vmatprep.subr.bf16.mxu0 0
        %3815 = vmatpush1.bf16.msra.mxu0 0
        %3816 = vmatprep.subr.bf16.mxu0 0
        %3817 = vmatpush1.bf16.msra.mxu0 0
        %3818 = vmatprep.subr.bf16.mxu0 0
        %3819 = vmatpush1.bf16.msra.mxu0 0
        %3820 = vmatprep.subr.bf16.mxu0 0
        %3821 = vmatpush1.bf16.msra.mxu0 0
        %3822 = vmatprep.subr.bf16.mxu0 0
        %3823 = vmatpush1.bf16.msra.mxu0 0
        %3824 = vmatprep.subr.bf16.mxu0 0
        %3825 = vmatpush1.bf16.msra.mxu0 0
        %3826 = vmatprep.subr.bf16.mxu0 0
        %3827 = vmatpush1.bf16.msra.mxu0 0
        %3828 = vmatprep.subr.bf16.mxu0 0
        %3829 = vmatpush1.bf16.msra.mxu0 0
        %3830 = vmatprep.mubr.bf16.mxu0 0
        %3831 = vmatmul.mubr.bf16.gmra.mrb[0].mxu0 %v3796
        %v3832 = vpop.f32.mrb[0].mxu0
        %v3833 = vadd.f32 0.0, %v3832
        %v3834 = vpop.f32.mrb[0].mxu0
        %v3835 = vpop.f32.mrb[0].mxu0
        %v3836 = vadd.f32 0.0, %v3835
        %v3837 = vpop.f32.mrb[0].mxu0
        %3838 = vdwg.mxu0
        %3839 = vrot.lane.b32.xlu0 %v767, 64
        %v3840 = vpop.permute.xlu0 %3839
        %v3843 = vsel %vm1148, %v3555, 0
        %3845 = vmatprep.subr.bf16.mxu0 0
        %3846 = vmatpush1.bf16.msra.mxu0 %v3840
        %3847 = vmatprep.subr.bf16.mxu0 0
        %3848 = vmatpush1.bf16.msra.mxu0 0
        %3849 = vmatprep.subr.bf16.mxu0 0
        %3850 = vmatpush1.bf16.msra.mxu0 0
        %3851 = vmatprep.subr.bf16.mxu0 0
        %3852 = vmatpush1.bf16.msra.mxu0 0
        %3853 = vmatprep.subr.bf16.mxu0 0
        %3854 = vmatpush1.bf16.msra.mxu0 0
        %3855 = vmatprep.subr.bf16.mxu0 0
        %3856 = vmatpush1.bf16.msra.mxu0 0
        %3857 = vmatprep.subr.bf16.mxu0 0
        %3858 = vmatpush1.bf16.msra.mxu0 0
        %3859 = vmatprep.subr.bf16.mxu0 0
        %3860 = vmatpush1.bf16.msra.mxu0 0
        %3861 = vmatprep.subr.bf16.mxu0 0
        %3862 = vmatpush1.bf16.msra.mxu0 0
        %3863 = vmatprep.subr.bf16.mxu0 0
        %3864 = vmatpush1.bf16.msra.mxu0 0
        %3865 = vmatprep.subr.bf16.mxu0 0
        %3866 = vmatpush1.bf16.msra.mxu0 0
        %3867 = vmatprep.subr.bf16.mxu0 0
        %3868 = vmatpush1.bf16.msra.mxu0 0
        %3869 = vmatprep.subr.bf16.mxu0 0
        %3870 = vmatpush1.bf16.msra.mxu0 0
        %3871 = vmatprep.subr.bf16.mxu0 0
        %3872 = vmatpush1.bf16.msra.mxu0 0
        %3873 = vmatprep.subr.bf16.mxu0 0
        %3874 = vmatpush1.bf16.msra.mxu0 0
        %3875 = vmatprep.subr.bf16.mxu0 0
        %3876 = vmatpush1.bf16.msra.mxu0 0
        %3877 = vmatprep.mubr.bf16.mxu0 0
        %3878 = vmatmul.mubr.bf16.gmra.mrb[0].mxu0 %v3843
        %v3879 = vpop.f32.mrb[0].mxu0
        %v3880 = vadd.f32 0.0, %v3879
        %v3881 = vpop.f32.mrb[0].mxu0
        %v3882 = vpop.f32.mrb[0].mxu0
        %v3883 = vadd.f32 0.0, %v3882
        %v3884 = vpop.f32.mrb[0].mxu0
        %3885 = vdwg.mxu0
        %3886 = vrot.lane.b32.xlu0 %v768, 64
        %v3887 = vpop.permute.xlu0 %3886
        %v3890 = vsel %vm1148, %v3556, 0
        %3892 = vmatprep.subr.bf16.mxu0 0
        %3893 = vmatpush1.bf16.msra.mxu0 %v3887
        %3894 = vmatprep.subr.bf16.mxu0 0
        %3895 = vmatpush1.bf16.msra.mxu0 0
        %3896 = vmatprep.subr.bf16.mxu0 0
        %3897 = vmatpush1.bf16.msra.mxu0 0
        %3898 = vmatprep.subr.bf16.mxu0 0
        %3899 = vmatpush1.bf16.msra.mxu0 0
        %3900 = vmatprep.subr.bf16.mxu0 0
        %3901 = vmatpush1.bf16.msra.mxu0 0
        %3902 = vmatprep.subr.bf16.mxu0 0
        %3903 = vmatpush1.bf16.msra.mxu0 0
        %3904 = vmatprep.subr.bf16.mxu0 0
        %3905 = vmatpush1.bf16.msra.mxu0 0
        %3906 = vmatprep.subr.bf16.mxu0 0
        %3907 = vmatpush1.bf16.msra.mxu0 0
        %3908 = vmatprep.subr.bf16.mxu0 0
        %3909 = vmatpush1.bf16.msra.mxu0 0
        %3910 = vmatprep.subr.bf16.mxu0 0
        %3911 = vmatpush1.bf16.msra.mxu0 0
        %3912 = vmatprep.subr.bf16.mxu0 0
        %3913 = vmatpush1.bf16.msra.mxu0 0
        %3914 = vmatprep.subr.bf16.mxu0 0
        %3915 = vmatpush1.bf16.msra.mxu0 0
        %3916 = vmatprep.subr.bf16.mxu0 0
        %3917 = vmatpush1.bf16.msra.mxu0 0
        %3918 = vmatprep.subr.bf16.mxu0 0
        %3919 = vmatpush1.bf16.msra.mxu0 0
        %3920 = vmatprep.subr.bf16.mxu0 0
        %3921 = vmatpush1.bf16.msra.mxu0 0
        %3922 = vmatprep.subr.bf16.mxu0 0
        %3923 = vmatpush1.bf16.msra.mxu0 0
        %3924 = vmatprep.mubr.bf16.mxu0 0
        %3925 = vmatmul.mubr.bf16.gmra.mrb[0].mxu0 %v3890
        %v3926 = vpop.f32.mrb[0].mxu0
        %v3927 = vadd.f32 0.0, %v3926
        %v3928 = vpop.f32.mrb[0].mxu0
        %v3929 = vpop.f32.mrb[0].mxu0
        %v3930 = vadd.f32 0.0, %v3929
        %v3931 = vpop.f32.mrb[0].mxu0
        %3932 = vdwg.mxu0
        %v3933 = vpack.c.bf16 %v3601, %v3598
        %v3934 = vpack.c.bf16 %v3648, %v3645
        %v3935 = vpack.c.bf16 %v3695, %v3692
        %v3936 = vpack.c.bf16 %v3742, %v3739
        %v3937 = vpack.c.bf16 %v3789, %v3786
        %v3938 = vpack.c.bf16 %v3836, %v3833
        %v3939 = vpack.c.bf16 %v3883, %v3880
        %v3940 = vpack.c.bf16 %v3930, %v3927
        %v3945 = vunpack.c.l.b16 %v737
        %v3946 = vunpack.c.l.b16 %v738
        %v3947 = vunpack.c.l.b16 %v739
        %v3948 = vunpack.c.l.b16 %v740
        %v3949 = vpack.c.b16 %v3946, %v3945
        %v3950 = vpack.c.b16 %v3948, %v3947
        %v3954 = vsel %vm771, %v3933, 0
        %v3957 = vsel %vm771, %v3934, 0
        %v3960 = vsel %vm771, %v3935, 0
        %v3963 = vsel %vm771, %v3936, 0
        %v3966 = vsel %vm771, %v3937, 0
        %v3969 = vsel %vm771, %v3938, 0
        %v3972 = vsel %vm771, %v3939, 0
        %v3975 = vsel %vm771, %v3940, 0
        %3977 = vmatprep.subr.bf16.mxu0 0
        %3978 = vmatpush1.bf16.msra.mxu0 %v3949
        %3979 = vmatprep.subr.bf16.mxu0 0
        %3980 = vmatpush1.bf16.msra.mxu0 %v3950
        %3981 = vmatprep.subr.bf16.mxu0 0
        %3982 = vmatpush1.bf16.msra.mxu0 0
        %3983 = vmatprep.subr.bf16.mxu0 0
        %3984 = vmatpush1.bf16.msra.mxu0 0
        %3985 = vmatprep.subr.bf16.mxu0 0
        %3986 = vmatpush1.bf16.msra.mxu0 0
        %3987 = vmatprep.subr.bf16.mxu0 0
        %3988 = vmatpush1.bf16.msra.mxu0 0
        %3989 = vmatprep.subr.bf16.mxu0 0
        %3990 = vmatpush1.bf16.msra.mxu0 0
        %3991 = vmatprep.subr.bf16.mxu0 0
        %3992 = vmatpush1.bf16.msra.mxu0 0
        %3993 = vmatprep.subr.bf16.mxu0 0
        %3994 = vmatpush1.bf16.msra.mxu0 0
        %3995 = vmatprep.subr.bf16.mxu0 0
        %3996 = vmatpush1.bf16.msra.mxu0 0
        %3997 = vmatprep.subr.bf16.mxu0 0
        %3998 = vmatpush1.bf16.msra.mxu0 0
        %3999 = vmatprep.subr.bf16.mxu0 0
        %4000 = vmatpush1.bf16.msra.mxu0 0
        %4001 = vmatprep.subr.bf16.mxu0 0
        %4002 = vmatpush1.bf16.msra.mxu0 0
        %4003 = vmatprep.subr.bf16.mxu0 0
        %4004 = vmatpush1.bf16.msra.mxu0 0
        %4005 = vmatprep.subr.bf16.mxu0 0
        %4006 = vmatpush1.bf16.msra.mxu0 0
        %4007 = vmatprep.subr.bf16.mxu0 0
        %4008 = vmatpush1.bf16.msra.mxu0 0
        %4009 = vmatprep.mubr.bf16.mxu0 0
        %4010 = vmatmul.mubr.bf16.gmra.mrb[0].mxu0 %v3954
        %v4011 = vpop.f32.mrb[0].mxu0
        %v4012 = vadd.f32 0.0, %v4011
        %v4013 = vpop.f32.mrb[0].mxu0
        %v4014 = vpop.f32.mrb[0].mxu0
        %v4015 = vadd.f32 0.0, %v4014
        %v4016 = vpop.f32.mrb[0].mxu0
        %4017 = vmatprep.mubr.bf16.mxu0 0
        %4018 = vmatmul.mubr.bf16.gmra.mrb[0].mxu0 %v3957
        %v4019 = vpop.f32.mrb[0].mxu0
        %v4020 = vadd.f32 0.0, %v4019
        %v4021 = vpop.f32.mrb[0].mxu0
        %v4022 = vpop.f32.mrb[0].mxu0
        %v4023 = vadd.f32 0.0, %v4022
        %v4024 = vpop.f32.mrb[0].mxu0
        %4025 = vmatprep.mubr.bf16.mxu0 0
        %4026 = vmatmul.mubr.bf16.gmra.mrb[0].mxu0 %v3960
        %v4027 = vpop.f32.mrb[0].mxu0
        %v4028 = vadd.f32 0.0, %v4027
        %v4029 = vpop.f32.mrb[0].mxu0
        %v4030 = vpop.f32.mrb[0].mxu0
        %v4031 = vadd.f32 0.0, %v4030
        %v4032 = vpop.f32.mrb[0].mxu0
        %4033 = vmatprep.mubr.bf16.mxu0 0
        %4034 = vmatmul.mubr.bf16.gmra.mrb[0].mxu0 %v3963
        %v4035 = vpop.f32.mrb[0].mxu0
        %v4036 = vadd.f32 0.0, %v4035
        %v4037 = vpop.f32.mrb[0].mxu0
        %v4038 = vpop.f32.mrb[0].mxu0
        %v4039 = vadd.f32 0.0, %v4038
        %v4040 = vpop.f32.mrb[0].mxu0
        %4041 = vmatprep.mubr.bf16.mxu0 0
        %4042 = vmatmul.mubr.bf16.gmra.mrb[0].mxu0 %v3966
        %v4043 = vpop.f32.mrb[0].mxu0
        %v4044 = vadd.f32 0.0, %v4043
        %v4045 = vpop.f32.mrb[0].mxu0
        %v4046 = vpop.f32.mrb[0].mxu0
        %v4047 = vadd.f32 0.0, %v4046
        %v4048 = vpop.f32.mrb[0].mxu0
        %4049 = vmatprep.mubr.bf16.mxu0 0
        %4050 = vmatmul.mubr.bf16.gmra.mrb[0].mxu0 %v3969
        %v4051 = vpop.f32.mrb[0].mxu0
        %v4052 = vadd.f32 0.0, %v4051
        %v4053 = vpop.f32.mrb[0].mxu0
        %v4054 = vpop.f32.mrb[0].mxu0
        %v4055 = vadd.f32 0.0, %v4054
        %v4056 = vpop.f32.mrb[0].mxu0
        %4057 = vmatprep.mubr.bf16.mxu0 0
        %4058 = vmatmul.mubr.bf16.gmra.mrb[0].mxu0 %v3972
        %v4059 = vpop.f32.mrb[0].mxu0
        %v4060 = vadd.f32 0.0, %v4059
        %v4061 = vpop.f32.mrb[0].mxu0
        %v4062 = vpop.f32.mrb[0].mxu0
        %v4063 = vadd.f32 0.0, %v4062
        %v4064 = vpop.f32.mrb[0].mxu0
        %4065 = vmatprep.mubr.bf16.mxu0 0
        %4066 = vmatmul.mubr.bf16.gmra.mrb[0].mxu0 %v3975
        %v4067 = vpop.f32.mrb[0].mxu0
        %v4068 = vadd.f32 0.0, %v4067
        %v4069 = vpop.f32.mrb[0].mxu0
        %v4070 = vpop.f32.mrb[0].mxu0
        %v4071 = vadd.f32 0.0, %v4070
        %v4072 = vpop.f32.mrb[0].mxu0
        %4073 = vdwg.mxu0
        %v4074 = vadd.f32 %v2900, %v4012
        %v4075 = vadd.f32 %v2903, %v4015
        %v4076 = vadd.f32 %v2908, %v4020
        %v4077 = vadd.f32 %v2911, %v4023
        %v4078 = vadd.f32 %v2916, %v4028
        %v4079 = vadd.f32 %v2919, %v4031
        %v4080 = vadd.f32 %v2924, %v4036
        %v4081 = vadd.f32 %v2927, %v4039
        %v4082 = vadd.f32 %v2932, %v4044
        %v4083 = vadd.f32 %v2935, %v4047
        %v4084 = vadd.f32 %v2940, %v4052
        %v4085 = vadd.f32 %v2943, %v4055
        %v4086 = vadd.f32 %v2948, %v4060
        %v4087 = vadd.f32 %v2951, %v4063
        %v4088 = vadd.f32 %v2956, %v4068
        %v4089 = vadd.f32 %v2959, %v4071
        %s4090 = scalar_lea.vmem [#allocation7], 48
        %v4091 = vld [vmem:[%s4090] sm:$0xff]
        %v4092 = vld [vmem:[%s4090 + $0x8] sm:$0xff]
        %4093 = vrot.lane.b32.xlu0 %v745, 32
        %v4094 = vpop.permute.xlu0 %4093
        %4095 = vrot.lane.b32.xlu0 %v753, 32
        %v4096 = vpop.permute.xlu0 %4095
        %v4098 = vsel %vm771, %v4094, 0
        %v4101 = vsel %vm771, %v4096, 0
        %4103 = vmatprep.subr.bf16.mxu0 0
        %4104 = vmatpush1.bf16.xpose.msra.mxu0 %v4101
        %4105 = vmatprep.subr.bf16.mxu0 0
        %4106 = vmatpush1.bf16.xpose.msra.mxu0 0
        %4107 = vmatprep.subr.bf16.mxu0 0
        %4108 = vmatpush1.bf16.xpose.msra.mxu0 0
        %4109 = vmatprep.subr.bf16.mxu0 0
        %4110 = vmatpush1.bf16.xpose.msra.mxu0 0
        %4111 = vmatprep.subr.bf16.mxu0 0
        %4112 = vmatpush1.bf16.xpose.msra.mxu0 0
        %4113 = vmatprep.subr.bf16.mxu0 0
        %4114 = vmatpush1.bf16.xpose.msra.mxu0 0
        %4115 = vmatprep.subr.bf16.mxu0 0
        %4116 = vmatpush1.bf16.xpose.msra.mxu0 0
        %4117 = vmatprep.subr.bf16.mxu0 0
        %4118 = vmatpush1.bf16.xpose.msra.mxu0 0
        %4119 = vmatprep.subr.bf16.mxu0 0
        %4120 = vmatpush1.bf16.xpose.msra.mxu0 0
        %4121 = vmatprep.subr.bf16.mxu0 0
        %4122 = vmatpush1.bf16.xpose.msra.mxu0 0
        %4123 = vmatprep.subr.bf16.mxu0 0
        %4124 = vmatpush1.bf16.xpose.msra.mxu0 0
        %4125 = vmatprep.subr.bf16.mxu0 0
        %4126 = vmatpush1.bf16.xpose.msra.mxu0 0
        %4127 = vmatprep.subr.bf16.mxu0 0
        %4128 = vmatpush1.bf16.xpose.msra.mxu0 0
        %4129 = vmatprep.subr.bf16.mxu0 0
        %4130 = vmatpush1.bf16.xpose.msra.mxu0 0
        %4131 = vmatprep.subr.bf16.mxu0 0
        %4132 = vmatpush1.bf16.xpose.msra.mxu0 0
        %4133 = vmatprep.subr.bf16.mxu0 0
        %4134 = vmatpush1.bf16.xpose.msra.mxu0 0
        %4135 = vmatprep.mubr.bf16.mxu0 0
        %4136 = vmatmul.mubr.bf16.gmra.mrb[0].mxu0 %v4098
        %v4137 = vpop.f32.mrb[0].mxu0
        %v4138 = vadd.f32 %v4091, %v4137
        %v4139 = vpop.f32.mrb[0].mxu0
        %v4140 = vpop.f32.mrb[0].mxu0
        %v4141 = vadd.f32 %v4092, %v4140
        %v4142 = vpop.f32.mrb[0].mxu0
        %4143 = vdwg.mxu0
        %4144 = vrot.lane.b32.xlu0 %v746, 32
        %v4145 = vpop.permute.xlu0 %4144
        %4146 = vrot.lane.b32.xlu0 %v754, 32
        %v4147 = vpop.permute.xlu0 %4146
        %v4149 = vsel %vm771, %v4145, 0
        %v4152 = vsel %vm771, %v4147, 0
        %4154 = vmatprep.subr.bf16.mxu0 0
        %4155 = vmatpush1.bf16.xpose.msra.mxu0 %v4152
        %4156 = vmatprep.subr.bf16.mxu0 0
        %4157 = vmatpush1.bf16.xpose.msra.mxu0 0
        %4158 = vmatprep.subr.bf16.mxu0 0
        %4159 = vmatpush1.bf16.xpose.msra.mxu0 0
        %4160 = vmatprep.subr.bf16.mxu0 0
        %4161 = vmatpush1.bf16.xpose.msra.mxu0 0
        %4162 = vmatprep.subr.bf16.mxu0 0
        %4163 = vmatpush1.bf16.xpose.msra.mxu0 0
        %4164 = vmatprep.subr.bf16.mxu0 0
        %4165 = vmatpush1.bf16.xpose.msra.mxu0 0
        %4166 = vmatprep.subr.bf16.mxu0 0
        %4167 = vmatpush1.bf16.xpose.msra.mxu0 0
        %4168 = vmatprep.subr.bf16.mxu0 0
        %4169 = vmatpush1.bf16.xpose.msra.mxu0 0
        %4170 = vmatprep.subr.bf16.mxu0 0
        %4171 = vmatpush1.bf16.xpose.msra.mxu0 0
        %4172 = vmatprep.subr.bf16.mxu0 0
        %4173 = vmatpush1.bf16.xpose.msra.mxu0 0
        %4174 = vmatprep.subr.bf16.mxu0 0
        %4175 = vmatpush1.bf16.xpose.msra.mxu0 0
        %4176 = vmatprep.subr.bf16.mxu0 0
        %4177 = vmatpush1.bf16.xpose.msra.mxu0 0
        %4178 = vmatprep.subr.bf16.mxu0 0
        %4179 = vmatpush1.bf16.xpose.msra.mxu0 0
        %4180 = vmatprep.subr.bf16.mxu0 0
        %4181 = vmatpush1.bf16.xpose.msra.mxu0 0
        %4182 = vmatprep.subr.bf16.mxu0 0
        %4183 = vmatpush1.bf16.xpose.msra.mxu0 0
        %4184 = vmatprep.subr.bf16.mxu0 0
        %4185 = vmatpush1.bf16.xpose.msra.mxu0 0
        %4186 = vmatprep.mubr.bf16.mxu0 0
        %4187 = vmatmul.mubr.bf16.gmra.mrb[0].mxu0 %v4149
        %v4188 = vpop.f32.mrb[0].mxu0
        %v4189 = vadd.f32 %v4091, %v4188
        %v4190 = vpop.f32.mrb[0].mxu0
        %v4191 = vpop.f32.mrb[0].mxu0
        %v4192 = vadd.f32 %v4092, %v4191
        %v4193 = vpop.f32.mrb[0].mxu0
        %4194 = vdwg.mxu0
        %4195 = vrot.lane.b32.xlu0 %v747, 32
        %v4196 = vpop.permute.xlu0 %4195
        %4197 = vrot.lane.b32.xlu0 %v755, 32
        %v4198 = vpop.permute.xlu0 %4197
        %v4200 = vsel %vm771, %v4196, 0
        %v4203 = vsel %vm771, %v4198, 0
        %4205 = vmatprep.subr.bf16.mxu0 0
        %4206 = vmatpush1.bf16.xpose.msra.mxu0 %v4203
        %4207 = vmatprep.subr.bf16.mxu0 0
        %4208 = vmatpush1.bf16.xpose.msra.mxu0 0
        %4209 = vmatprep.subr.bf16.mxu0 0
        %4210 = vmatpush1.bf16.xpose.msra.mxu0 0
        %4211 = vmatprep.subr.bf16.mxu0 0
        %4212 = vmatpush1.bf16.xpose.msra.mxu0 0
        %4213 = vmatprep.subr.bf16.mxu0 0
        %4214 = vmatpush1.bf16.xpose.msra.mxu0 0
        %4215 = vmatprep.subr.bf16.mxu0 0
        %4216 = vmatpush1.bf16.xpose.msra.mxu0 0
        %4217 = vmatprep.subr.bf16.mxu0 0
        %4218 = vmatpush1.bf16.xpose.msra.mxu0 0
        %4219 = vmatprep.subr.bf16.mxu0 0
        %4220 = vmatpush1.bf16.xpose.msra.mxu0 0
        %4221 = vmatprep.subr.bf16.mxu0 0
        %4222 = vmatpush1.bf16.xpose.msra.mxu0 0
        %4223 = vmatprep.subr.bf16.mxu0 0
        %4224 = vmatpush1.bf16.xpose.msra.mxu0 0
        %4225 = vmatprep.subr.bf16.mxu0 0
        %4226 = vmatpush1.bf16.xpose.msra.mxu0 0
        %4227 = vmatprep.subr.bf16.mxu0 0
        %4228 = vmatpush1.bf16.xpose.msra.mxu0 0
        %4229 = vmatprep.subr.bf16.mxu0 0
        %4230 = vmatpush1.bf16.xpose.msra.mxu0 0
        %4231 = vmatprep.subr.bf16.mxu0 0
        %4232 = vmatpush1.bf16.xpose.msra.mxu0 0
        %4233 = vmatprep.subr.bf16.mxu0 0
        %4234 = vmatpush1.bf16.xpose.msra.mxu0 0
        %4235 = vmatprep.subr.bf16.mxu0 0
        %4236 = vmatpush1.bf16.xpose.msra.mxu0 0
        %4237 = vmatprep.mubr.bf16.mxu0 0
        %4238 = vmatmul.mubr.bf16.gmra.mrb[0].mxu0 %v4200
        %v4239 = vpop.f32.mrb[0].mxu0
        %v4240 = vadd.f32 %v4091, %v4239
        %v4241 = vpop.f32.mrb[0].mxu0
        %v4242 = vpop.f32.mrb[0].mxu0
        %v4243 = vadd.f32 %v4092, %v4242
        %v4244 = vpop.f32.mrb[0].mxu0
        %4245 = vdwg.mxu0
        %4246 = vrot.lane.b32.xlu0 %v748, 32
        %v4247 = vpop.permute.xlu0 %4246
        %4248 = vrot.lane.b32.xlu0 %v756, 32
        %v4249 = vpop.permute.xlu0 %4248
        %v4251 = vsel %vm771, %v4247, 0
        %v4254 = vsel %vm771, %v4249, 0
        %4256 = vmatprep.subr.bf16.mxu0 0
        %4257 = vmatpush1.bf16.xpose.msra.mxu0 %v4254
        %4258 = vmatprep.subr.bf16.mxu0 0
        %4259 = vmatpush1.bf16.xpose.msra.mxu0 0
        %4260 = vmatprep.subr.bf16.mxu0 0
        %4261 = vmatpush1.bf16.xpose.msra.mxu0 0
        %4262 = vmatprep.subr.bf16.mxu0 0
        %4263 = vmatpush1.bf16.xpose.msra.mxu0 0
        %4264 = vmatprep.subr.bf16.mxu0 0
        %4265 = vmatpush1.bf16.xpose.msra.mxu0 0
        %4266 = vmatprep.subr.bf16.mxu0 0
        %4267 = vmatpush1.bf16.xpose.msra.mxu0 0
        %4268 = vmatprep.subr.bf16.mxu0 0
        %4269 = vmatpush1.bf16.xpose.msra.mxu0 0
        %4270 = vmatprep.subr.bf16.mxu0 0
        %4271 = vmatpush1.bf16.xpose.msra.mxu0 0
        %4272 = vmatprep.subr.bf16.mxu0 0
        %4273 = vmatpush1.bf16.xpose.msra.mxu0 0
        %4274 = vmatprep.subr.bf16.mxu0 0
        %4275 = vmatpush1.bf16.xpose.msra.mxu0 0
        %4276 = vmatprep.subr.bf16.mxu0 0
        %4277 = vmatpush1.bf16.xpose.msra.mxu0 0
        %4278 = vmatprep.subr.bf16.mxu0 0
        %4279 = vmatpush1.bf16.xpose.msra.mxu0 0
        %4280 = vmatprep.subr.bf16.mxu0 0
        %4281 = vmatpush1.bf16.xpose.msra.mxu0 0
        %4282 = vmatprep.subr.bf16.mxu0 0
        %4283 = vmatpush1.bf16.xpose.msra.mxu0 0
        %4284 = vmatprep.subr.bf16.mxu0 0
        %4285 = vmatpush1.bf16.xpose.msra.mxu0 0
        %4286 = vmatprep.subr.bf16.mxu0 0
        %4287 = vmatpush1.bf16.xpose.msra.mxu0 0
        %4288 = vmatprep.mubr.bf16.mxu0 0
        %4289 = vmatmul.mubr.bf16.gmra.mrb[0].mxu0 %v4251
        %v4290 = vpop.f32.mrb[0].mxu0
        %v4291 = vadd.f32 %v4091, %v4290
        %v4292 = vpop.f32.mrb[0].mxu0
        %v4293 = vpop.f32.mrb[0].mxu0
        %v4294 = vadd.f32 %v4092, %v4293
        %v4295 = vpop.f32.mrb[0].mxu0
        %4296 = vdwg.mxu0
        %4297 = vrot.lane.b32.xlu0 %v749, 32
        %v4298 = vpop.permute.xlu0 %4297
        %4299 = vrot.lane.b32.xlu0 %v757, 32
        %v4300 = vpop.permute.xlu0 %4299
        %v4302 = vsel %vm771, %v4298, 0
        %v4305 = vsel %vm771, %v4300, 0
        %4307 = vmatprep.subr.bf16.mxu0 0
        %4308 = vmatpush1.bf16.xpose.msra.mxu0 %v4305
        %4309 = vmatprep.subr.bf16.mxu0 0
        %4310 = vmatpush1.bf16.xpose.msra.mxu0 0
        %4311 = vmatprep.subr.bf16.mxu0 0
        %4312 = vmatpush1.bf16.xpose.msra.mxu0 0
        %4313 = vmatprep.subr.bf16.mxu0 0
        %4314 = vmatpush1.bf16.xpose.msra.mxu0 0
        %4315 = vmatprep.subr.bf16.mxu0 0
        %4316 = vmatpush1.bf16.xpose.msra.mxu0 0
        %4317 = vmatprep.subr.bf16.mxu0 0
        %4318 = vmatpush1.bf16.xpose.msra.mxu0 0
        %4319 = vmatprep.subr.bf16.mxu0 0
        %4320 = vmatpush1.bf16.xpose.msra.mxu0 0
        %4321 = vmatprep.subr.bf16.mxu0 0
        %4322 = vmatpush1.bf16.xpose.msra.mxu0 0
        %4323 = vmatprep.subr.bf16.mxu0 0
        %4324 = vmatpush1.bf16.xpose.msra.mxu0 0
        %4325 = vmatprep.subr.bf16.mxu0 0
        %4326 = vmatpush1.bf16.xpose.msra.mxu0 0
        %4327 = vmatprep.subr.bf16.mxu0 0
        %4328 = vmatpush1.bf16.xpose.msra.mxu0 0
        %4329 = vmatprep.subr.bf16.mxu0 0
        %4330 = vmatpush1.bf16.xpose.msra.mxu0 0
        %4331 = vmatprep.subr.bf16.mxu0 0
        %4332 = vmatpush1.bf16.xpose.msra.mxu0 0
        %4333 = vmatprep.subr.bf16.mxu0 0
        %4334 = vmatpush1.bf16.xpose.msra.mxu0 0
        %4335 = vmatprep.subr.bf16.mxu0 0
        %4336 = vmatpush1.bf16.xpose.msra.mxu0 0
        %4337 = vmatprep.subr.bf16.mxu0 0
        %4338 = vmatpush1.bf16.xpose.msra.mxu0 0
        %4339 = vmatprep.mubr.bf16.mxu0 0
        %4340 = vmatmul.mubr.bf16.gmra.mrb[0].mxu0 %v4302
        %v4341 = vpop.f32.mrb[0].mxu0
        %v4342 = vadd.f32 %v4091, %v4341
        %v4343 = vpop.f32.mrb[0].mxu0
        %v4344 = vpop.f32.mrb[0].mxu0
        %v4345 = vadd.f32 %v4092, %v4344
        %v4346 = vpop.f32.mrb[0].mxu0
        %4347 = vdwg.mxu0
        %4348 = vrot.lane.b32.xlu0 %v750, 32
        %v4349 = vpop.permute.xlu0 %4348
        %4350 = vrot.lane.b32.xlu0 %v758, 32
        %v4351 = vpop.permute.xlu0 %4350
        %v4353 = vsel %vm771, %v4349, 0
        %v4356 = vsel %vm771, %v4351, 0
        %4358 = vmatprep.subr.bf16.mxu0 0
        %4359 = vmatpush1.bf16.xpose.msra.mxu0 %v4356
        %4360 = vmatprep.subr.bf16.mxu0 0
        %4361 = vmatpush1.bf16.xpose.msra.mxu0 0
        %4362 = vmatprep.subr.bf16.mxu0 0
        %4363 = vmatpush1.bf16.xpose.msra.mxu0 0
        %4364 = vmatprep.subr.bf16.mxu0 0
        %4365 = vmatpush1.bf16.xpose.msra.mxu0 0
        %4366 = vmatprep.subr.bf16.mxu0 0
        %4367 = vmatpush1.bf16.xpose.msra.mxu0 0
        %4368 = vmatprep.subr.bf16.mxu0 0
        %4369 = vmatpush1.bf16.xpose.msra.mxu0 0
        %4370 = vmatprep.subr.bf16.mxu0 0
        %4371 = vmatpush1.bf16.xpose.msra.mxu0 0
        %4372 = vmatprep.subr.bf16.mxu0 0
        %4373 = vmatpush1.bf16.xpose.msra.mxu0 0
        %4374 = vmatprep.subr.bf16.mxu0 0
        %4375 = vmatpush1.bf16.xpose.msra.mxu0 0
        %4376 = vmatprep.subr.bf16.mxu0 0
        %4377 = vmatpush1.bf16.xpose.msra.mxu0 0
        %4378 = vmatprep.subr.bf16.mxu0 0
        %4379 = vmatpush1.bf16.xpose.msra.mxu0 0
        %4380 = vmatprep.subr.bf16.mxu0 0
        %4381 = vmatpush1.bf16.xpose.msra.mxu0 0
        %4382 = vmatprep.subr.bf16.mxu0 0
        %4383 = vmatpush1.bf16.xpose.msra.mxu0 0
        %4384 = vmatprep.subr.bf16.mxu0 0
        %4385 = vmatpush1.bf16.xpose.msra.mxu0 0
        %4386 = vmatprep.subr.bf16.mxu0 0
        %4387 = vmatpush1.bf16.xpose.msra.mxu0 0
        %4388 = vmatprep.subr.bf16.mxu0 0
        %4389 = vmatpush1.bf16.xpose.msra.mxu0 0
        %4390 = vmatprep.mubr.bf16.mxu0 0
        %4391 = vmatmul.mubr.bf16.gmra.mrb[0].mxu0 %v4353
        %v4392 = vpop.f32.mrb[0].mxu0
        %v4393 = vadd.f32 %v4091, %v4392
        %v4394 = vpop.f32.mrb[0].mxu0
        %v4395 = vpop.f32.mrb[0].mxu0
        %v4396 = vadd.f32 %v4092, %v4395
        %v4397 = vpop.f32.mrb[0].mxu0
        %4398 = vdwg.mxu0
        %4399 = vrot.lane.b32.xlu0 %v751, 32
        %v4400 = vpop.permute.xlu0 %4399
        %4401 = vrot.lane.b32.xlu0 %v759, 32
        %v4402 = vpop.permute.xlu0 %4401
        %v4404 = vsel %vm771, %v4400, 0
        %v4407 = vsel %vm771, %v4402, 0
        %4409 = vmatprep.subr.bf16.mxu0 0
        %4410 = vmatpush1.bf16.xpose.msra.mxu0 %v4407
        %4411 = vmatprep.subr.bf16.mxu0 0
        %4412 = vmatpush1.bf16.xpose.msra.mxu0 0
        %4413 = vmatprep.subr.bf16.mxu0 0
        %4414 = vmatpush1.bf16.xpose.msra.mxu0 0
        %4415 = vmatprep.subr.bf16.mxu0 0
        %4416 = vmatpush1.bf16.xpose.msra.mxu0 0
        %4417 = vmatprep.subr.bf16.mxu0 0
        %4418 = vmatpush1.bf16.xpose.msra.mxu0 0
        %4419 = vmatprep.subr.bf16.mxu0 0
        %4420 = vmatpush1.bf16.xpose.msra.mxu0 0
        %4421 = vmatprep.subr.bf16.mxu0 0
        %4422 = vmatpush1.bf16.xpose.msra.mxu0 0
        %4423 = vmatprep.subr.bf16.mxu0 0
        %4424 = vmatpush1.bf16.xpose.msra.mxu0 0
        %4425 = vmatprep.subr.bf16.mxu0 0
        %4426 = vmatpush1.bf16.xpose.msra.mxu0 0
        %4427 = vmatprep.subr.bf16.mxu0 0
        %4428 = vmatpush1.bf16.xpose.msra.mxu0 0
        %4429 = vmatprep.subr.bf16.mxu0 0
        %4430 = vmatpush1.bf16.xpose.msra.mxu0 0
        %4431 = vmatprep.subr.bf16.mxu0 0
        %4432 = vmatpush1.bf16.xpose.msra.mxu0 0
        %4433 = vmatprep.subr.bf16.mxu0 0
        %4434 = vmatpush1.bf16.xpose.msra.mxu0 0
        %4435 = vmatprep.subr.bf16.mxu0 0
        %4436 = vmatpush1.bf16.xpose.msra.mxu0 0
        %4437 = vmatprep.subr.bf16.mxu0 0
        %4438 = vmatpush1.bf16.xpose.msra.mxu0 0
        %4439 = vmatprep.subr.bf16.mxu0 0
        %4440 = vmatpush1.bf16.xpose.msra.mxu0 0
        %4441 = vmatprep.mubr.bf16.mxu0 0
        %4442 = vmatmul.mubr.bf16.gmra.mrb[0].mxu0 %v4404
        %v4443 = vpop.f32.mrb[0].mxu0
        %v4444 = vadd.f32 %v4091, %v4443
        %v4445 = vpop.f32.mrb[0].mxu0
        %v4446 = vpop.f32.mrb[0].mxu0
        %v4447 = vadd.f32 %v4092, %v4446
        %v4448 = vpop.f32.mrb[0].mxu0
        %4449 = vdwg.mxu0
        %4450 = vrot.lane.b32.xlu0 %v752, 32
        %v4451 = vpop.permute.xlu0 %4450
        %4452 = vrot.lane.b32.xlu0 %v760, 32
        %v4453 = vpop.permute.xlu0 %4452
        %v4455 = vsel %vm771, %v4451, 0
        %v4458 = vsel %vm771, %v4453, 0
        %4460 = vmatprep.subr.bf16.mxu0 0
        %4461 = vmatpush1.bf16.xpose.msra.mxu0 %v4458
        %4462 = vmatprep.subr.bf16.mxu0 0
        %4463 = vmatpush1.bf16.xpose.msra.mxu0 0
        %4464 = vmatprep.subr.bf16.mxu0 0
        %4465 = vmatpush1.bf16.xpose.msra.mxu0 0
        %4466 = vmatprep.subr.bf16.mxu0 0
        %4467 = vmatpush1.bf16.xpose.msra.mxu0 0
        %4468 = vmatprep.subr.bf16.mxu0 0
        %4469 = vmatpush1.bf16.xpose.msra.mxu0 0
        %4470 = vmatprep.subr.bf16.mxu0 0
        %4471 = vmatpush1.bf16.xpose.msra.mxu0 0
        %4472 = vmatprep.subr.bf16.mxu0 0
        %4473 = vmatpush1.bf16.xpose.msra.mxu0 0
        %4474 = vmatprep.subr.bf16.mxu0 0
        %4475 = vmatpush1.bf16.xpose.msra.mxu0 0
        %4476 = vmatprep.subr.bf16.mxu0 0
        %4477 = vmatpush1.bf16.xpose.msra.mxu0 0
        %4478 = vmatprep.subr.bf16.mxu0 0
        %4479 = vmatpush1.bf16.xpose.msra.mxu0 0
        %4480 = vmatprep.subr.bf16.mxu0 0
        %4481 = vmatpush1.bf16.xpose.msra.mxu0 0
        %4482 = vmatprep.subr.bf16.mxu0 0
        %4483 = vmatpush1.bf16.xpose.msra.mxu0 0
        %4484 = vmatprep.subr.bf16.mxu0 0
        %4485 = vmatpush1.bf16.xpose.msra.mxu0 0
        %4486 = vmatprep.subr.bf16.mxu0 0
        %4487 = vmatpush1.bf16.xpose.msra.mxu0 0
        %4488 = vmatprep.subr.bf16.mxu0 0
        %4489 = vmatpush1.bf16.xpose.msra.mxu0 0
        %4490 = vmatprep.subr.bf16.mxu0 0
        %4491 = vmatpush1.bf16.xpose.msra.mxu0 0
        %4492 = vmatprep.mubr.bf16.mxu0 0
        %4493 = vmatmul.mubr.bf16.gmra.mrb[0].mxu0 %v4455
        %v4494 = vpop.f32.mrb[0].mxu0
        %v4495 = vadd.f32 %v4091, %v4494
        %v4496 = vpop.f32.mrb[0].mxu0
        %v4497 = vpop.f32.mrb[0].mxu0
        %v4498 = vadd.f32 %v4092, %v4497
        %v4499 = vpop.f32.mrb[0].mxu0
        %4500 = vdwg.mxu0
        %v4501 = vsel %vm1148, %v4138, -inf
        %4502 = vmax.xlane.f32.xlu0 %v4501
        %v4503 = vpop.xlane.xlu0 %4502
        %v4504 = vsel %vm1148, %v4141, -inf
        %4505 = vmax.xlane.f32.xlu0 %v4504
        %v4506 = vpop.xlane.xlu0 %4505
        %v4507 = vsel %vm1148, %v4189, -inf
        %4508 = vmax.xlane.f32.xlu0 %v4507
        %v4509 = vpop.xlane.xlu0 %4508
        %v4510 = vsel %vm1148, %v4192, -inf
        %4511 = vmax.xlane.f32.xlu0 %v4510
        %v4512 = vpop.xlane.xlu0 %4511
        %v4513 = vsel %vm1148, %v4240, -inf
        %4514 = vmax.xlane.f32.xlu0 %v4513
        %v4515 = vpop.xlane.xlu0 %4514
        %v4516 = vsel %vm1148, %v4243, -inf
        %4517 = vmax.xlane.f32.xlu0 %v4516
        %v4518 = vpop.xlane.xlu0 %4517
        %v4519 = vsel %vm1148, %v4291, -inf
        %4520 = vmax.xlane.f32.xlu0 %v4519
        %v4521 = vpop.xlane.xlu0 %4520
        %v4522 = vsel %vm1148, %v4294, -inf
        %4523 = vmax.xlane.f32.xlu0 %v4522
        %v4524 = vpop.xlane.xlu0 %4523
        %v4525 = vsel %vm1148, %v4342, -inf
        %4526 = vmax.xlane.f32.xlu0 %v4525
        %v4527 = vpop.xlane.xlu0 %4526
        %v4528 = vsel %vm1148, %v4345, -inf
        %4529 = vmax.xlane.f32.xlu0 %v4528
        %v4530 = vpop.xlane.xlu0 %4529
        %v4531 = vsel %vm1148, %v4393, -inf
        %4532 = vmax.xlane.f32.xlu0 %v4531
        %v4533 = vpop.xlane.xlu0 %4532
        %v4534 = vsel %vm1148, %v4396, -inf
        %4535 = vmax.xlane.f32.xlu0 %v4534
        %v4536 = vpop.xlane.xlu0 %4535
        %v4537 = vsel %vm1148, %v4444, -inf
        %4538 = vmax.xlane.f32.xlu0 %v4537
        %v4539 = vpop.xlane.xlu0 %4538
        %v4540 = vsel %vm1148, %v4447, -inf
        %4541 = vmax.xlane.f32.xlu0 %v4540
        %v4542 = vpop.xlane.xlu0 %4541
        %v4543 = vsel %vm1148, %v4495, -inf
        %4544 = vmax.xlane.f32.xlu0 %v4543
        %v4545 = vpop.xlane.xlu0 %4544
        %v4546 = vsel %vm1148, %v4498, -inf
        %4547 = vmax.xlane.f32.xlu0 %v4546
        %v4548 = vpop.xlane.xlu0 %4547
        %v4549 = vsub.f32 %v4138, %v4503
        %v4550 = vsub.f32 %v4141, %v4506
        %v4551 = vsub.f32 %v4189, %v4509
        %v4552 = vsub.f32 %v4192, %v4512
        %v4553 = vsub.f32 %v4240, %v4515
        %v4554 = vsub.f32 %v4243, %v4518
        %v4555 = vsub.f32 %v4291, %v4521
        %v4556 = vsub.f32 %v4294, %v4524
        %v4557 = vsub.f32 %v4342, %v4527
        %v4558 = vsub.f32 %v4345, %v4530
        %v4559 = vsub.f32 %v4393, %v4533
        %v4560 = vsub.f32 %v4396, %v4536
        %v4561 = vsub.f32 %v4444, %v4539
        %v4562 = vsub.f32 %v4447, %v4542
        %v4563 = vsub.f32 %v4495, %v4545
        %v4564 = vsub.f32 %v4498, %v4548
        %v4565 = vmul.f32 %v4549, 1.442695
        %v4566 = vpow.pop %v4565
        %v4567 = vmul.f32 %v4550, 1.442695
        %v4568 = vpow.pop %v4567
        %v4569 = vmul.f32 %v4551, 1.442695
        %v4570 = vpow.pop %v4569
        %v4571 = vmul.f32 %v4552, 1.442695
        %v4572 = vpow.pop %v4571
        %v4573 = vmul.f32 %v4553, 1.442695
        %v4574 = vpow.pop %v4573
        %v4575 = vmul.f32 %v4554, 1.442695
        %v4576 = vpow.pop %v4575
        %v4577 = vmul.f32 %v4555, 1.442695
        %v4578 = vpow.pop %v4577
        %v4579 = vmul.f32 %v4556, 1.442695
        %v4580 = vpow.pop %v4579
        %v4581 = vmul.f32 %v4557, 1.442695
        %v4582 = vpow.pop %v4581
        %v4583 = vmul.f32 %v4558, 1.442695
        %v4584 = vpow.pop %v4583
        %v4585 = vmul.f32 %v4559, 1.442695
        %v4586 = vpow.pop %v4585
        %v4587 = vmul.f32 %v4560, 1.442695
        %v4588 = vpow.pop %v4587
        %v4589 = vmul.f32 %v4561, 1.442695
        %v4590 = vpow.pop %v4589
        %v4591 = vmul.f32 %v4562, 1.442695
        %v4592 = vpow.pop %v4591
        %v4593 = vmul.f32 %v4563, 1.442695
        %v4594 = vpow.pop %v4593
        %v4595 = vmul.f32 %v4564, 1.442695
        %v4596 = vpow.pop %v4595
        %v4597 = vsel %vm1148, %v4566, 0.0
        %4598 = vadd.xlane.f32.xlu0 %v4597
        %v4599 = vpop.xlane.xlu0 %4598
        %v4600 = vsel %vm1148, %v4568, 0.0
        %4601 = vadd.xlane.f32.xlu0 %v4600
        %v4602 = vpop.xlane.xlu0 %4601
        %v4603 = vsel %vm1148, %v4570, 0.0
        %4604 = vadd.xlane.f32.xlu0 %v4603
        %v4605 = vpop.xlane.xlu0 %4604
        %v4606 = vsel %vm1148, %v4572, 0.0
        %4607 = vadd.xlane.f32.xlu0 %v4606
        %v4608 = vpop.xlane.xlu0 %4607
        %v4609 = vsel %vm1148, %v4574, 0.0
        %4610 = vadd.xlane.f32.xlu0 %v4609
        %v4611 = vpop.xlane.xlu0 %4610
        %v4612 = vsel %vm1148, %v4576, 0.0
        %4613 = vadd.xlane.f32.xlu0 %v4612
        %v4614 = vpop.xlane.xlu0 %4613
        %v4615 = vsel %vm1148, %v4578, 0.0
        %4616 = vadd.xlane.f32.xlu0 %v4615
        %v4617 = vpop.xlane.xlu0 %4616
        %v4618 = vsel %vm1148, %v4580, 0.0
        %4619 = vadd.xlane.f32.xlu0 %v4618
        %v4620 = vpop.xlane.xlu0 %4619
        %v4621 = vsel %vm1148, %v4582, 0.0
        %4622 = vadd.xlane.f32.xlu0 %v4621
        %v4623 = vpop.xlane.xlu0 %4622
        %v4624 = vsel %vm1148, %v4584, 0.0
        %4625 = vadd.xlane.f32.xlu0 %v4624
        %v4626 = vpop.xlane.xlu0 %4625
        %v4627 = vsel %vm1148, %v4586, 0.0
        %4628 = vadd.xlane.f32.xlu0 %v4627
        %v4629 = vpop.xlane.xlu0 %4628
        %v4630 = vsel %vm1148, %v4588, 0.0
        %4631 = vadd.xlane.f32.xlu0 %v4630
        %v4632 = vpop.xlane.xlu0 %4631
        %v4633 = vsel %vm1148, %v4590, 0.0
        %4634 = vadd.xlane.f32.xlu0 %v4633
        %v4635 = vpop.xlane.xlu0 %4634
        %v4636 = vsel %vm1148, %v4592, 0.0
        %4637 = vadd.xlane.f32.xlu0 %v4636
        %v4638 = vpop.xlane.xlu0 %4637
        %v4639 = vsel %vm1148, %v4594, 0.0
        %4640 = vadd.xlane.f32.xlu0 %v4639
        %v4641 = vpop.xlane.xlu0 %4640
        %v4642 = vsel %vm1148, %v4596, 0.0
        %4643 = vadd.xlane.f32.xlu0 %v4642
        %v4644 = vpop.xlane.xlu0 %4643
        %v4645 = vrcp.pop %v4599
        %v4646 = vrcp.pop %v4602
        %v4647 = vrcp.pop %v4605
        %v4648 = vrcp.pop %v4608
        %v4649 = vrcp.pop %v4611
        %v4650 = vrcp.pop %v4614
        %v4651 = vrcp.pop %v4617
        %v4652 = vrcp.pop %v4620
        %v4653 = vrcp.pop %v4623
        %v4654 = vrcp.pop %v4626
        %v4655 = vrcp.pop %v4629
        %v4656 = vrcp.pop %v4632
        %v4657 = vrcp.pop %v4635
        %v4658 = vrcp.pop %v4638
        %v4659 = vrcp.pop %v4641
        %v4660 = vrcp.pop %v4644
        %v4661 = vmul.f32 %v4566, %v4645
        %v4662 = vmul.f32 %v4568, %v4646
        %v4663 = vmul.f32 %v4570, %v4647
        %v4664 = vmul.f32 %v4572, %v4648
        %v4665 = vmul.f32 %v4574, %v4649
        %v4666 = vmul.f32 %v4576, %v4650
        %v4667 = vmul.f32 %v4578, %v4651
        %v4668 = vmul.f32 %v4580, %v4652
        %v4669 = vmul.f32 %v4582, %v4653
        %v4670 = vmul.f32 %v4584, %v4654
        %v4671 = vmul.f32 %v4586, %v4655
        %v4672 = vmul.f32 %v4588, %v4656
        %v4673 = vmul.f32 %v4590, %v4657
        %v4674 = vmul.f32 %v4592, %v4658
        %v4675 = vmul.f32 %v4594, %v4659
        %v4676 = vmul.f32 %v4596, %v4660
        %v4677 = vpack.c.bf16 %v4662, %v4661
        %v4678 = vpack.c.bf16 %v4664, %v4663
        %v4679 = vpack.c.bf16 %v4666, %v4665
        %v4680 = vpack.c.bf16 %v4668, %v4667
        %v4681 = vpack.c.bf16 %v4670, %v4669
        %v4682 = vpack.c.bf16 %v4672, %v4671
        %v4683 = vpack.c.bf16 %v4674, %v4673
        %v4684 = vpack.c.bf16 %v4676, %v4675
        %4685 = vrot.lane.b32.xlu0 %v761, 32
        %v4686 = vpop.permute.xlu0 %4685
        %v4689 = vsel %vm1148, %v4677, 0
        %4691 = vmatprep.subr.bf16.mxu0 0
        %4692 = vmatpush1.bf16.msra.mxu0 %v4686
        %4693 = vmatprep.subr.bf16.mxu0 0
        %4694 = vmatpush1.bf16.msra.mxu0 0
        %4695 = vmatprep.subr.bf16.mxu0 0
        %4696 = vmatpush1.bf16.msra.mxu0 0
        %4697 = vmatprep.subr.bf16.mxu0 0
        %4698 = vmatpush1.bf16.msra.mxu0 0
        %4699 = vmatprep.subr.bf16.mxu0 0
        %4700 = vmatpush1.bf16.msra.mxu0 0
        %4701 = vmatprep.subr.bf16.mxu0 0
        %4702 = vmatpush1.bf16.msra.mxu0 0
        %4703 = vmatprep.subr.bf16.mxu0 0
        %4704 = vmatpush1.bf16.msra.mxu0 0
        %4705 = vmatprep.subr.bf16.mxu0 0
        %4706 = vmatpush1.bf16.msra.mxu0 0
        %4707 = vmatprep.subr.bf16.mxu0 0
        %4708 = vmatpush1.bf16.msra.mxu0 0
        %4709 = vmatprep.subr.bf16.mxu0 0
        %4710 = vmatpush1.bf16.msra.mxu0 0
        %4711 = vmatprep.subr.bf16.mxu0 0
        %4712 = vmatpush1.bf16.msra.mxu0 0
        %4713 = vmatprep.subr.bf16.mxu0 0
        %4714 = vmatpush1.bf16.msra.mxu0 0
        %4715 = vmatprep.subr.bf16.mxu0 0
        %4716 = vmatpush1.bf16.msra.mxu0 0
        %4717 = vmatprep.subr.bf16.mxu0 0
        %4718 = vmatpush1.bf16.msra.mxu0 0
        %4719 = vmatprep.subr.bf16.mxu0 0
        %4720 = vmatpush1.bf16.msra.mxu0 0
        %4721 = vmatprep.subr.bf16.mxu0 0
        %4722 = vmatpush1.bf16.msra.mxu0 0
        %4723 = vmatprep.mubr.bf16.mxu0 0
        %4724 = vmatmul.mubr.bf16.gmra.mrb[0].mxu0 %v4689
        %v4725 = vpop.f32.mrb[0].mxu0
        %v4726 = vadd.f32 0.0, %v4725
        %v4727 = vpop.f32.mrb[0].mxu0
        %v4728 = vpop.f32.mrb[0].mxu0
        %v4729 = vadd.f32 0.0, %v4728
        %v4730 = vpop.f32.mrb[0].mxu0
        %4731 = vdwg.mxu0
        %4732 = vrot.lane.b32.xlu0 %v762, 32
        %v4733 = vpop.permute.xlu0 %4732
        %v4736 = vsel %vm1148, %v4678, 0
        %4738 = vmatprep.subr.bf16.mxu0 0
        %4739 = vmatpush1.bf16.msra.mxu0 %v4733
        %4740 = vmatprep.subr.bf16.mxu0 0
        %4741 = vmatpush1.bf16.msra.mxu0 0
        %4742 = vmatprep.subr.bf16.mxu0 0
        %4743 = vmatpush1.bf16.msra.mxu0 0
        %4744 = vmatprep.subr.bf16.mxu0 0
        %4745 = vmatpush1.bf16.msra.mxu0 0
        %4746 = vmatprep.subr.bf16.mxu0 0
        %4747 = vmatpush1.bf16.msra.mxu0 0
        %4748 = vmatprep.subr.bf16.mxu0 0
        %4749 = vmatpush1.bf16.msra.mxu0 0
        %4750 = vmatprep.subr.bf16.mxu0 0
        %4751 = vmatpush1.bf16.msra.mxu0 0
        %4752 = vmatprep.subr.bf16.mxu0 0
        %4753 = vmatpush1.bf16.msra.mxu0 0
        %4754 = vmatprep.subr.bf16.mxu0 0
        %4755 = vmatpush1.bf16.msra.mxu0 0
        %4756 = vmatprep.subr.bf16.mxu0 0
        %4757 = vmatpush1.bf16.msra.mxu0 0
        %4758 = vmatprep.subr.bf16.mxu0 0
        %4759 = vmatpush1.bf16.msra.mxu0 0
        %4760 = vmatprep.subr.bf16.mxu0 0
        %4761 = vmatpush1.bf16.msra.mxu0 0
        %4762 = vmatprep.subr.bf16.mxu0 0
        %4763 = vmatpush1.bf16.msra.mxu0 0
        %4764 = vmatprep.subr.bf16.mxu0 0
        %4765 = vmatpush1.bf16.msra.mxu0 0
        %4766 = vmatprep.subr.bf16.mxu0 0
        %4767 = vmatpush1.bf16.msra.mxu0 0
        %4768 = vmatprep.subr.bf16.mxu0 0
        %4769 = vmatpush1.bf16.msra.mxu0 0
        %4770 = vmatprep.mubr.bf16.mxu0 0
        %4771 = vmatmul.mubr.bf16.gmra.mrb[0].mxu0 %v4736
        %v4772 = vpop.f32.mrb[0].mxu0
        %v4773 = vadd.f32 0.0, %v4772
        %v4774 = vpop.f32.mrb[0].mxu0
        %v4775 = vpop.f32.mrb[0].mxu0
        %v4776 = vadd.f32 0.0, %v4775
        %v4777 = vpop.f32.mrb[0].mxu0
        %4778 = vdwg.mxu0
        %4779 = vrot.lane.b32.xlu0 %v763, 32
        %v4780 = vpop.permute.xlu0 %4779
        %v4783 = vsel %vm1148, %v4679, 0
        %4785 = vmatprep.subr.bf16.mxu0 0
        %4786 = vmatpush1.bf16.msra.mxu0 %v4780
        %4787 = vmatprep.subr.bf16.mxu0 0
        %4788 = vmatpush1.bf16.msra.mxu0 0
        %4789 = vmatprep.subr.bf16.mxu0 0
        %4790 = vmatpush1.bf16.msra.mxu0 0
        %4791 = vmatprep.subr.bf16.mxu0 0
        %4792 = vmatpush1.bf16.msra.mxu0 0
        %4793 = vmatprep.subr.bf16.mxu0 0
        %4794 = vmatpush1.bf16.msra.mxu0 0
        %4795 = vmatprep.subr.bf16.mxu0 0
        %4796 = vmatpush1.bf16.msra.mxu0 0
        %4797 = vmatprep.subr.bf16.mxu0 0
        %4798 = vmatpush1.bf16.msra.mxu0 0
        %4799 = vmatprep.subr.bf16.mxu0 0
        %4800 = vmatpush1.bf16.msra.mxu0 0
        %4801 = vmatprep.subr.bf16.mxu0 0
        %4802 = vmatpush1.bf16.msra.mxu0 0
        %4803 = vmatprep.subr.bf16.mxu0 0
        %4804 = vmatpush1.bf16.msra.mxu0 0
        %4805 = vmatprep.subr.bf16.mxu0 0
        %4806 = vmatpush1.bf16.msra.mxu0 0
        %4807 = vmatprep.subr.bf16.mxu0 0
        %4808 = vmatpush1.bf16.msra.mxu0 0
        %4809 = vmatprep.subr.bf16.mxu0 0
        %4810 = vmatpush1.bf16.msra.mxu0 0
        %4811 = vmatprep.subr.bf16.mxu0 0
        %4812 = vmatpush1.bf16.msra.mxu0 0
        %4813 = vmatprep.subr.bf16.mxu0 0
        %4814 = vmatpush1.bf16.msra.mxu0 0
        %4815 = vmatprep.subr.bf16.mxu0 0
        %4816 = vmatpush1.bf16.msra.mxu0 0
        %4817 = vmatprep.mubr.bf16.mxu0 0
        %4818 = vmatmul.mubr.bf16.gmra.mrb[0].mxu0 %v4783
        %v4819 = vpop.f32.mrb[0].mxu0
        %v4820 = vadd.f32 0.0, %v4819
        %v4821 = vpop.f32.mrb[0].mxu0
        %v4822 = vpop.f32.mrb[0].mxu0
        %v4823 = vadd.f32 0.0, %v4822
        %v4824 = vpop.f32.mrb[0].mxu0
        %4825 = vdwg.mxu0
        %4826 = vrot.lane.b32.xlu0 %v764, 32
        %v4827 = vpop.permute.xlu0 %4826
        %v4830 = vsel %vm1148, %v4680, 0
        %4832 = vmatprep.subr.bf16.mxu0 0
        %4833 = vmatpush1.bf16.msra.mxu0 %v4827
        %4834 = vmatprep.subr.bf16.mxu0 0
        %4835 = vmatpush1.bf16.msra.mxu0 0
        %4836 = vmatprep.subr.bf16.mxu0 0
        %4837 = vmatpush1.bf16.msra.mxu0 0
        %4838 = vmatprep.subr.bf16.mxu0 0
        %4839 = vmatpush1.bf16.msra.mxu0 0
        %4840 = vmatprep.subr.bf16.mxu0 0
        %4841 = vmatpush1.bf16.msra.mxu0 0
        %4842 = vmatprep.subr.bf16.mxu0 0
        %4843 = vmatpush1.bf16.msra.mxu0 0
        %4844 = vmatprep.subr.bf16.mxu0 0
        %4845 = vmatpush1.bf16.msra.mxu0 0
        %4846 = vmatprep.subr.bf16.mxu0 0
        %4847 = vmatpush1.bf16.msra.mxu0 0
        %4848 = vmatprep.subr.bf16.mxu0 0
        %4849 = vmatpush1.bf16.msra.mxu0 0
        %4850 = vmatprep.subr.bf16.mxu0 0
        %4851 = vmatpush1.bf16.msra.mxu0 0
        %4852 = vmatprep.subr.bf16.mxu0 0
        %4853 = vmatpush1.bf16.msra.mxu0 0
        %4854 = vmatprep.subr.bf16.mxu0 0
        %4855 = vmatpush1.bf16.msra.mxu0 0
        %4856 = vmatprep.subr.bf16.mxu0 0
        %4857 = vmatpush1.bf16.msra.mxu0 0
        %4858 = vmatprep.subr.bf16.mxu0 0
        %4859 = vmatpush1.bf16.msra.mxu0 0
        %4860 = vmatprep.subr.bf16.mxu0 0
        %4861 = vmatpush1.bf16.msra.mxu0 0
        %4862 = vmatprep.subr.bf16.mxu0 0
        %4863 = vmatpush1.bf16.msra.mxu0 0
        %4864 = vmatprep.mubr.bf16.mxu0 0
        %4865 = vmatmul.mubr.bf16.gmra.mrb[0].mxu0 %v4830
        %v4866 = vpop.f32.mrb[0].mxu0
        %v4867 = vadd.f32 0.0, %v4866
        %v4868 = vpop.f32.mrb[0].mxu0
        %v4869 = vpop.f32.mrb[0].mxu0
        %v4870 = vadd.f32 0.0, %v4869
        %v4871 = vpop.f32.mrb[0].mxu0
        %4872 = vdwg.mxu0
        %4873 = vrot.lane.b32.xlu0 %v765, 32
        %v4874 = vpop.permute.xlu0 %4873
        %v4877 = vsel %vm1148, %v4681, 0
        %4879 = vmatprep.subr.bf16.mxu0 0
        %4880 = vmatpush1.bf16.msra.mxu0 %v4874
        %4881 = vmatprep.subr.bf16.mxu0 0
        %4882 = vmatpush1.bf16.msra.mxu0 0
        %4883 = vmatprep.subr.bf16.mxu0 0
        %4884 = vmatpush1.bf16.msra.mxu0 0
        %4885 = vmatprep.subr.bf16.mxu0 0
        %4886 = vmatpush1.bf16.msra.mxu0 0
        %4887 = vmatprep.subr.bf16.mxu0 0
        %4888 = vmatpush1.bf16.msra.mxu0 0
        %4889 = vmatprep.subr.bf16.mxu0 0
        %4890 = vmatpush1.bf16.msra.mxu0 0
        %4891 = vmatprep.subr.bf16.mxu0 0
        %4892 = vmatpush1.bf16.msra.mxu0 0
        %4893 = vmatprep.subr.bf16.mxu0 0
        %4894 = vmatpush1.bf16.msra.mxu0 0
        %4895 = vmatprep.subr.bf16.mxu0 0
        %4896 = vmatpush1.bf16.msra.mxu0 0
        %4897 = vmatprep.subr.bf16.mxu0 0
        %4898 = vmatpush1.bf16.msra.mxu0 0
        %4899 = vmatprep.subr.bf16.mxu0 0
        %4900 = vmatpush1.bf16.msra.mxu0 0
        %4901 = vmatprep.subr.bf16.mxu0 0
        %4902 = vmatpush1.bf16.msra.mxu0 0
        %4903 = vmatprep.subr.bf16.mxu0 0
        %4904 = vmatpush1.bf16.msra.mxu0 0
        %4905 = vmatprep.subr.bf16.mxu0 0
        %4906 = vmatpush1.bf16.msra.mxu0 0
        %4907 = vmatprep.subr.bf16.mxu0 0
        %4908 = vmatpush1.bf16.msra.mxu0 0
        %4909 = vmatprep.subr.bf16.mxu0 0
        %4910 = vmatpush1.bf16.msra.mxu0 0
        %4911 = vmatprep.mubr.bf16.mxu0 0
        %4912 = vmatmul.mubr.bf16.gmra.mrb[0].mxu0 %v4877
        %v4913 = vpop.f32.mrb[0].mxu0
        %v4914 = vadd.f32 0.0, %v4913
        %v4915 = vpop.f32.mrb[0].mxu0
        %v4916 = vpop.f32.mrb[0].mxu0
        %v4917 = vadd.f32 0.0, %v4916
        %v4918 = vpop.f32.mrb[0].mxu0
        %4919 = vdwg.mxu0
        %4920 = vrot.lane.b32.xlu0 %v766, 32
        %v4921 = vpop.permute.xlu0 %4920
        %v4924 = vsel %vm1148, %v4682, 0
        %4926 = vmatprep.subr.bf16.mxu0 0
        %4927 = vmatpush1.bf16.msra.mxu0 %v4921
        %4928 = vmatprep.subr.bf16.mxu0 0
        %4929 = vmatpush1.bf16.msra.mxu0 0
        %4930 = vmatprep.subr.bf16.mxu0 0
        %4931 = vmatpush1.bf16.msra.mxu0 0
        %4932 = vmatprep.subr.bf16.mxu0 0
        %4933 = vmatpush1.bf16.msra.mxu0 0
        %4934 = vmatprep.subr.bf16.mxu0 0
        %4935 = vmatpush1.bf16.msra.mxu0 0
        %4936 = vmatprep.subr.bf16.mxu0 0
        %4937 = vmatpush1.bf16.msra.mxu0 0
        %4938 = vmatprep.subr.bf16.mxu0 0
        %4939 = vmatpush1.bf16.msra.mxu0 0
        %4940 = vmatprep.subr.bf16.mxu0 0
        %4941 = vmatpush1.bf16.msra.mxu0 0
        %4942 = vmatprep.subr.bf16.mxu0 0
        %4943 = vmatpush1.bf16.msra.mxu0 0
        %4944 = vmatprep.subr.bf16.mxu0 0
        %4945 = vmatpush1.bf16.msra.mxu0 0
        %4946 = vmatprep.subr.bf16.mxu0 0
        %4947 = vmatpush1.bf16.msra.mxu0 0
        %4948 = vmatprep.subr.bf16.mxu0 0
        %4949 = vmatpush1.bf16.msra.mxu0 0
        %4950 = vmatprep.subr.bf16.mxu0 0
        %4951 = vmatpush1.bf16.msra.mxu0 0
        %4952 = vmatprep.subr.bf16.mxu0 0
        %4953 = vmatpush1.bf16.msra.mxu0 0
        %4954 = vmatprep.subr.bf16.mxu0 0
        %4955 = vmatpush1.bf16.msra.mxu0 0
        %4956 = vmatprep.subr.bf16.mxu0 0
        %4957 = vmatpush1.bf16.msra.mxu0 0
        %4958 = vmatprep.mubr.bf16.mxu0 0
        %4959 = vmatmul.mubr.bf16.gmra.mrb[0].mxu0 %v4924
        %v4960 = vpop.f32.mrb[0].mxu0
        %v4961 = vadd.f32 0.0, %v4960
        %v4962 = vpop.f32.mrb[0].mxu0
        %v4963 = vpop.f32.mrb[0].mxu0
        %v4964 = vadd.f32 0.0, %v4963
        %v4965 = vpop.f32.mrb[0].mxu0
        %4966 = vdwg.mxu0
        %4967 = vrot.lane.b32.xlu0 %v767, 32
        %v4968 = vpop.permute.xlu0 %4967
        %v4971 = vsel %vm1148, %v4683, 0
        %4973 = vmatprep.subr.bf16.mxu0 0
        %4974 = vmatpush1.bf16.msra.mxu0 %v4968
        %4975 = vmatprep.subr.bf16.mxu0 0
        %4976 = vmatpush1.bf16.msra.mxu0 0
        %4977 = vmatprep.subr.bf16.mxu0 0
        %4978 = vmatpush1.bf16.msra.mxu0 0
        %4979 = vmatprep.subr.bf16.mxu0 0
        %4980 = vmatpush1.bf16.msra.mxu0 0
        %4981 = vmatprep.subr.bf16.mxu0 0
        %4982 = vmatpush1.bf16.msra.mxu0 0
        %4983 = vmatprep.subr.bf16.mxu0 0
        %4984 = vmatpush1.bf16.msra.mxu0 0
        %4985 = vmatprep.subr.bf16.mxu0 0
        %4986 = vmatpush1.bf16.msra.mxu0 0
        %4987 = vmatprep.subr.bf16.mxu0 0
        %4988 = vmatpush1.bf16.msra.mxu0 0
        %4989 = vmatprep.subr.bf16.mxu0 0
        %4990 = vmatpush1.bf16.msra.mxu0 0
        %4991 = vmatprep.subr.bf16.mxu0 0
        %4992 = vmatpush1.bf16.msra.mxu0 0
        %4993 = vmatprep.subr.bf16.mxu0 0
        %4994 = vmatpush1.bf16.msra.mxu0 0
        %4995 = vmatprep.subr.bf16.mxu0 0
        %4996 = vmatpush1.bf16.msra.mxu0 0
        %4997 = vmatprep.subr.bf16.mxu0 0
        %4998 = vmatpush1.bf16.msra.mxu0 0
        %4999 = vmatprep.subr.bf16.mxu0 0
        %5000 = vmatpush1.bf16.msra.mxu0 0
        %5001 = vmatprep.subr.bf16.mxu0 0
        %5002 = vmatpush1.bf16.msra.mxu0 0
        %5003 = vmatprep.subr.bf16.mxu0 0
        %5004 = vmatpush1.bf16.msra.mxu0 0
        %5005 = vmatprep.mubr.bf16.mxu0 0
        %5006 = vmatmul.mubr.bf16.gmra.mrb[0].mxu0 %v4971
        %v5007 = vpop.f32.mrb[0].mxu0
        %v5008 = vadd.f32 0.0, %v5007
        %v5009 = vpop.f32.mrb[0].mxu0
        %v5010 = vpop.f32.mrb[0].mxu0
        %v5011 = vadd.f32 0.0, %v5010
        %v5012 = vpop.f32.mrb[0].mxu0
        %5013 = vdwg.mxu0
        %5014 = vrot.lane.b32.xlu0 %v768, 32
        %v5015 = vpop.permute.xlu0 %5014
        %v5018 = vsel %vm1148, %v4684, 0
        %5020 = vmatprep.subr.bf16.mxu0 0
        %5021 = vmatpush1.bf16.msra.mxu0 %v5015
        %5022 = vmatprep.subr.bf16.mxu0 0
        %5023 = vmatpush1.bf16.msra.mxu0 0
        %5024 = vmatprep.subr.bf16.mxu0 0
        %5025 = vmatpush1.bf16.msra.mxu0 0
        %5026 = vmatprep.subr.bf16.mxu0 0
        %5027 = vmatpush1.bf16.msra.mxu0 0
        %5028 = vmatprep.subr.bf16.mxu0 0
        %5029 = vmatpush1.bf16.msra.mxu0 0
        %5030 = vmatprep.subr.bf16.mxu0 0
        %5031 = vmatpush1.bf16.msra.mxu0 0
        %5032 = vmatprep.subr.bf16.mxu0 0
        %5033 = vmatpush1.bf16.msra.mxu0 0
        %5034 = vmatprep.subr.bf16.mxu0 0
        %5035 = vmatpush1.bf16.msra.mxu0 0
        %5036 = vmatprep.subr.bf16.mxu0 0
        %5037 = vmatpush1.bf16.msra.mxu0 0
        %5038 = vmatprep.subr.bf16.mxu0 0
        %5039 = vmatpush1.bf16.msra.mxu0 0
        %5040 = vmatprep.subr.bf16.mxu0 0
        %5041 = vmatpush1.bf16.msra.mxu0 0
        %5042 = vmatprep.subr.bf16.mxu0 0
        %5043 = vmatpush1.bf16.msra.mxu0 0
        %5044 = vmatprep.subr.bf16.mxu0 0
        %5045 = vmatpush1.bf16.msra.mxu0 0
        %5046 = vmatprep.subr.bf16.mxu0 0
        %5047 = vmatpush1.bf16.msra.mxu0 0
        %5048 = vmatprep.subr.bf16.mxu0 0
        %5049 = vmatpush1.bf16.msra.mxu0 0
        %5050 = vmatprep.subr.bf16.mxu0 0
        %5051 = vmatpush1.bf16.msra.mxu0 0
        %5052 = vmatprep.mubr.bf16.mxu0 0
        %5053 = vmatmul.mubr.bf16.gmra.mrb[0].mxu0 %v5018
        %v5054 = vpop.f32.mrb[0].mxu0
        %v5055 = vadd.f32 0.0, %v5054
        %v5056 = vpop.f32.mrb[0].mxu0
        %v5057 = vpop.f32.mrb[0].mxu0
        %v5058 = vadd.f32 0.0, %v5057
        %v5059 = vpop.f32.mrb[0].mxu0
        %5060 = vdwg.mxu0
        %v5061 = vpack.c.bf16 %v4729, %v4726
        %v5062 = vpack.c.bf16 %v4776, %v4773
        %v5063 = vpack.c.bf16 %v4823, %v4820
        %v5064 = vpack.c.bf16 %v4870, %v4867
        %v5065 = vpack.c.bf16 %v4917, %v4914
        %v5066 = vpack.c.bf16 %v4964, %v4961
        %v5067 = vpack.c.bf16 %v5011, %v5008
        %v5068 = vpack.c.bf16 %v5058, %v5055
        %v5073 = vunpack.c.l.b16 %v741
        %v5074 = vunpack.c.l.b16 %v742
        %v5075 = vunpack.c.l.b16 %v743
        %v5076 = vunpack.c.l.b16 %v744
        %v5077 = vpack.c.b16 %v5074, %v5073
        %v5078 = vpack.c.b16 %v5076, %v5075
        %v5082 = vsel %vm771, %v5061, 0
        %v5085 = vsel %vm771, %v5062, 0
        %v5088 = vsel %vm771, %v5063, 0
        %v5091 = vsel %vm771, %v5064, 0
        %v5094 = vsel %vm771, %v5065, 0
        %v5097 = vsel %vm771, %v5066, 0
        %v5100 = vsel %vm771, %v5067, 0
        %v5103 = vsel %vm771, %v5068, 0
        %5105 = vmatprep.subr.bf16.mxu0 0
        %5106 = vmatpush1.bf16.msra.mxu0 %v5077
        %5107 = vmatprep.subr.bf16.mxu0 0
        %5108 = vmatpush1.bf16.msra.mxu0 %v5078
        %5109 = vmatprep.subr.bf16.mxu0 0
        %5110 = vmatpush1.bf16.msra.mxu0 0
        %5111 = vmatprep.subr.bf16.mxu0 0
        %5112 = vmatpush1.bf16.msra.mxu0 0
        %5113 = vmatprep.subr.bf16.mxu0 0
        %5114 = vmatpush1.bf16.msra.mxu0 0
        %5115 = vmatprep.subr.bf16.mxu0 0
        %5116 = vmatpush1.bf16.msra.mxu0 0
        %5117 = vmatprep.subr.bf16.mxu0 0
        %5118 = vmatpush1.bf16.msra.mxu0 0
        %5119 = vmatprep.subr.bf16.mxu0 0
        %5120 = vmatpush1.bf16.msra.mxu0 0
        %5121 = vmatprep.subr.bf16.mxu0 0
        %5122 = vmatpush1.bf16.msra.mxu0 0
        %5123 = vmatprep.subr.bf16.mxu0 0
        %5124 = vmatpush1.bf16.msra.mxu0 0
        %5125 = vmatprep.subr.bf16.mxu0 0
        %5126 = vmatpush1.bf16.msra.mxu0 0
        %5127 = vmatprep.subr.bf16.mxu0 0
        %5128 = vmatpush1.bf16.msra.mxu0 0
        %5129 = vmatprep.subr.bf16.mxu0 0
        %5130 = vmatpush1.bf16.msra.mxu0 0
        %5131 = vmatprep.subr.bf16.mxu0 0
        %5132 = vmatpush1.bf16.msra.mxu0 0
        %5133 = vmatprep.subr.bf16.mxu0 0
        %5134 = vmatpush1.bf16.msra.mxu0 0
        %5135 = vmatprep.subr.bf16.mxu0 0
        %5136 = vmatpush1.bf16.msra.mxu0 0
        %5137 = vmatprep.mubr.bf16.mxu0 0
        %5138 = vmatmul.mubr.bf16.gmra.mrb[0].mxu0 %v5082
        %v5139 = vpop.f32.mrb[0].mxu0
        %v5140 = vadd.f32 0.0, %v5139
        %v5141 = vpop.f32.mrb[0].mxu0
        %v5142 = vpop.f32.mrb[0].mxu0
        %v5143 = vadd.f32 0.0, %v5142
        %v5144 = vpop.f32.mrb[0].mxu0
        %5145 = vmatprep.mubr.bf16.mxu0 0
        %5146 = vmatmul.mubr.bf16.gmra.mrb[0].mxu0 %v5085
        %v5147 = vpop.f32.mrb[0].mxu0
        %v5148 = vadd.f32 0.0, %v5147
        %v5149 = vpop.f32.mrb[0].mxu0
        %v5150 = vpop.f32.mrb[0].mxu0
        %v5151 = vadd.f32 0.0, %v5150
        %v5152 = vpop.f32.mrb[0].mxu0
        %5153 = vmatprep.mubr.bf16.mxu0 0
        %5154 = vmatmul.mubr.bf16.gmra.mrb[0].mxu0 %v5088
        %v5155 = vpop.f32.mrb[0].mxu0
        %v5156 = vadd.f32 0.0, %v5155
        %v5157 = vpop.f32.mrb[0].mxu0
        %v5158 = vpop.f32.mrb[0].mxu0
        %v5159 = vadd.f32 0.0, %v5158
        %v5160 = vpop.f32.mrb[0].mxu0
        %5161 = vmatprep.mubr.bf16.mxu0 0
        %5162 = vmatmul.mubr.bf16.gmra.mrb[0].mxu0 %v5091
        %v5163 = vpop.f32.mrb[0].mxu0
        %v5164 = vadd.f32 0.0, %v5163
        %v5165 = vpop.f32.mrb[0].mxu0
        %v5166 = vpop.f32.mrb[0].mxu0
        %v5167 = vadd.f32 0.0, %v5166
        %v5168 = vpop.f32.mrb[0].mxu0
        %5169 = vmatprep.mubr.bf16.mxu0 0
        %5170 = vmatmul.mubr.bf16.gmra.mrb[0].mxu0 %v5094
        %v5171 = vpop.f32.mrb[0].mxu0
        %v5172 = vadd.f32 0.0, %v5171
        %v5173 = vpop.f32.mrb[0].mxu0
        %v5174 = vpop.f32.mrb[0].mxu0
        %v5175 = vadd.f32 0.0, %v5174
        %v5176 = vpop.f32.mrb[0].mxu0
        %5177 = vmatprep.mubr.bf16.mxu0 0
        %5178 = vmatmul.mubr.bf16.gmra.mrb[0].mxu0 %v5097
        %v5179 = vpop.f32.mrb[0].mxu0
        %v5180 = vadd.f32 0.0, %v5179
        %v5181 = vpop.f32.mrb[0].mxu0
        %v5182 = vpop.f32.mrb[0].mxu0
        %v5183 = vadd.f32 0.0, %v5182
        %v5184 = vpop.f32.mrb[0].mxu0
        %5185 = vmatprep.mubr.bf16.mxu0 0
        %5186 = vmatmul.mubr.bf16.gmra.mrb[0].mxu0 %v5100
        %v5187 = vpop.f32.mrb[0].mxu0
        %v5188 = vadd.f32 0.0, %v5187
        %v5189 = vpop.f32.mrb[0].mxu0
        %v5190 = vpop.f32.mrb[0].mxu0
        %v5191 = vadd.f32 0.0, %v5190
        %v5192 = vpop.f32.mrb[0].mxu0
        %5193 = vmatprep.mubr.bf16.mxu0 0
        %5194 = vmatmul.mubr.bf16.gmra.mrb[0].mxu0 %v5103
        %v5195 = vpop.f32.mrb[0].mxu0
        %v5196 = vadd.f32 0.0, %v5195
        %v5197 = vpop.f32.mrb[0].mxu0
        %v5198 = vpop.f32.mrb[0].mxu0
        %v5199 = vadd.f32 0.0, %v5198
        %v5200 = vpop.f32.mrb[0].mxu0
        %5201 = vdwg.mxu0
        %v5202 = vadd.f32 %v4074, %v5140
        %v5203 = vadd.f32 %v4075, %v5143
        %v5204 = vadd.f32 %v4076, %v5148
        %v5205 = vadd.f32 %v4077, %v5151
        %v5206 = vadd.f32 %v4078, %v5156
        %v5207 = vadd.f32 %v4079, %v5159
        %v5208 = vadd.f32 %v4080, %v5164
        %v5209 = vadd.f32 %v4081, %v5167
        %v5210 = vadd.f32 %v4082, %v5172
        %v5211 = vadd.f32 %v4083, %v5175
        %v5212 = vadd.f32 %v4084, %v5180
        %v5213 = vadd.f32 %v4085, %v5183
        %v5214 = vadd.f32 %v4086, %v5188
        %v5215 = vadd.f32 %v4087, %v5191
        %v5216 = vadd.f32 %v4088, %v5196
        %v5217 = vadd.f32 %v4089, %v5199
        %v5218 = vld [vmem:[%s5] sm:$0x1]
        %v5220 = vlaneseq
        %v5221 = vshrl.u32 %v5220, 7
        %v5222 = vsub.s32 0, %v5221
        %v5223 = vrot.slane %v5218, %v5222
        %v5225 = vadd.f32 %v5202, %v5223
        %v5226 = vadd.f32 %v5203, %v5223
        %v5227 = vadd.f32 %v5204, %v5223
        %v5228 = vadd.f32 %v5205, %v5223
        %v5229 = vadd.f32 %v5206, %v5223
        %v5230 = vadd.f32 %v5207, %v5223
        %v5231 = vadd.f32 %v5208, %v5223
        %v5232 = vadd.f32 %v5209, %v5223
        %v5233 = vadd.f32 %v5210, %v5223
        %v5234 = vadd.f32 %v5211, %v5223
        %v5235 = vadd.f32 %v5212, %v5223
        %v5236 = vadd.f32 %v5213, %v5223
        %v5237 = vadd.f32 %v5214, %v5223
        %v5238 = vadd.f32 %v5215, %v5223
        %v5239 = vadd.f32 %v5216, %v5223
        %v5240 = vadd.f32 %v5217, %v5223
        %5241 = vst [vmem:[%s314] sm:$0xff] %v5225
        %5242 = vst [vmem:[%s314 + $0x8] sm:$0xff] %v5226
        %5243 = vst [vmem:[%s314 + $0x10] sm:$0xff] %v5227
        %5244 = vst [vmem:[%s314 + $0x18] sm:$0xff] %v5228
        %5245 = vst [vmem:[%s314 + $0x20] sm:$0xff] %v5229
        %5246 = vst [vmem:[%s314 + $0x28] sm:$0xff] %v5230
        %5247 = vst [vmem:[%s314 + $0x30] sm:$0xff] %v5231
        %5248 = vst [vmem:[%s314 + $0x38] sm:$0xff] %v5232
        %5249 = vst [vmem:[%s314 + $0x40] sm:$0xff] %v5233
        %5250 = vst [vmem:[%s314 + $0x48] sm:$0xff] %v5234
        %5251 = vst [vmem:[%s314 + $0x50] sm:$0xff] %v5235
        %5252 = vst [vmem:[%s314 + $0x58] sm:$0xff] %v5236
        %5253 = vst [vmem:[%s314 + $0x60] sm:$0xff] %v5237
        %5254 = vst [vmem:[%s314 + $0x68] sm:$0xff] %v5238
        %5255 = vst [vmem:[%s314 + $0x70] sm:$0xff] %v5239
        %5256 = vst [vmem:[%s314 + $0x78] sm:$0xff] %v5240
        %s5257 = sand.u32 %s164, 1
        %s5258 = scalar_lea.sflag [#allocation4], %s5257
        %s5259 = sand.u32 %s164, 1
        %s5260 = smul.addr %s5259, 128
        %s5261 = scalar_lea.vmem [#allocation10], %s5260
        // Predicated region
        $region61: #{tpu_custom_call.1} parent=43 // pred_check
          %p5262 = pneg %p174
        $region62: #{tpu_custom_call.1} parent=43 // pred_check_branch
          %5264 = sbr.rel (%p5262) target = $region64
        $region63: #{tpu_custom_call.1} parent=43 // pred_region
          %s5265 = smul.u32 8, %s25
          %s5267 = ssub.s32 2048, 2048
          %5268 = vsyncadd %s5258, %s5267
          %s5269 = smul.addr %s5265, 2
          %s5270 = smul.addr %s5269, 128
          %s5271 = scalar_lea.hbm %s6, %s5270
          %s5272 = sshll.u32 %s5261, 4
          %s5273 = int_to_ptr.vmem [resolvable:$true] %s5272
          %5278 = dma.vmem_to_hbm [thread:$0]  %s5273, 2048, %s5271, %s5258, 128, 128, 8
        $region64: #{tpu_custom_call.1} parent=43 // pred_fallthru
          _
      $region44: #{tpu_custom_call.1} parent=5 // pred_fallthru
        _
      %p5279 = scmp.le.s32.totalorder 2, %s20
      // Predicated region
      $region65: #{tpu_custom_call.1} parent=5 // pred_check
        %p5280 = pneg %p5279
      $region66: #{tpu_custom_call.1} parent=5 // pred_check_branch
        %5282 = sbr.rel (%p5280) target = $region68
      $region67: #{tpu_custom_call.1} parent=5 // pred_region
        %s5283 = ssub.s32 %s20, 2
        // Predicated region
        $region69: #{tpu_custom_call.1} parent=67 // pred_check
          %p5284 = pneg %p180
        $region70: #{tpu_custom_call.1} parent=67 // pred_check_branch
          %5286 = sbr.rel (%p5284) target = $region72
        $region71: #{tpu_custom_call.1} parent=67 // pred_region
          %s5287 = sand.u32 %s165, 1
          %s5288 = scalar_lea.sflag [#allocation4], %s5287
          %s5289 = sand.u32 %s165, 1
          %s5290 = smul.addr %s5289, 128
          %s5291 = scalar_lea.vmem [#allocation10], %s5290
          %5292 = dma.done %s5288, 2048
        $region72: #{tpu_custom_call.1} parent=67 // pred_fallthru
          _
      $region68: #{tpu_custom_call.1} parent=5 // pred_fallthru
        _
    $region6: #{tpu_custom_call.1} parent=1 // loop_footer
      %s24 = sadd.s32 1, %s20
    $region7: #{tpu_custom_call.1} parent=1 // loop_footer_branch
      %19 = sbr.rel target = $region3
    $region8: #{tpu_custom_call.1} parent=1 // loop_exit
      _
    %5293 = vsyncpa [#allocation3], 1
    %s5294 = scalar_lea.sflag [#allocation3], 1
    %5295 = vsyncpa %s5294, 1
    %5296 = vsyncpa [#allocation6], 1
    %5297 = vsyncpa [#allocation9], 1
    %5298 = vsyncpa [#allocation4], 1
    %s5299 = scalar_lea.sflag [#allocation4], 1
    %5300 = vsyncpa %s5299, 1

</llo_original>
